<compile_context>
chip_gen: v6e
topology: v6e:2x2x1
jax: 0.10.0
libtpu: 0.0.40
codegen_flags: <defaults>
</compile_context>

<pallas_src>
import functools

import numpy as np
import jax
import jax.numpy as jnp
from jax.experimental import pallas as pl
from jax.experimental.pallas import tpu as pltpu

WIN_SIZE = 11
WIN_SIGMA = 1.5
K1 = 0.01
K2 = 0.03
DATA_RANGE = 1.0

# Rough live-VMEM multiplier in units of one (TB, H, W) f32 plane-block:
# 2 inputs x 2 pipeline buffers + r01/x01 + per-map filter temps + 5 kept filtered maps
# + SSIM elementwise temps.
_LIVE_PLANES_FACTOR = 22


def _gauss_window():
    # Same as pytorch_msssim._fspecial_gauss_1d(11, 1.5), baked in as constants.
    coords = np.arange(WIN_SIZE, dtype=np.float64) - WIN_SIZE // 2
    g = np.exp(-(coords ** 2) / (2.0 * WIN_SIGMA ** 2))
    g = g / g.sum()
    return np.asarray(g, dtype=np.float32)


_WIN = _gauss_window()


def _conv_matrix(n):
    """(N, N-10) matrix M so that (rows @ M) is the valid 11-tap Gaussian conv along a
    length-N axis.  TODO(synk): banded/blocked form for very large N to avoid zero-MAC
    waste on the MXU."""
    no = n - WIN_SIZE + 1
    m = np.zeros((n, no), dtype=np.float32)
    for q in range(no):
        m[q:q + WIN_SIZE, q] = _WIN
    return m


def _vmem_limits():
    """Generation-aware VMEM sizing (v5e/v6e: 128 MiB, v7x: 64 MiB physical)."""
    try:
        cap = int(pltpu.get_tpu_info().vmem_capacity_bytes)
    except Exception:
        cap = 64 << 20                        # conservative fallback (v7x-sized)
    limit = max(32 << 20, cap - (20 << 20))   # leave headroom for Mosaic internals
    budget = (limit * 4) // 5                 # working-set budget used to pick TB
    return limit, budget


def _pick_blocks(nc, h, w, budget_bytes):
    """cdiv-based picker: largest TB under the VMEM budget, >= 2 evenly sized grid steps
    when possible (v7x megacore); tail handled by padding in the wrapper."""
    plane_bytes = h * w * 4
    tb_cap = budget_bytes // (plane_bytes * _LIVE_PLANES_FACTOR)
    if tb_cap < 1:
        # TODO(synk): H-band tiling with a (WIN_SIZE-1)-row halo for planes whose working
        # set exceeds VMEM; fail loudly instead of failing to compile.
        raise NotImplementedError(
            f"single ({h}, {w}) plane working set exceeds the VMEM budget; "
            "H-band tiling not implemented")
    min_blocks = 2 if nc >= 2 else 1
    nb = max(min_blocks, int(pl.cdiv(nc, int(tb_cap))))
    tb = int(pl.cdiv(nc, nb))
    return tb, nb


def _combined_loss_block_kernel(recon_ref, x_ref, gw_ref, ght_ref, out_ref, *, conv_dtype):
    """One grid step: a (TB, H, W) block of planes -> one (1, 8, 128) partial-sum block.

    Row 0 lane 0: sum((recon-x)^2), row 1: sum(|recon-x|), row 2: sum(ssim_map)."""
    r = recon_ref[...].astype(jnp.float32)            # (TB, H, W)
    x = x_ref[...].astype(jnp.float32)
    tb, h, w = r.shape

    gw = gw_ref[...]                                   # (W, WO), conv_dtype
    ght = ght_ref[...]                                 # (H, HO), conv_dtype
    wo = gw.shape[1]
    ho = ght.shape[1]

    # ---- fused MSE + L1 partial sums (single pass over diff, kept in f32 on all gens)
    diff = r - x
    sum_sq = jnp.sum(diff * diff)
    sum_abs = jnp.sum(jnp.abs(diff))

    # ---- SSIM on [0,1]-remapped tensors
    r01 = (r + 1.0) * 0.5
    x01 = (x + 1.0) * 0.5

    def gfilter(m):
        """Valid separable 11-tap Gaussian of one map as two flat 2D MXU matmuls.
        (TB, H, W) -> (TB, WO, HO): W-conv, last-two-dims transpose (XLU), H-conv."""
        t = jnp.dot(m.astype(conv_dtype).reshape(tb * h, w), gw,
                    preferred_element_type=jnp.float32)            # (TB*H, WO)
        t = jnp.swapaxes(t.reshape(tb, h, wo), 1, 2)               # (TB, WO, H)
        f = jnp.dot(t.astype(conv_dtype).reshape(tb * wo, h), ght,
                    preferred_element_type=jnp.float32)            # (TB*WO, HO)
        return f.reshape(tb, wo, ho)

    mu1 = gfilter(r01)
    mu2 = gfilter(x01)
    e_rr = gfilter(r01 * r01)
    e_xx = gfilter(x01 * x01)
    e_rx = gfilter(r01 * x01)

    mu1_sq = mu1 * mu1
    mu2_sq = mu2 * mu2
    mu1_mu2 = mu1 * mu2
    sigma1_sq = e_rr - mu1_sq
    sigma2_sq = e_xx - mu2_sq
    sigma12 = e_rx - mu1_mu2

    c1 = (K1 * DATA_RANGE) ** 2
    c2 = (K2 * DATA_RANGE) ** 2
    cs_map = (2.0 * sigma12 + c2) / (sigma1_sq + sigma2_sq + c2)
    ssim_map = ((2.0 * mu1_mu2 + c1) / (mu1_sq + mu2_sq + c1)) * cs_map
    sum_ssim = jnp.sum(ssim_map)

    # Lane-dense (8, 128) partial-sum block: full, unmasked store; one distinct output
    # block per grid step (no carried state -> grid axis stays 'parallel').
    row = jax.lax.broadcasted_iota(jnp.int32, (8, 128), 0)
    block = jnp.where(row == 0, sum_sq,
            jnp.where(row == 1, sum_abs,
            jnp.where(row == 2, sum_ssim, 0.0)))
    out_ref[0] = block


def combined_loss(recon, x, alpha=0.5, beta=0.3, gamma=0.2, block_planes=None,
                  conv_dtype=jnp.float32):
    """recon, x: (N, C, H, W) with H, W >= 11.  Returns the scalar f32 loss
    alpha*MSE + beta*L1 + gamma*(1 - SSIM((recon+1)/2, (x+1)/2))."""
    assert recon.shape == x.shape and recon.ndim == 4
    n, c, h, w = x.shape
    assert h >= WIN_SIZE and w >= WIN_SIZE, "SSIM valid conv needs H, W >= 11"

    nc = n * c
    ho = h - WIN_SIZE + 1
    wo = w - WIN_SIZE + 1

    vmem_limit, vmem_budget = _vmem_limits()
    if block_planes is not None:
        tb = int(block_planes)
        nb = int(pl.cdiv(nc, tb))
    else:
        tb, nb = _pick_blocks(nc, h, w, vmem_budget)
    nc_pad = tb * nb

    r3 = recon.reshape(nc, h, w)
    x3 = x.reshape(nc, h, w)
    if nc_pad > nc:
        # Padded planes (recon == x == -1) add exactly 0 to the MSE/L1 sums and exactly
        # 1.0 per pixel to the SSIM-map sum (subtracted exactly in the epilogue).
        pad = jnp.full((nc_pad - nc, h, w), -1.0, dtype=r3.dtype)
        r3 = jnp.concatenate([r3, pad], axis=0)
        x3 = jnp.concatenate([x3, jnp.full((nc_pad - nc, h, w), -1.0, dtype=x3.dtype)],
                             axis=0)

    gw = jnp.asarray(_conv_matrix(w), dtype=conv_dtype)    # (W, WO)
    ght = jnp.asarray(_conv_matrix(h), dtype=conv_dtype)   # (H, HO)

    kernel = functools.partial(_combined_loss_block_kernel, conv_dtype=conv_dtype)

    partials = pl.pallas_call(
        kernel,
        out_shape=jax.ShapeDtypeStruct((nb, 8, 128), jnp.float32),
        grid=(nb,),
        in_specs=[
            pl.BlockSpec((tb, h, w), lambda i: (i, 0, 0)),
            pl.BlockSpec((tb, h, w), lambda i: (i, 0, 0)),
            pl.BlockSpec((w, wo), lambda i: (0, 0)),       # small constant conv matrices
            pl.BlockSpec((h, ho), lambda i: (0, 0)),
        ],
        out_specs=pl.BlockSpec((1, 8, 128), lambda i: (i, 0, 0)),
        compiler_params=pltpu.CompilerParams(
            dimension_semantics=("parallel",),
            vmem_limit_bytes=int(vmem_limit),
        ),
    )(r3, x3, gw, ght)

    # Tiny epilogue: combine per-block partial sums into the scalar loss.
    sum_sq = jnp.sum(partials[:, 0, 0])
    sum_abs = jnp.sum(partials[:, 1, 0])
    sum_ssim = jnp.sum(partials[:, 2, 0]) - float(nc_pad - nc) * float(ho * wo)

    ne = float(nc * h * w)          # elements for the MSE / L1 means
    ns = float(nc * ho * wo)        # elements of the valid SSIM map
    mse = sum_sq / ne
    l1 = sum_abs / ne
    ssim_val = sum_ssim / ns
    return alpha * mse + beta * l1 + gamma * (1.0 - ssim_val)


# ---------------- pure-JAX reference (independent of the Toeplitz formulation) ----------


def _ref_gaussian_filter_valid(a):
    """Separable 11-tap Gaussian blur, VALID padding, via unrolled slices. a: (NC,H,W)."""
    h, w = a.shape[1], a.shape[2]
    ho, wo = h - WIN_SIZE + 1, w - WIN_SIZE + 1
    acc_h = float(_WIN[0]) * a[:, 0:ho, :]
    for k in range(1, WIN_SIZE):
        acc_h = acc_h + float(_WIN[k]) * a[:, k:k + ho, :]
    acc = float(_WIN[0]) * acc_h[:, :, 0:wo]
    for k in range(1, WIN_SIZE):
        acc = acc + float(_WIN[k]) * acc_h[:, :, k:k + wo]
    return acc


def _reference_loss(recon, x, alpha, beta, gamma):
    n, c, h, w = x.shape
    r = recon.astype(jnp.float32)
    xx = x.astype(jnp.float32)
    diff = r - xx
    mse = jnp.mean(diff * diff)
    l1 = jnp.mean(jnp.abs(diff))

    r01 = (r + 1.0) * 0.5
    x01 = (xx + 1.0) * 0.5
    r3 = r01.reshape(n * c, h, w)
    x3 = x01.reshape(n * c, h, w)

    mu1 = _ref_gaussian_filter_valid(r3)
    mu2 = _ref_gaussian_filter_valid(x3)
    s1 = _ref_gaussian_filter_valid(r3 * r3) - mu1 * mu1
    s2 = _ref_gaussian_filter_valid(x3 * x3) - mu2 * mu2
    s12 = _ref_gaussian_filter_valid(r3 * x3) - mu1 * mu2

    c1 = (K1 * DATA_RANGE) ** 2
    c2 = (K2 * DATA_RANGE) ** 2
    cs = (2.0 * s12 + c2) / (s1 + s2 + c2)
    ssim_map = ((2.0 * mu1 * mu2 + c1) / (mu1 * mu1 + mu2 * mu2 + c1)) * cs
    s = jnp.mean(ssim_map)
    return alpha * mse + beta * l1 + gamma * (1.0 - s)


if __name__ == "__main__":
    key = jax.random.PRNGKey(0)
    k1, k2 = jax.random.split(key)
    # Small NCHW shapes consistent with the module's forward.
    N, C, H, W = 2, 4, 16, 16
    x = jnp.tanh(jax.random.normal(k1, (N, C, H, W), dtype=jnp.float32))       # image in [-1, 1]
    recon = jnp.tanh(x + 0.1 * jax.random.normal(k2, (N, C, H, W), dtype=jnp.float32))

    ref = jax.block_until_ready(_reference_loss(recon, x, 0.5, 0.3, 0.2))

    # 1) Default f32 conv path: module-exact numerics, tight tolerance.
    loss = jax.block_until_ready(combined_loss(recon, x, alpha=0.5, beta=0.3, gamma=0.2))
    if not abs(float(loss) - float(ref)) <= 1e-4 + 1e-3 * abs(float(ref)):
        raise AssertionError(
            f"Pallas/JAX mismatch (f32 conv): pallas={float(loss):.6f} ref={float(ref):.6f}")

    # 2) bf16 conv-matmul path (per perf review, ~3x MXU on the SSIM filter), validated
    #    at a bf16-appropriate tolerance.
    loss_bf16 = jax.block_until_ready(
        combined_loss(recon, x, alpha=0.5, beta=0.3, gamma=0.2, conv_dtype=jnp.bfloat16))
    if not abs(float(loss_bf16) - float(ref)) <= 5e-3:
        raise AssertionError(
            f"Pallas/JAX mismatch (bf16 conv): pallas={float(loss_bf16):.6f} ref={float(ref):.6f}")

    print("KERNEL_OK")
</pallas_src>

<mosaic_0001>
module attributes {stable_mosaic.version = 11 : i64} {
  func.func @_combined_loss_block_kernel(%arg0: i32, %arg1: memref<4x16x16xf32, #tpu.memory_space<vmem>>, %arg2: memref<4x16x16xf32, #tpu.memory_space<vmem>>, %arg3: memref<16x6xf32, #tpu.memory_space<vmem>>, %arg4: memref<16x6xf32, #tpu.memory_space<vmem>>, %arg5: memref<1x8x128xf32, #tpu.memory_space<vmem>>) attributes {dimension_semantics = [#tpu.dimension_semantics<parallel>], iteration_bounds = array<i64: 2>, scalar_prefetch = 0 : i64, scratch_operands = 0 : i64, tpu.core_type = #tpu.core_type<tc>, window_params = [{transform_indices = @transform_0, window_bounds = array<i64: 4, 16, 16>}, {transform_indices = @transform_1, window_bounds = array<i64: 4, 16, 16>}, {pipeline_mode = #tpu.pipeline_mode<synchronous>, transform_indices = @transform_2, window_bounds = array<i64: 16, 6>}, {pipeline_mode = #tpu.pipeline_mode<synchronous>, transform_indices = @transform_3, window_bounds = array<i64: 16, 6>}, {transform_indices = @transform_4, window_bounds = array<i64: 1, 8, 128>}]} {
    %c0 = arith.constant 0 : index
    %c0_0 = arith.constant 0 : index
    %c0_1 = arith.constant 0 : index
    %0 = vector.load %arg1[%c0, %c0_0, %c0_1] : memref<4x16x16xf32, #tpu.memory_space<vmem>>, vector<4x16x16xf32>
    %c0_2 = arith.constant 0 : index
    %c0_3 = arith.constant 0 : index
    %c0_4 = arith.constant 0 : index
    %1 = vector.load %arg2[%c0_2, %c0_3, %c0_4] : memref<4x16x16xf32, #tpu.memory_space<vmem>>, vector<4x16x16xf32>
    %c0_5 = arith.constant 0 : index
    %c0_6 = arith.constant 0 : index
    %2 = vector.load %arg3[%c0_5, %c0_6] : memref<16x6xf32, #tpu.memory_space<vmem>>, vector<16x6xf32>
    %c0_7 = arith.constant 0 : index
    %c0_8 = arith.constant 0 : index
    %3 = vector.load %arg4[%c0_7, %c0_8] : memref<16x6xf32, #tpu.memory_space<vmem>>, vector<16x6xf32>
    %4 = arith.subf %0, %1 : vector<4x16x16xf32>
    %5 = arith.mulf %4, %4 : vector<4x16x16xf32>
    %6 = vector.shape_cast %5 : vector<4x16x16xf32> to vector<1x4x16x16xf32>
    %cst = arith.constant dense<0.000000e+00> : vector<1xf32>
    %7 = vector.multi_reduction <add>, %6, %cst [1, 2, 3] : vector<1x4x16x16xf32> to vector<1xf32>
    %8 = vector.shape_cast %7 : vector<1xf32> to vector<1x1x1x1xf32>
    %9 = vector.extract %8[0, 0, 0, 0] : f32 from vector<1x1x1x1xf32>
    %10 = math.absf %4 : vector<4x16x16xf32>
    %11 = vector.shape_cast %10 : vector<4x16x16xf32> to vector<1x4x16x16xf32>
    %cst_9 = arith.constant dense<0.000000e+00> : vector<1xf32>
    %12 = vector.multi_reduction <add>, %11, %cst_9 [1, 2, 3] : vector<1x4x16x16xf32> to vector<1xf32>
    %13 = vector.shape_cast %12 : vector<1xf32> to vector<1x1x1x1xf32>
    %14 = vector.extract %13[0, 0, 0, 0] : f32 from vector<1x1x1x1xf32>
    %cst_10 = arith.constant 1.000000e+00 : f32
    %15 = vector.broadcast %cst_10 : f32 to vector<4x16x16xf32>
    %16 = arith.addf %0, %15 : vector<4x16x16xf32>
    %cst_11 = arith.constant 5.000000e-01 : f32
    %17 = vector.broadcast %cst_11 : f32 to vector<4x16x16xf32>
    %18 = arith.mulf %16, %17 : vector<4x16x16xf32>
    %cst_12 = arith.constant 1.000000e+00 : f32
    %19 = vector.broadcast %cst_12 : f32 to vector<4x16x16xf32>
    %20 = arith.addf %1, %19 : vector<4x16x16xf32>
    %cst_13 = arith.constant 5.000000e-01 : f32
    %21 = vector.broadcast %cst_13 : f32 to vector<4x16x16xf32>
    %22 = arith.mulf %20, %21 : vector<4x16x16xf32>
    %23 = vector.shape_cast %18 : vector<4x16x16xf32> to vector<64x16xf32>
    %cst_14 = arith.constant dense<0.000000e+00> : vector<64x6xf32>
    %24 = tpu.matmul %23, %2, %cst_14 {dimension_numbers = #tpu.dot_dimension_numbers<[1], [0], [0], [1], [0, 0, 1, 1], [], []>} : vector<64x16xf32>, vector<16x6xf32>, vector<64x6xf32> -> vector<64x6xf32>
    %25 = vector.shape_cast %24 : vector<64x6xf32> to vector<4x16x6xf32>
    %26 = tpu.transpose %25, [0, 2, 1] : vector<4x16x6xf32> -> vector<4x6x16xf32>
    %27 = vector.shape_cast %26 : vector<4x6x16xf32> to vector<24x16xf32>
    %cst_15 = arith.constant dense<0.000000e+00> : vector<24x6xf32>
    %28 = tpu.matmul %27, %3, %cst_15 {dimension_numbers = #tpu.dot_dimension_numbers<[1], [0], [0], [1], [0, 0, 1, 1], [], []>} : vector<24x16xf32>, vector<16x6xf32>, vector<24x6xf32> -> vector<24x6xf32>
    %29 = vector.shape_cast %28 : vector<24x6xf32> to vector<4x6x6xf32>
    %30 = vector.shape_cast %22 : vector<4x16x16xf32> to vector<64x16xf32>
    %cst_16 = arith.constant dense<0.000000e+00> : vector<64x6xf32>
    %31 = tpu.matmul %30, %2, %cst_16 {dimension_numbers = #tpu.dot_dimension_numbers<[1], [0], [0], [1], [0, 0, 1, 1], [], []>} : vector<64x16xf32>, vector<16x6xf32>, vector<64x6xf32> -> vector<64x6xf32>
    %32 = vector.shape_cast %31 : vector<64x6xf32> to vector<4x16x6xf32>
    %33 = tpu.transpose %32, [0, 2, 1] : vector<4x16x6xf32> -> vector<4x6x16xf32>
    %34 = vector.shape_cast %33 : vector<4x6x16xf32> to vector<24x16xf32>
    %cst_17 = arith.constant dense<0.000000e+00> : vector<24x6xf32>
    %35 = tpu.matmul %34, %3, %cst_17 {dimension_numbers = #tpu.dot_dimension_numbers<[1], [0], [0], [1], [0, 0, 1, 1], [], []>} : vector<24x16xf32>, vector<16x6xf32>, vector<24x6xf32> -> vector<24x6xf32>
    %36 = vector.shape_cast %35 : vector<24x6xf32> to vector<4x6x6xf32>
    %37 = arith.mulf %18, %18 : vector<4x16x16xf32>
    %38 = vector.shape_cast %37 : vector<4x16x16xf32> to vector<64x16xf32>
    %cst_18 = arith.constant dense<0.000000e+00> : vector<64x6xf32>
    %39 = tpu.matmul %38, %2, %cst_18 {dimension_numbers = #tpu.dot_dimension_numbers<[1], [0], [0], [1], [0, 0, 1, 1], [], []>} : vector<64x16xf32>, vector<16x6xf32>, vector<64x6xf32> -> vector<64x6xf32>
    %40 = vector.shape_cast %39 : vector<64x6xf32> to vector<4x16x6xf32>
    %41 = tpu.transpose %40, [0, 2, 1] : vector<4x16x6xf32> -> vector<4x6x16xf32>
    %42 = vector.shape_cast %41 : vector<4x6x16xf32> to vector<24x16xf32>
    %cst_19 = arith.constant dense<0.000000e+00> : vector<24x6xf32>
    %43 = tpu.matmul %42, %3, %cst_19 {dimension_numbers = #tpu.dot_dimension_numbers<[1], [0], [0], [1], [0, 0, 1, 1], [], []>} : vector<24x16xf32>, vector<16x6xf32>, vector<24x6xf32> -> vector<24x6xf32>
    %44 = vector.shape_cast %43 : vector<24x6xf32> to vector<4x6x6xf32>
    %45 = arith.mulf %22, %22 : vector<4x16x16xf32>
    %46 = vector.shape_cast %45 : vector<4x16x16xf32> to vector<64x16xf32>
    %cst_20 = arith.constant dense<0.000000e+00> : vector<64x6xf32>
    %47 = tpu.matmul %46, %2, %cst_20 {dimension_numbers = #tpu.dot_dimension_numbers<[1], [0], [0], [1], [0, 0, 1, 1], [], []>} : vector<64x16xf32>, vector<16x6xf32>, vector<64x6xf32> -> vector<64x6xf32>
    %48 = vector.shape_cast %47 : vector<64x6xf32> to vector<4x16x6xf32>
    %49 = tpu.transpose %48, [0, 2, 1] : vector<4x16x6xf32> -> vector<4x6x16xf32>
    %50 = vector.shape_cast %49 : vector<4x6x16xf32> to vector<24x16xf32>
    %cst_21 = arith.constant dense<0.000000e+00> : vector<24x6xf32>
    %51 = tpu.matmul %50, %3, %cst_21 {dimension_numbers = #tpu.dot_dimension_numbers<[1], [0], [0], [1], [0, 0, 1, 1], [], []>} : vector<24x16xf32>, vector<16x6xf32>, vector<24x6xf32> -> vector<24x6xf32>
    %52 = vector.shape_cast %51 : vector<24x6xf32> to vector<4x6x6xf32>
    %53 = arith.mulf %18, %22 : vector<4x16x16xf32>
    %54 = vector.shape_cast %53 : vector<4x16x16xf32> to vector<64x16xf32>
    %cst_22 = arith.constant dense<0.000000e+00> : vector<64x6xf32>
    %55 = tpu.matmul %54, %2, %cst_22 {dimension_numbers = #tpu.dot_dimension_numbers<[1], [0], [0], [1], [0, 0, 1, 1], [], []>} : vector<64x16xf32>, vector<16x6xf32>, vector<64x6xf32> -> vector<64x6xf32>
    %56 = vector.shape_cast %55 : vector<64x6xf32> to vector<4x16x6xf32>
    %57 = tpu.transpose %56, [0, 2, 1] : vector<4x16x6xf32> -> vector<4x6x16xf32>
    %58 = vector.shape_cast %57 : vector<4x6x16xf32> to vector<24x16xf32>
    %cst_23 = arith.constant dense<0.000000e+00> : vector<24x6xf32>
    %59 = tpu.matmul %58, %3, %cst_23 {dimension_numbers = #tpu.dot_dimension_numbers<[1], [0], [0], [1], [0, 0, 1, 1], [], []>} : vector<24x16xf32>, vector<16x6xf32>, vector<24x6xf32> -> vector<24x6xf32>
    %60 = vector.shape_cast %59 : vector<24x6xf32> to vector<4x6x6xf32>
    %61 = arith.mulf %29, %29 : vector<4x6x6xf32>
    %62 = arith.mulf %36, %36 : vector<4x6x6xf32>
    %63 = arith.mulf %29, %36 : vector<4x6x6xf32>
    %64 = arith.subf %44, %61 : vector<4x6x6xf32>
    %65 = arith.subf %52, %62 : vector<4x6x6xf32>
    %66 = arith.subf %60, %63 : vector<4x6x6xf32>
    %cst_24 = arith.constant 2.000000e+00 : f32
    %67 = vector.broadcast %cst_24 : f32 to vector<4x6x6xf32>
    %68 = arith.mulf %67, %66 : vector<4x6x6xf32>
    %cst_25 = arith.constant 8.99999984E-4 : f32
    %69 = vector.broadcast %cst_25 : f32 to vector<4x6x6xf32>
    %70 = arith.addf %68, %69 : vector<4x6x6xf32>
    %71 = arith.addf %64, %65 : vector<4x6x6xf32>
    %cst_26 = arith.constant 8.99999984E-4 : f32
    %72 = vector.broadcast %cst_26 : f32 to vector<4x6x6xf32>
    %73 = arith.addf %71, %72 : vector<4x6x6xf32>
    %74 = arith.divf %70, %73 : vector<4x6x6xf32>
    %cst_27 = arith.constant 2.000000e+00 : f32
    %75 = vector.broadcast %cst_27 : f32 to vector<4x6x6xf32>
    %76 = arith.mulf %75, %63 : vector<4x6x6xf32>
    %cst_28 = arith.constant 9.99999974E-5 : f32
    %77 = vector.broadcast %cst_28 : f32 to vector<4x6x6xf32>
    %78 = arith.addf %76, %77 : vector<4x6x6xf32>
    %79 = arith.addf %61, %62 : vector<4x6x6xf32>
    %cst_29 = arith.constant 9.99999974E-5 : f32
    %80 = vector.broadcast %cst_29 : f32 to vector<4x6x6xf32>
    %81 = arith.addf %79, %80 : vector<4x6x6xf32>
    %82 = arith.divf %78, %81 : vector<4x6x6xf32>
    %83 = arith.mulf %82, %74 : vector<4x6x6xf32>
    %84 = vector.shape_cast %83 : vector<4x6x6xf32> to vector<1x4x6x6xf32>
    %cst_30 = arith.constant dense<0.000000e+00> : vector<1xf32>
    %85 = vector.multi_reduction <add>, %84, %cst_30 [1, 2, 3] : vector<1x4x6x6xf32> to vector<1xf32>
    %86 = vector.shape_cast %85 : vector<1xf32> to vector<1x1x1x1xf32>
    %87 = vector.extract %86[0, 0, 0, 0] : f32 from vector<1x1x1x1xf32>
    %88 = tpu.iota {dimensions = array<i32: 0>} : vector<8x128xi32>
    %c0_i32 = arith.constant 0 : i32
    %89 = vector.broadcast %c0_i32 : i32 to vector<8x128xi32>
    %90 = arith.cmpi eq, %88, %89 : vector<8x128xi32>
    %c1_i32 = arith.constant 1 : i32
    %91 = vector.broadcast %c1_i32 : i32 to vector<8x128xi32>
    %92 = arith.cmpi eq, %88, %91 : vector<8x128xi32>
    %c2_i32 = arith.constant 2 : i32
    %93 = vector.broadcast %c2_i32 : i32 to vector<8x128xi32>
    %94 = arith.cmpi eq, %88, %93 : vector<8x128xi32>
    %cst_31 = arith.constant 0.000000e+00 : f32
    %95 = vector.broadcast %87 : f32 to vector<8x128xf32>
    %96 = vector.broadcast %cst_31 : f32 to vector<8x128xf32>
    %97 = arith.select %94, %95, %96 : vector<8x128xi1>, vector<8x128xf32>
    %98 = vector.broadcast %14 : f32 to vector<8x128xf32>
    %99 = arith.select %92, %98, %97 : vector<8x128xi1>, vector<8x128xf32>
    %100 = vector.broadcast %9 : f32 to vector<8x128xf32>
    %101 = arith.select %90, %100, %99 : vector<8x128xi1>, vector<8x128xf32>
    %c0_32 = arith.constant 0 : index
    %c0_33 = arith.constant 0 : index
    %c0_34 = arith.constant 0 : index
    %102 = vector.load %arg5[%c0_32, %c0_33, %c0_34] : memref<1x8x128xf32, #tpu.memory_space<vmem>>, vector<1x8x128xf32>
    %103 = vector.shape_cast %102 : vector<1x8x128xf32> to vector<8x128xf32>
    %104 = vector.shape_cast %101 : vector<8x128xf32> to vector<1x8x128xf32>
    tpu.vector_store %arg5[%c0_32, %c0_33, %c0_34], %104 {strides = array<i32>} : memref<1x8x128xf32, #tpu.memory_space<vmem>>, vector<1x8x128xf32>,
    return
  }
  func.func @transform_0(%arg0: i32) -> (i32, i32, i32) {
    %c0_i32 = arith.constant 0 : i32
    %c0_i32_0 = arith.constant 0 : i32
    %c0_i32_1 = arith.constant 0 : i32
    return %arg0, %c0_i32, %c0_i32_0 : i32, i32, i32
  }
  func.func @transform_1(%arg0: i32) -> (i32, i32, i32) {
    %c0_i32 = arith.constant 0 : i32
    %c0_i32_0 = arith.constant 0 : i32
    %c0_i32_1 = arith.constant 0 : i32
    return %arg0, %c0_i32, %c0_i32_0 : i32, i32, i32
  }
  func.func @transform_2(%arg0: i32) -> (i32, i32) {
    %c0_i32 = arith.constant 0 : i32
    %c0_i32_0 = arith.constant 0 : i32
    %c0_i32_1 = arith.constant 0 : i32
    return %c0_i32, %c0_i32_0 : i32, i32
  }
  func.func @transform_3(%arg0: i32) -> (i32, i32) {
    %c0_i32 = arith.constant 0 : i32
    %c0_i32_0 = arith.constant 0 : i32
    %c0_i32_1 = arith.constant 0 : i32
    return %c0_i32, %c0_i32_0 : i32, i32
  }
  func.func @transform_4(%arg0: i32) -> (i32, i32, i32) {
    %c0_i32 = arith.constant 0 : i32
    %c0_i32_0 = arith.constant 0 : i32
    %c0_i32_1 = arith.constant 0 : i32
    return %arg0, %c0_i32, %c0_i32_0 : i32, i32, i32
  }
}

</mosaic_0001>

<llo_original>
// kernel: tpu_custom_call.1
$region0: #{tpu_custom_call.1}
  #allocation0 [shape = 'u32[]', space=smem, size = 0x4, offset = 0x4, fixed_abs, tag = 'smem constant byte address 0x4 - core index']
  #allocation1 [shape = 'u32[144,128]{1,0:T(1,128)}', space=vmem, size = 0x12000, scoped, tag = 'internal scratch']
  %s0 = inlined_call_operand.hbm [shape: f32[8,16,16], index: 0, kind: input, shape index: {}]
  %s1 = inlined_call_operand.hbm [shape: f32[8,16,16], index: 1, kind: input, shape index: {}]
  %s2 = inlined_call_operand.vmem [shape: f32[16,6], index: 2, kind: input, shape index: {}]
  %s3 = inlined_call_operand.vmem [shape: f32[16,6], index: 3, kind: input, shape index: {}]
  %s4 = inlined_call_operand.hbm [shape: f32[2,8,128], index: 4, kind: output, shape index: {}]
  %s5 = sld [smem:[#allocation0]]
  $region57: #{tpu_custom_call.1} parent=0
    _
  %s7 = ssub.s32 1, %s5
  %s8 = scalar_select 0, %s7, %s5
  $region1: #{tpu_custom_call.1} parent=0
    #allocation2 [shape = 'u8[65536]{0}', space=vmem, size = 0x10000, scoped, tag = 'input window, operand 0']
    #allocation3 [shape = 's32[2]{0}', space=sflag, size = 0x8, scoped, tag = 'scoped memory for tpu_custom_call.1']
    #allocation4 [shape = 's32[2]{0}', space=sflag, size = 0x8, scoped, tag = 'scoped memory for tpu_custom_call.1']
    #allocation5 [shape = 'u8[65536]{0}', space=vmem, size = 0x10000, scoped, tag = 'input window, operand 1']
    #allocation6 [shape = 's32[2]{0}', space=sflag, size = 0x8, scoped, tag = 'scoped memory for tpu_custom_call.1']
    #allocation7 [shape = 'u8[8192]{0}', space=vmem, size = 0x2000, scoped, tag = 'output window, operand 0']
    %9 = vsyncpa [#allocation3], 0
    %s10 = scalar_lea.sflag [#allocation3], 1
    %11 = vsyncpa %s10, 0
    %12 = vsyncpa [#allocation6], 0
    %s13 = scalar_lea.sflag [#allocation6], 1
    %14 = vsyncpa %s13, 0
    %15 = vsyncpa [#allocation4], 0
    %s16 = scalar_lea.sflag [#allocation4], 1
    %17 = vsyncpa %s16, 0
    loop: start=0, step=1, limit=4
    $region2: #{tpu_custom_call.1} parent=1 // loop_pre_header
      _
    $region3: #{tpu_custom_call.1} parent=1 // loop_header
      %s19 = sphi 0, %s23
      %p20 = scmp.ge.s32.totalorder %s19, 4
      %s29 = sphi 0, %s31
      %s32 = sphi 0, %s29
      %s33 = sphi 0, %s32
      %s49 = sphi 0, %s33
      %s55 = sphi 0, %s57
      %s58 = sphi 0, %s55
      %s59 = sphi 0, %s58
      %s75 = sphi 0, %s59
      %s79 = sphi 0, %s79
      %s81 = sphi 0, %s79
      %s82 = sphi 0, %s81
      %s96 = sphi 0, %s82
      %s100 = sphi 0, %s100
      %s102 = sphi 0, %s100
      %s103 = sphi 0, %s102
      %s117 = sphi 0, %s103
      %s123 = sphi 0, %s125
      %s126 = sphi 0, %s123
      %s127 = sphi 0, %s126
      %s143 = sphi 0, %s127
    $region4: #{tpu_custom_call.1} parent=1 // loop_header_branch
      %22 = sbr.rel (%p20) target = $region8
    $region5: #{tpu_custom_call.1} parent=1 // loop_body
      %s24 = ssub.s32 %s19, 1
      %s25 = ssub.s32 %s19, 2
      %s26 = sadd.s32 %s19, 1
      %s27 = ssub.s32 %s19, %s26
      %p28 = scmp.eq.s32.totalorder %s27, 0
      %s30 = sadd.s32 %s29, 1
      %s31 = scalar_select %p28, %s29, %s30
      %p34 = pneg %p28
      %p35 = scmp.eq.s32.totalorder %s19, 1
      %p36 = por %p34, %p35
      %p37 = scmp.ne.s32.totalorder %s29, %s32
      %p38 = scmp.eq.s32.totalorder %s19, 0
      %p39 = por %p37, %p38
      %p40 = scmp.ne.s32.totalorder %s29, %s32
      %p41 = scmp.eq.s32.totalorder %s24, 1
      %p42 = por %p40, %p41
      %p43 = scmp.ne.s32.totalorder %s32, %s33
      %p44 = scmp.eq.s32.totalorder %s24, 0
      %p45 = por %p43, %p44
      %p46 = scmp.ne.s32.totalorder %s32, %s33
      %p47 = scmp.eq.s32.totalorder %s25, 1
      %p48 = por %p46, %p47
      %p50 = scmp.ne.s32.totalorder %s33, %s49
      %p51 = scmp.eq.s32.totalorder %s25, 0
      %p52 = por %p50, %p51
      %s53 = ssub.s32 %s19, %s26
      %p54 = scmp.eq.s32.totalorder %s53, 0
      %s56 = sadd.s32 %s55, 1
      %s57 = scalar_select %p54, %s55, %s56
      %p60 = pneg %p54
      %p61 = scmp.eq.s32.totalorder %s19, 1
      %p62 = por %p60, %p61
      %p63 = scmp.ne.s32.totalorder %s55, %s58
      %p64 = scmp.eq.s32.totalorder %s19, 0
      %p65 = por %p63, %p64
      %p66 = scmp.ne.s32.totalorder %s55, %s58
      %p67 = scmp.eq.s32.totalorder %s24, 1
      %p68 = por %p66, %p67
      %p69 = scmp.ne.s32.totalorder %s58, %s59
      %p70 = scmp.eq.s32.totalorder %s24, 0
      %p71 = por %p69, %p70
      %p72 = scmp.ne.s32.totalorder %s58, %s59
      %p73 = scmp.eq.s32.totalorder %s25, 1
      %p74 = por %p72, %p73
      %p76 = scmp.ne.s32.totalorder %s59, %s75
      %p77 = scmp.eq.s32.totalorder %s25, 0
      %p78 = por %p76, %p77
      %s80 = sadd.s32 %s79, 1
      %p83 = scmp.eq.s32.totalorder %s19, 1
      %p84 = scmp.ne.s32.totalorder %s79, %s81
      %p85 = scmp.eq.s32.totalorder %s19, 0
      %p86 = por %p84, %p85
      %p87 = scmp.ne.s32.totalorder %s79, %s81
      %p88 = scmp.eq.s32.totalorder %s24, 1
      %p89 = por %p87, %p88
      %p90 = scmp.ne.s32.totalorder %s81, %s82
      %p91 = scmp.eq.s32.totalorder %s24, 0
      %p92 = por %p90, %p91
      %p93 = scmp.ne.s32.totalorder %s81, %s82
      %p94 = scmp.eq.s32.totalorder %s25, 1
      %p95 = por %p93, %p94
      %p97 = scmp.ne.s32.totalorder %s82, %s96
      %p98 = scmp.eq.s32.totalorder %s25, 0
      %p99 = por %p97, %p98
      %s101 = sadd.s32 %s100, 1
      %p104 = scmp.eq.s32.totalorder %s19, 1
      %p105 = scmp.ne.s32.totalorder %s100, %s102
      %p106 = scmp.eq.s32.totalorder %s19, 0
      %p107 = por %p105, %p106
      %p108 = scmp.ne.s32.totalorder %s100, %s102
      %p109 = scmp.eq.s32.totalorder %s24, 1
      %p110 = por %p108, %p109
      %p111 = scmp.ne.s32.totalorder %s102, %s103
      %p112 = scmp.eq.s32.totalorder %s24, 0
      %p113 = por %p111, %p112
      %p114 = scmp.ne.s32.totalorder %s102, %s103
      %p115 = scmp.eq.s32.totalorder %s25, 1
      %p116 = por %p114, %p115
      %p118 = scmp.ne.s32.totalorder %s103, %s117
      %p119 = scmp.eq.s32.totalorder %s25, 0
      %p120 = por %p118, %p119
      %s121 = ssub.s32 %s19, %s26
      %p122 = scmp.eq.s32.totalorder %s121, 0
      %s124 = sadd.s32 %s123, 1
      %s125 = scalar_select %p122, %s123, %s124
      %p128 = pneg %p122
      %p129 = scmp.eq.s32.totalorder %s19, 1
      %p130 = por %p128, %p129
      %p131 = scmp.ne.s32.totalorder %s123, %s126
      %p132 = scmp.eq.s32.totalorder %s19, 0
      %p133 = por %p131, %p132
      %p134 = scmp.ne.s32.totalorder %s123, %s126
      %p135 = scmp.eq.s32.totalorder %s24, 1
      %p136 = por %p134, %p135
      %p137 = scmp.ne.s32.totalorder %s126, %s127
      %p138 = scmp.eq.s32.totalorder %s24, 0
      %p139 = por %p137, %p138
      %p140 = scmp.ne.s32.totalorder %s126, %s127
      %p141 = scmp.eq.s32.totalorder %s25, 1
      %p142 = por %p140, %p141
      %p144 = scmp.ne.s32.totalorder %s127, %s143
      %p145 = scmp.eq.s32.totalorder %s25, 0
      %p146 = por %p144, %p145
      %p147 = scmp.le.s32.totalorder 1, %s19
      %p148 = scmp.lt.s32.totalorder %s19, 3
      %p149 = pnand %p147, %p148
      %p150 = pneg %p149
      // Predicated region
      $region9: #{tpu_custom_call.1} parent=5 // pred_check
        _
      $region10: #{tpu_custom_call.1} parent=5 // pred_check_branch
        %152 = sbr.rel (%p149) target = $region12
      $region11: #{tpu_custom_call.1} parent=5 // pred_region
        %s153 = ssub.s32 %s19, 1
        // Predicated region
        $region13: #{tpu_custom_call.1} parent=11 // pred_check
          %p154 = pneg %p92
        $region14: #{tpu_custom_call.1} parent=11 // pred_check_branch
          %156 = sbr.rel (%p154) target = $region16
        $region15: #{tpu_custom_call.1} parent=11 // pred_region
          _
        $region16: #{tpu_custom_call.1} parent=11 // pred_fallthru
          _
        // Predicated region
        $region17: #{tpu_custom_call.1} parent=11 // pred_check
          %p157 = pneg %p113
        $region18: #{tpu_custom_call.1} parent=11 // pred_check_branch
          %159 = sbr.rel (%p157) target = $region20
        $region19: #{tpu_custom_call.1} parent=11 // pred_region
          _
        $region20: #{tpu_custom_call.1} parent=11 // pred_fallthru
          _
      $region12: #{tpu_custom_call.1} parent=5 // pred_fallthru
        _
      %p160 = scmp.lt.s32.totalorder %s19, 2
      // Predicated region
      $region21: #{tpu_custom_call.1} parent=5 // pred_check
        %p161 = pneg %p160
      $region22: #{tpu_custom_call.1} parent=5 // pred_check_branch
        %163 = sbr.rel (%p161) target = $region24
      $region23: #{tpu_custom_call.1} parent=5 // pred_region
        // Predicated region
        $region25: #{tpu_custom_call.1} parent=23 // pred_check
          %p164 = pneg %p39
        $region26: #{tpu_custom_call.1} parent=23 // pred_check_branch
          %166 = sbr.rel (%p164) target = $region28
        $region27: #{tpu_custom_call.1} parent=23 // pred_region
          %s167 = sand.u32 %s29, 1
          %s168 = scalar_lea.sflag [#allocation3], %s167
          %s169 = sand.u32 %s29, 1
          %s170 = smul.addr %s169, 64
          %s171 = scalar_lea.vmem [#allocation2], %s170
          %s172 = smul.u32 4, %s19
          %s174 = ssub.s32 1024, 1024
          %175 = vsyncadd %s168, %s174
          %s176 = smul.addr %s172, 2
          %s177 = smul.addr %s176, 128
          %s178 = scalar_lea.hbm %s0, %s177
          %s179 = sshll.u32 %s171, 4
          %s180 = int_to_ptr.vmem [resolvable:$true] %s179
          %185 = dma.hbm_to_vmem [thread:$0]  %s178, 1024, %s180, %s168, 128, 128, 8
        $region28: #{tpu_custom_call.1} parent=23 // pred_fallthru
          _
        // Predicated region
        $region29: #{tpu_custom_call.1} parent=23 // pred_check
          %p186 = pneg %p65
        $region30: #{tpu_custom_call.1} parent=23 // pred_check_branch
          %188 = sbr.rel (%p186) target = $region32
        $region31: #{tpu_custom_call.1} parent=23 // pred_region
          %s189 = sand.u32 %s55, 1
          %s190 = scalar_lea.sflag [#allocation6], %s189
          %s191 = sand.u32 %s55, 1
          %s192 = smul.addr %s191, 64
          %s193 = scalar_lea.vmem [#allocation5], %s192
          %s194 = smul.u32 4, %s19
          %s196 = ssub.s32 1024, 1024
          %197 = vsyncadd %s190, %s196
          %s198 = smul.addr %s194, 2
          %s199 = smul.addr %s198, 128
          %s200 = scalar_lea.hbm %s1, %s199
          %s201 = sshll.u32 %s193, 4
          %s202 = int_to_ptr.vmem [resolvable:$true] %s201
          %207 = dma.hbm_to_vmem [thread:$0]  %s200, 1024, %s202, %s190, 128, 128, 8
        $region32: #{tpu_custom_call.1} parent=23 // pred_fallthru
          _
      $region24: #{tpu_custom_call.1} parent=5 // pred_fallthru
        _
      %p208 = scmp.le.s32.totalorder 1, %s19
      %p209 = scmp.lt.s32.totalorder %s19, 3
      %p210 = pnand %p208, %p209
      %p211 = pneg %p210
      // Predicated region
      $region33: #{tpu_custom_call.1} parent=5 // pred_check
        _
      $region34: #{tpu_custom_call.1} parent=5 // pred_check_branch
        %213 = sbr.rel (%p210) target = $region36
      $region35: #{tpu_custom_call.1} parent=5 // pred_region
        %s214 = ssub.s32 %s19, 1
        %s215 = sand.u32 %s32, 1
        %s216 = scalar_lea.sflag [#allocation3], %s215
        %s217 = sand.u32 %s32, 1
        %s218 = smul.addr %s217, 64
        %s219 = scalar_lea.vmem [#allocation2], %s218
        // Predicated region
        $region37: #{tpu_custom_call.1} parent=35 // pred_check
          %p220 = pneg %p45
        $region38: #{tpu_custom_call.1} parent=35 // pred_check_branch
          %222 = sbr.rel (%p220) target = $region40
        $region39: #{tpu_custom_call.1} parent=35 // pred_region
          %223 = dma.done %s216, 1024
        $region40: #{tpu_custom_call.1} parent=35 // pred_fallthru
          _
        %s224 = sand.u32 %s58, 1
        %s225 = scalar_lea.sflag [#allocation6], %s224
        %s226 = sand.u32 %s58, 1
        %s227 = smul.addr %s226, 64
        %s228 = scalar_lea.vmem [#allocation5], %s227
        // Predicated region
        $region41: #{tpu_custom_call.1} parent=35 // pred_check
          %p229 = pneg %p71
        $region42: #{tpu_custom_call.1} parent=35 // pred_check_branch
          %231 = sbr.rel (%p229) target = $region44
        $region43: #{tpu_custom_call.1} parent=35 // pred_region
          %232 = dma.done %s225, 1024
        $region44: #{tpu_custom_call.1} parent=35 // pred_fallthru
          _
        %s233 = sand.u32 %s32, 1
        %s234 = scalar_lea.sflag [#allocation3], %s233
        %s235 = sand.u32 %s32, 1
        %s236 = smul.addr %s235, 64
        %s237 = scalar_lea.vmem [#allocation2], %s236
        %p238 = pneg %p45
        %p239 = pneg %p42
        %s240 = sand.u32 %s58, 1
        %s241 = scalar_lea.sflag [#allocation6], %s240
        %s242 = sand.u32 %s58, 1
        %s243 = smul.addr %s242, 64
        %s244 = scalar_lea.vmem [#allocation5], %s243
        %p245 = pneg %p71
        %p246 = pneg %p68
        %p247 = pneg %p92
        %p248 = pneg %p89
        %p249 = pneg %p113
        %p250 = pneg %p110
        %p251 = pneg %p139
        %p252 = pneg %p136
        %s253 = sand.u32 %s126, 1
        %s254 = scalar_lea.sflag [#allocation4], %s253
        %s255 = sand.u32 %s126, 1
        %s256 = smul.addr %s255, 8
        %s257 = scalar_lea.vmem [#allocation7], %s256
        %s258 = smul.u32 4, %s24
        %s259 = smul.u32 4, %s24
        %v260 = vld [vmem:[%s219] sm:$0xff]
        %v261 = vld [vmem:[%s219 + $0x8] sm:$0xff]
        %v262 = vld [vmem:[%s219 + $0x10] sm:$0xff]
        %v263 = vld [vmem:[%s219 + $0x18] sm:$0xff]
        %v264 = vld [vmem:[%s219 + $0x20] sm:$0xff]
        %v265 = vld [vmem:[%s219 + $0x28] sm:$0xff]
        %v266 = vld [vmem:[%s219 + $0x30] sm:$0xff]
        %v267 = vld [vmem:[%s219 + $0x38] sm:$0xff]
        %v268 = vld [vmem:[%s228] sm:$0xff]
        %v269 = vld [vmem:[%s228 + $0x8] sm:$0xff]
        %v270 = vld [vmem:[%s228 + $0x10] sm:$0xff]
        %v271 = vld [vmem:[%s228 + $0x18] sm:$0xff]
        %v272 = vld [vmem:[%s228 + $0x20] sm:$0xff]
        %v273 = vld [vmem:[%s228 + $0x28] sm:$0xff]
        %v274 = vld [vmem:[%s228 + $0x30] sm:$0xff]
        %v275 = vld [vmem:[%s228 + $0x38] sm:$0xff]
        %v276 = vld [vmem:[%s2] sm:$0xff]
        %v277 = vld [vmem:[%s2 + $0x8] sm:$0xff]
        %v278 = vld [vmem:[%s3] sm:$0xff]
        %v279 = vld [vmem:[%s3 + $0x8] sm:$0xff]
        %v280 = vsub.f32 %v260, %v268
        %v281 = vsub.f32 %v261, %v269
        %v282 = vsub.f32 %v262, %v270
        %v283 = vsub.f32 %v263, %v271
        %v284 = vsub.f32 %v264, %v272
        %v285 = vsub.f32 %v265, %v273
        %v286 = vsub.f32 %v266, %v274
        %v287 = vsub.f32 %v267, %v275
        %v288 = vmul.f32 %v280, %v280
        %v289 = vmul.f32 %v281, %v281
        %v290 = vmul.f32 %v282, %v282
        %v291 = vmul.f32 %v283, %v283
        %v292 = vmul.f32 %v284, %v284
        %v293 = vmul.f32 %v285, %v285
        %v294 = vmul.f32 %v286, %v286
        %v295 = vmul.f32 %v287, %v287
        %vm296 = vcmask 130048
        %v297 = vsel %vm296, %v288, 0.0
        %v298 = vsel %vm296, %v289, 0.0
        %v299 = vadd.f32 %v297, %v298
        %v300 = vsel %vm296, %v290, 0.0
        %v301 = vadd.f32 %v299, %v300
        %v302 = vsel %vm296, %v291, 0.0
        %v303 = vadd.f32 %v301, %v302
        %v304 = vsel %vm296, %v292, 0.0
        %v305 = vadd.f32 %v303, %v304
        %v306 = vsel %vm296, %v293, 0.0
        %v307 = vadd.f32 %v305, %v306
        %v308 = vsel %vm296, %v294, 0.0
        %v309 = vadd.f32 %v307, %v308
        %v310 = vsel %vm296, %v295, 0.0
        %v311 = vadd.f32 %v309, %v310
        %312 = vadd.xlane.f32.xlu0 %v311
        %v313 = vpop.xlane.xlu0 %312
        %v314 = vrot.slane %v313, 4
        %v315 = vadd.f32 %v313, %v314
        %v316 = vrot.slane %v315, 2
        %v317 = vadd.f32 %v315, %v316
        %v318 = vrot.slane %v317, 1
        %v319 = vadd.f32 %v317, %v318
        %s320 = vtos %v319
        %v321 = vand.u32 2147483647, %v280
        %v322 = vand.u32 2147483647, %v281
        %v323 = vand.u32 2147483647, %v282
        %v324 = vand.u32 2147483647, %v283
        %v325 = vand.u32 2147483647, %v284
        %v326 = vand.u32 2147483647, %v285
        %v327 = vand.u32 2147483647, %v286
        %v328 = vand.u32 2147483647, %v287
        %v329 = vsel %vm296, %v321, 0.0
        %v330 = vsel %vm296, %v322, 0.0
        %v331 = vadd.f32 %v329, %v330
        %v332 = vsel %vm296, %v323, 0.0
        %v333 = vadd.f32 %v331, %v332
        %v334 = vsel %vm296, %v324, 0.0
        %v335 = vadd.f32 %v333, %v334
        %v336 = vsel %vm296, %v325, 0.0
        %v337 = vadd.f32 %v335, %v336
        %v338 = vsel %vm296, %v326, 0.0
        %v339 = vadd.f32 %v337, %v338
        %v340 = vsel %vm296, %v327, 0.0
        %v341 = vadd.f32 %v339, %v340
        %v342 = vsel %vm296, %v328, 0.0
        %v343 = vadd.f32 %v341, %v342
        %344 = vadd.xlane.f32.xlu0 %v343
        %v345 = vpop.xlane.xlu0 %344
        %v346 = vrot.slane %v345, 4
        %v347 = vadd.f32 %v345, %v346
        %v348 = vrot.slane %v347, 2
        %v349 = vadd.f32 %v347, %v348
        %v350 = vrot.slane %v349, 1
        %v351 = vadd.f32 %v349, %v350
        %s352 = vtos %v351
        %v353 = vadd.f32 %v260, 1.0
        %v354 = vadd.f32 %v261, 1.0
        %v355 = vadd.f32 %v262, 1.0
        %v356 = vadd.f32 %v263, 1.0
        %v357 = vadd.f32 %v264, 1.0
        %v358 = vadd.f32 %v265, 1.0
        %v359 = vadd.f32 %v266, 1.0
        %v360 = vadd.f32 %v267, 1.0
        %v361 = vmul.f32 %v353, 0.5
        %v362 = vmul.f32 %v354, 0.5
        %v363 = vmul.f32 %v355, 0.5
        %v364 = vmul.f32 %v356, 0.5
        %v365 = vmul.f32 %v357, 0.5
        %v366 = vmul.f32 %v358, 0.5
        %v367 = vmul.f32 %v359, 0.5
        %v368 = vmul.f32 %v360, 0.5
        %v369 = vadd.f32 %v268, 1.0
        %v370 = vadd.f32 %v269, 1.0
        %v371 = vadd.f32 %v270, 1.0
        %v372 = vadd.f32 %v271, 1.0
        %v373 = vadd.f32 %v272, 1.0
        %v374 = vadd.f32 %v273, 1.0
        %v375 = vadd.f32 %v274, 1.0
        %v376 = vadd.f32 %v275, 1.0
        %v377 = vmul.f32 %v369, 0.5
        %v378 = vmul.f32 %v370, 0.5
        %v379 = vmul.f32 %v371, 0.5
        %v380 = vmul.f32 %v372, 0.5
        %v381 = vmul.f32 %v373, 0.5
        %v382 = vmul.f32 %v374, 0.5
        %v383 = vmul.f32 %v375, 0.5
        %v384 = vmul.f32 %v376, 0.5
        %v386 = vsel %vm296, %v361, 0
        %v389 = vsel %vm296, %v362, 0
        %v392 = vsel %vm296, %v363, 0
        %v395 = vsel %vm296, %v364, 0
        %v398 = vsel %vm296, %v365, 0
        %v401 = vsel %vm296, %v366, 0
        %v404 = vsel %vm296, %v367, 0
        %v407 = vsel %vm296, %v368, 0
        %409 = vmatprep.subr.mxu0 0.0
        %410 = vmatpush1.msra.mxu0 0.0
        %411 = vmatprep.subr.mxu0 0.0
        %412 = vmatpush1.msra.mxu0 0.0
        %413 = vmatprep.subr.mxu0 0.0
        %414 = vmatpush1.msra.mxu0 0.0
        %415 = vmatprep.subr.mxu0 0.0
        %416 = vmatpush1.msra.mxu0 0.0
        %417 = vmatprep.subr.mxu0 0.0
        %418 = vmatpush1.msra.mxu0 0.0
        %419 = vmatprep.subr.mxu0 0.0
        %420 = vmatpush1.msra.mxu0 0.0
        %421 = vmatprep.subr.mxu0 0.0
        %422 = vmatpush1.msra.mxu0 0.0
        %423 = vmatprep.subr.mxu0 0.0
        %424 = vmatpush1.msra.mxu0 0.0
        %425 = vmatprep.subr.mxu0 0.0
        %426 = vmatpush1.msra.mxu0 0.0
        %427 = vmatprep.subr.mxu0 0.0
        %428 = vmatpush1.msra.mxu0 0.0
        %429 = vmatprep.subr.mxu0 0.0
        %430 = vmatpush1.msra.mxu0 0.0
        %431 = vmatprep.subr.mxu0 0.0
        %432 = vmatpush1.msra.mxu0 0.0
        %433 = vmatprep.subr.mxu0 0.0
        %434 = vmatpush1.msra.mxu0 0.0
        %435 = vmatprep.subr.mxu0 0.0
        %436 = vmatpush1.msra.mxu0 0.0
        %437 = vmatprep.subr.mxu0 0.0
        %438 = vmatpush1.msra.mxu0 %v277
        %439 = vmatprep.subr.mxu0 0.0
        %440 = vmatpush1.msra.mxu0 %v276
        %441 = vmatprep.subr.mxu0 0.0
        %442 = vmatpush2.msra.mxu0 0.0
        %443 = vmatprep.subr.mxu0 0.0
        %444 = vmatpush2.msra.mxu0 0.0
        %445 = vmatprep.subr.mxu0 0.0
        %446 = vmatpush2.msra.mxu0 0.0
        %447 = vmatprep.subr.mxu0 0.0
        %448 = vmatpush2.msra.mxu0 0.0
        %449 = vmatprep.subr.mxu0 0.0
        %450 = vmatpush2.msra.mxu0 0.0
        %451 = vmatprep.subr.mxu0 0.0
        %452 = vmatpush2.msra.mxu0 0.0
        %453 = vmatprep.subr.mxu0 0.0
        %454 = vmatpush2.msra.mxu0 0.0
        %455 = vmatprep.subr.mxu0 0.0
        %456 = vmatpush2.msra.mxu0 0.0
        %457 = vmatprep.subr.mxu0 0.0
        %458 = vmatpush2.msra.mxu0 0.0
        %459 = vmatprep.subr.mxu0 0.0
        %460 = vmatpush2.msra.mxu0 0.0
        %461 = vmatprep.subr.mxu0 0.0
        %462 = vmatpush2.msra.mxu0 0.0
        %463 = vmatprep.subr.mxu0 0.0
        %464 = vmatpush2.msra.mxu0 0.0
        %465 = vmatprep.subr.mxu0 0.0
        %466 = vmatpush2.msra.mxu0 0.0
        %467 = vmatprep.subr.mxu0 0.0
        %468 = vmatpush2.msra.mxu0 0.0
        %469 = vmatprep.subr.mxu0 0.0
        %470 = vmatpush2.msra.mxu0 0.0
        %471 = vmatprep.subr.mxu0 0.0
        %472 = vmatpush2.msra.mxu0 0.0
        %473 = vmatprep.mubr.f32.mxu0 0.0
        %474 = vmatmul.mubr.f32.gmra.mxu0 %v386
        %v475 = vpop.f32.mrf.mxu0
        %v476 = vadd.f32 0.0, %v475
        %v477 = vpop.f32.mrf.mxu0
        %478 = vmatprep.mubr.f32.mxu0 0.0
        %479 = vmatmul.mubr.f32.gmra.mxu0 %v389
        %v480 = vpop.f32.mrf.mxu0
        %v481 = vadd.f32 0.0, %v480
        %v482 = vpop.f32.mrf.mxu0
        %483 = vmatprep.mubr.f32.mxu0 0.0
        %484 = vmatmul.mubr.f32.gmra.mxu0 %v392
        %v485 = vpop.f32.mrf.mxu0
        %v486 = vadd.f32 0.0, %v485
        %v487 = vpop.f32.mrf.mxu0
        %488 = vmatprep.mubr.f32.mxu0 0.0
        %489 = vmatmul.mubr.f32.gmra.mxu0 %v395
        %v490 = vpop.f32.mrf.mxu0
        %v491 = vadd.f32 0.0, %v490
        %v492 = vpop.f32.mrf.mxu0
        %493 = vmatprep.mubr.f32.mxu0 0.0
        %494 = vmatmul.mubr.f32.gmra.mxu0 %v398
        %v495 = vpop.f32.mrf.mxu0
        %v496 = vadd.f32 0.0, %v495
        %v497 = vpop.f32.mrf.mxu0
        %498 = vmatprep.mubr.f32.mxu0 0.0
        %499 = vmatmul.mubr.f32.gmra.mxu0 %v401
        %v500 = vpop.f32.mrf.mxu0
        %v501 = vadd.f32 0.0, %v500
        %v502 = vpop.f32.mrf.mxu0
        %503 = vmatprep.mubr.f32.mxu0 0.0
        %504 = vmatmul.mubr.f32.gmra.mxu0 %v404
        %v505 = vpop.f32.mrf.mxu0
        %v506 = vadd.f32 0.0, %v505
        %v507 = vpop.f32.mrf.mxu0
        %508 = vmatprep.mubr.f32.mxu0 0.0
        %509 = vmatmul.mubr.f32.gmra.mxu0 %v407
        %v510 = vpop.f32.mrf.mxu0
        %v511 = vadd.f32 0.0, %v510
        %v512 = vpop.f32.mrf.mxu0
        %513 = vdwg.mxu0
        %514 = vxpose.xlu0.b32.start [1/16] %v476, 128
        %515 = vxpose.xlu0.b32.cont [2/16] %v481, 128
        %516 = vxpose.xlu0.b32.cont [3/16] 0.0, 128
        %517 = vxpose.xlu0.b32.cont [4/16] 0.0, 128
        %518 = vxpose.xlu0.b32.cont [5/16] 0.0, 128
        %519 = vxpose.xlu0.b32.cont [6/16] 0.0, 128
        %520 = vxpose.xlu0.b32.cont [7/16] 0.0, 128
        %521 = vxpose.xlu0.b32.cont [8/16] 0.0, 128
        %522 = vxpose.xlu0.b32.cont [9/16] 0.0, 128
        %523 = vxpose.xlu0.b32.cont [10/16] 0.0, 128
        %524 = vxpose.xlu0.b32.cont [11/16] 0.0, 128
        %525 = vxpose.xlu0.b32.cont [12/16] 0.0, 128
        %526 = vxpose.xlu0.b32.cont [13/16] 0.0, 128
        %527 = vxpose.xlu0.b32.cont [14/16] 0.0, 128
        %528 = vxpose.xlu0.b32.cont [15/16] 0.0, 128
        %529 = vxpose.xlu0.b32.end [16/16] 0.0, 128
        %v530 = vpop.trf.xlu0
        %v531 = vpop.trf.xlu0
        %v532 = vpop.trf.xlu0
        %v533 = vpop.trf.xlu0
        %v534 = vpop.trf.xlu0
        %v535 = vpop.trf.xlu0
        %v536 = vpop.trf.xlu0
        %v537 = vpop.trf.xlu0
        %v538 = vpop.trf.xlu0
        %v539 = vpop.trf.xlu0
        %v540 = vpop.trf.xlu0
        %v541 = vpop.trf.xlu0
        %v542 = vpop.trf.xlu0
        %v543 = vpop.trf.xlu0
        %v544 = vpop.trf.xlu0
        %v545 = vpop.trf.xlu0
        %546 = vxpose.xlu0.b32.start [1/16] %v486, 128
        %547 = vxpose.xlu0.b32.cont [2/16] %v491, 128
        %548 = vxpose.xlu0.b32.cont [3/16] 0.0, 128
        %549 = vxpose.xlu0.b32.cont [4/16] 0.0, 128
        %550 = vxpose.xlu0.b32.cont [5/16] 0.0, 128
        %551 = vxpose.xlu0.b32.cont [6/16] 0.0, 128
        %552 = vxpose.xlu0.b32.cont [7/16] 0.0, 128
        %553 = vxpose.xlu0.b32.cont [8/16] 0.0, 128
        %554 = vxpose.xlu0.b32.cont [9/16] 0.0, 128
        %555 = vxpose.xlu0.b32.cont [10/16] 0.0, 128
        %556 = vxpose.xlu0.b32.cont [11/16] 0.0, 128
        %557 = vxpose.xlu0.b32.cont [12/16] 0.0, 128
        %558 = vxpose.xlu0.b32.cont [13/16] 0.0, 128
        %559 = vxpose.xlu0.b32.cont [14/16] 0.0, 128
        %560 = vxpose.xlu0.b32.cont [15/16] 0.0, 128
        %561 = vxpose.xlu0.b32.end [16/16] 0.0, 128
        %v562 = vpop.trf.xlu0
        %v563 = vpop.trf.xlu0
        %v564 = vpop.trf.xlu0
        %v565 = vpop.trf.xlu0
        %v566 = vpop.trf.xlu0
        %v567 = vpop.trf.xlu0
        %v568 = vpop.trf.xlu0
        %v569 = vpop.trf.xlu0
        %v570 = vpop.trf.xlu0
        %v571 = vpop.trf.xlu0
        %v572 = vpop.trf.xlu0
        %v573 = vpop.trf.xlu0
        %v574 = vpop.trf.xlu0
        %v575 = vpop.trf.xlu0
        %v576 = vpop.trf.xlu0
        %v577 = vpop.trf.xlu0
        %578 = vxpose.xlu0.b32.start [1/16] %v496, 128
        %579 = vxpose.xlu0.b32.cont [2/16] %v501, 128
        %580 = vxpose.xlu0.b32.cont [3/16] 0.0, 128
        %581 = vxpose.xlu0.b32.cont [4/16] 0.0, 128
        %582 = vxpose.xlu0.b32.cont [5/16] 0.0, 128
        %583 = vxpose.xlu0.b32.cont [6/16] 0.0, 128
        %584 = vxpose.xlu0.b32.cont [7/16] 0.0, 128
        %585 = vxpose.xlu0.b32.cont [8/16] 0.0, 128
        %586 = vxpose.xlu0.b32.cont [9/16] 0.0, 128
        %587 = vxpose.xlu0.b32.cont [10/16] 0.0, 128
        %588 = vxpose.xlu0.b32.cont [11/16] 0.0, 128
        %589 = vxpose.xlu0.b32.cont [12/16] 0.0, 128
        %590 = vxpose.xlu0.b32.cont [13/16] 0.0, 128
        %591 = vxpose.xlu0.b32.cont [14/16] 0.0, 128
        %592 = vxpose.xlu0.b32.cont [15/16] 0.0, 128
        %593 = vxpose.xlu0.b32.end [16/16] 0.0, 128
        %v594 = vpop.trf.xlu0
        %v595 = vpop.trf.xlu0
        %v596 = vpop.trf.xlu0
        %v597 = vpop.trf.xlu0
        %v598 = vpop.trf.xlu0
        %v599 = vpop.trf.xlu0
        %v600 = vpop.trf.xlu0
        %v601 = vpop.trf.xlu0
        %v602 = vpop.trf.xlu0
        %v603 = vpop.trf.xlu0
        %v604 = vpop.trf.xlu0
        %v605 = vpop.trf.xlu0
        %v606 = vpop.trf.xlu0
        %v607 = vpop.trf.xlu0
        %v608 = vpop.trf.xlu0
        %v609 = vpop.trf.xlu0
        %610 = vxpose.xlu0.b32.start [1/16] %v506, 128
        %611 = vxpose.xlu0.b32.cont [2/16] %v511, 128
        %612 = vxpose.xlu0.b32.cont [3/16] 0.0, 128
        %613 = vxpose.xlu0.b32.cont [4/16] 0.0, 128
        %614 = vxpose.xlu0.b32.cont [5/16] 0.0, 128
        %615 = vxpose.xlu0.b32.cont [6/16] 0.0, 128
        %616 = vxpose.xlu0.b32.cont [7/16] 0.0, 128
        %617 = vxpose.xlu0.b32.cont [8/16] 0.0, 128
        %618 = vxpose.xlu0.b32.cont [9/16] 0.0, 128
        %619 = vxpose.xlu0.b32.cont [10/16] 0.0, 128
        %620 = vxpose.xlu0.b32.cont [11/16] 0.0, 128
        %621 = vxpose.xlu0.b32.cont [12/16] 0.0, 128
        %622 = vxpose.xlu0.b32.cont [13/16] 0.0, 128
        %623 = vxpose.xlu0.b32.cont [14/16] 0.0, 128
        %624 = vxpose.xlu0.b32.cont [15/16] 0.0, 128
        %625 = vxpose.xlu0.b32.end [16/16] 0.0, 128
        %v626 = vpop.trf.xlu0
        %v627 = vpop.trf.xlu0
        %v628 = vpop.trf.xlu0
        %v629 = vpop.trf.xlu0
        %v630 = vpop.trf.xlu0
        %v631 = vpop.trf.xlu0
        %v632 = vpop.trf.xlu0
        %v633 = vpop.trf.xlu0
        %v634 = vpop.trf.xlu0
        %v635 = vpop.trf.xlu0
        %v636 = vpop.trf.xlu0
        %v637 = vpop.trf.xlu0
        %v638 = vpop.trf.xlu0
        %v639 = vpop.trf.xlu0
        %v640 = vpop.trf.xlu0
        %v641 = vpop.trf.xlu0
        %v646 = vcombine.high %v530, %v530
        %v648 = vunpack.c.l.s4 1983009808
        %v649 = vunpack.c.0.s8 %v648
        %v650 = vlaneseq
        %v651 = vshrl.u32 %v650, 7
        %v652 = vsub.s32 %v649, %v651
        %v653 = vrot.slane %v530, %v652
        %v655 = vunpack.c.l.s4 1983009808
        %v656 = vunpack.c.0.s8 %v655
        %v657 = vlaneseq
        %v658 = vshrl.u32 %v657, 7
        %v659 = vsub.s32 %v656, %v658
        %v660 = vrot.slane %v646, %v659
        %v661 = vcombine.high %v653, %v653
        %v662 = vcombine.high %v562, %v562
        %v664 = vunpack.c.l.s4 1983009808
        %v665 = vunpack.c.0.s8 %v664
        %v666 = vlaneseq
        %v667 = vshrl.u32 %v666, 7
        %v668 = vsub.s32 %v665, %v667
        %v669 = vrot.slane %v562, %v668
        %v671 = vunpack.c.l.s4 1983009808
        %v672 = vunpack.c.0.s8 %v671
        %v673 = vlaneseq
        %v674 = vshrl.u32 %v673, 7
        %v675 = vsub.s32 %v672, %v674
        %v676 = vrot.slane %v662, %v675
        %v677 = vcombine.high %v669, %v669
        %v678 = vcombine.high %v594, %v594
        %v680 = vunpack.c.l.s4 1983009808
        %v681 = vunpack.c.0.s8 %v680
        %v682 = vlaneseq
        %v683 = vshrl.u32 %v682, 7
        %v684 = vsub.s32 %v681, %v683
        %v685 = vrot.slane %v594, %v684
        %v687 = vunpack.c.l.s4 1983009808
        %v688 = vunpack.c.0.s8 %v687
        %v689 = vlaneseq
        %v690 = vshrl.u32 %v689, 7
        %v691 = vsub.s32 %v688, %v690
        %v692 = vrot.slane %v678, %v691
        %v693 = vcombine.high %v685, %v685
        %v694 = vcombine.high %v626, %v626
        %v696 = vunpack.c.l.s4 1983009808
        %v697 = vunpack.c.0.s8 %v696
        %v698 = vlaneseq
        %v699 = vshrl.u32 %v698, 7
        %v700 = vsub.s32 %v697, %v699
        %v701 = vrot.slane %v626, %v700
        %v703 = vunpack.c.l.s4 1983009808
        %v704 = vunpack.c.0.s8 %v703
        %v705 = vlaneseq
        %v706 = vshrl.u32 %v705, 7
        %v707 = vsub.s32 %v704, %v706
        %v708 = vrot.slane %v694, %v707
        %v709 = vcombine.high %v701, %v701
        %v710 = vcombine.low %v653, %v661
        %v711 = vcombine.low %v660, %v669
        %v713 = vunpack.c.l.s4 1983009808
        %v714 = vunpack.c.0.s8 %v713
        %v715 = vlaneseq
        %v716 = vshrl.u32 %v715, 7
        %v717 = vsub.s32 %v714, %v716
        %v718 = vrot.slane %v710, %v717
        %v720 = vunpack.c.l.s4 1983009808
        %v721 = vunpack.c.0.s8 %v720
        %v722 = vlaneseq
        %v723 = vshrl.u32 %v722, 7
        %v724 = vsub.s32 %v721, %v723
        %v725 = vrot.slane %v711, %v724
        %v726 = vcombine.low %v718, %v725
        %v727 = vcombine.low %v677, %v676
        %v728 = vcombine.low %v685, %v693
        %v730 = vunpack.c.l.s4 1983009808
        %v731 = vunpack.c.0.s8 %v730
        %v732 = vlaneseq
        %v733 = vshrl.u32 %v732, 7
        %v734 = vsub.s32 %v731, %v733
        %v735 = vrot.slane %v727, %v734
        %v737 = vunpack.c.l.s4 1983009808
        %v738 = vunpack.c.0.s8 %v737
        %v739 = vlaneseq
        %v740 = vshrl.u32 %v739, 7
        %v741 = vsub.s32 %v738, %v740
        %v742 = vrot.slane %v728, %v741
        %v743 = vcombine.low %v735, %v742
        %v744 = vcombine.low %v692, %v701
        %v745 = vcombine.low %v709, %v708
        %v747 = vunpack.c.l.s4 1983009808
        %v748 = vunpack.c.0.s8 %v747
        %v749 = vlaneseq
        %v750 = vshrl.u32 %v749, 7
        %v751 = vsub.s32 %v748, %v750
        %v752 = vrot.slane %v744, %v751
        %v754 = vunpack.c.l.s4 1983009808
        %v755 = vunpack.c.0.s8 %v754
        %v756 = vlaneseq
        %v757 = vshrl.u32 %v756, 7
        %v758 = vsub.s32 %v755, %v757
        %v759 = vrot.slane %v745, %v758
        %v760 = vcombine.low %v752, %v759
        %v761 = vsel %vm296, %v726, 0
        %v763 = vsel %vm296, %v743, 0
        %v765 = vsel %vm296, %v760, 0
        %767 = vmatprep.subr.mxu0 0.0
        %768 = vmatpush1.msra.mxu0 0.0
        %769 = vmatprep.subr.mxu0 0.0
        %770 = vmatpush1.msra.mxu0 0.0
        %771 = vmatprep.subr.mxu0 0.0
        %772 = vmatpush1.msra.mxu0 0.0
        %773 = vmatprep.subr.mxu0 0.0
        %774 = vmatpush1.msra.mxu0 0.0
        %775 = vmatprep.subr.mxu0 0.0
        %776 = vmatpush1.msra.mxu0 0.0
        %777 = vmatprep.subr.mxu0 0.0
        %778 = vmatpush1.msra.mxu0 0.0
        %779 = vmatprep.subr.mxu0 0.0
        %780 = vmatpush1.msra.mxu0 0.0
        %781 = vmatprep.subr.mxu0 0.0
        %782 = vmatpush1.msra.mxu0 0.0
        %783 = vmatprep.subr.mxu0 0.0
        %784 = vmatpush1.msra.mxu0 0.0
        %785 = vmatprep.subr.mxu0 0.0
        %786 = vmatpush1.msra.mxu0 0.0
        %787 = vmatprep.subr.mxu0 0.0
        %788 = vmatpush1.msra.mxu0 0.0
        %789 = vmatprep.subr.mxu0 0.0
        %790 = vmatpush1.msra.mxu0 0.0
        %791 = vmatprep.subr.mxu0 0.0
        %792 = vmatpush1.msra.mxu0 0.0
        %793 = vmatprep.subr.mxu0 0.0
        %794 = vmatpush1.msra.mxu0 0.0
        %795 = vmatprep.subr.mxu0 0.0
        %796 = vmatpush1.msra.mxu0 %v279
        %797 = vmatprep.subr.mxu0 0.0
        %798 = vmatpush1.msra.mxu0 %v278
        %799 = vmatprep.subr.mxu0 0.0
        %800 = vmatpush2.msra.mxu0 0.0
        %801 = vmatprep.subr.mxu0 0.0
        %802 = vmatpush2.msra.mxu0 0.0
        %803 = vmatprep.subr.mxu0 0.0
        %804 = vmatpush2.msra.mxu0 0.0
        %805 = vmatprep.subr.mxu0 0.0
        %806 = vmatpush2.msra.mxu0 0.0
        %807 = vmatprep.subr.mxu0 0.0
        %808 = vmatpush2.msra.mxu0 0.0
        %809 = vmatprep.subr.mxu0 0.0
        %810 = vmatpush2.msra.mxu0 0.0
        %811 = vmatprep.subr.mxu0 0.0
        %812 = vmatpush2.msra.mxu0 0.0
        %813 = vmatprep.subr.mxu0 0.0
        %814 = vmatpush2.msra.mxu0 0.0
        %815 = vmatprep.subr.mxu0 0.0
        %816 = vmatpush2.msra.mxu0 0.0
        %817 = vmatprep.subr.mxu0 0.0
        %818 = vmatpush2.msra.mxu0 0.0
        %819 = vmatprep.subr.mxu0 0.0
        %820 = vmatpush2.msra.mxu0 0.0
        %821 = vmatprep.subr.mxu0 0.0
        %822 = vmatpush2.msra.mxu0 0.0
        %823 = vmatprep.subr.mxu0 0.0
        %824 = vmatpush2.msra.mxu0 0.0
        %825 = vmatprep.subr.mxu0 0.0
        %826 = vmatpush2.msra.mxu0 0.0
        %827 = vmatprep.subr.mxu0 0.0
        %828 = vmatpush2.msra.mxu0 0.0
        %829 = vmatprep.subr.mxu0 0.0
        %830 = vmatpush2.msra.mxu0 0.0
        %831 = vmatprep.mubr.f32.mxu0 0.0
        %832 = vmatmul.mubr.f32.gmra.mxu0 %v761
        %v833 = vpop.f32.mrf.mxu0
        %v834 = vadd.f32 0.0, %v833
        %v835 = vpop.f32.mrf.mxu0
        %836 = vmatprep.mubr.f32.mxu0 0.0
        %837 = vmatmul.mubr.f32.gmra.mxu0 %v763
        %v838 = vpop.f32.mrf.mxu0
        %v839 = vadd.f32 0.0, %v838
        %v840 = vpop.f32.mrf.mxu0
        %841 = vmatprep.mubr.f32.mxu0 0.0
        %842 = vmatmul.mubr.f32.gmra.mxu0 %v765
        %v843 = vpop.f32.mrf.mxu0
        %v844 = vadd.f32 0.0, %v843
        %v845 = vpop.f32.mrf.mxu0
        %846 = vdwg.mxu0
        %v850 = vcombine.high %v834, %v834
        %v852 = vunpack.c.l.s4 1983009808
        %v853 = vunpack.c.0.s8 %v852
        %v854 = vlaneseq
        %v855 = vshrl.u32 %v854, 7
        %v856 = vsub.s32 %v853, %v855
        %v857 = vrot.slane %v834, %v856
        %v859 = vunpack.c.l.s4 1983009808
        %v860 = vunpack.c.0.s8 %v859
        %v861 = vlaneseq
        %v862 = vshrl.u32 %v861, 7
        %v863 = vsub.s32 %v860, %v862
        %v864 = vrot.slane %v850, %v863
        %v865 = vcombine.high %v857, %v857
        %v866 = vcombine.high %v864, %v864
        %v867 = vcombine.high %v839, %v839
        %v869 = vunpack.c.l.s4 1983009808
        %v870 = vunpack.c.0.s8 %v869
        %v871 = vlaneseq
        %v872 = vshrl.u32 %v871, 7
        %v873 = vsub.s32 %v870, %v872
        %v874 = vrot.slane %v839, %v873
        %v876 = vunpack.c.l.s4 1983009808
        %v877 = vunpack.c.0.s8 %v876
        %v878 = vlaneseq
        %v879 = vshrl.u32 %v878, 7
        %v880 = vsub.s32 %v877, %v879
        %v881 = vrot.slane %v867, %v880
        %v882 = vcombine.high %v874, %v874
        %v883 = vcombine.high %v881, %v881
        %v884 = vcombine.high %v844, %v844
        %v886 = vunpack.c.l.s4 1983009808
        %v887 = vunpack.c.0.s8 %v886
        %v888 = vlaneseq
        %v889 = vshrl.u32 %v888, 7
        %v890 = vsub.s32 %v887, %v889
        %v891 = vrot.slane %v844, %v890
        %v893 = vunpack.c.l.s4 1983009808
        %v894 = vunpack.c.0.s8 %v893
        %v895 = vlaneseq
        %v896 = vshrl.u32 %v895, 7
        %v897 = vsub.s32 %v894, %v896
        %v898 = vrot.slane %v884, %v897
        %v899 = vcombine.high %v891, %v891
        %v900 = vcombine.high %v898, %v898
        %v914 = vsel %vm296, %v377, 0
        %v917 = vsel %vm296, %v378, 0
        %v920 = vsel %vm296, %v379, 0
        %v923 = vsel %vm296, %v380, 0
        %v926 = vsel %vm296, %v381, 0
        %v929 = vsel %vm296, %v382, 0
        %v932 = vsel %vm296, %v383, 0
        %v935 = vsel %vm296, %v384, 0
        %937 = vmatprep.subr.mxu0 0.0
        %938 = vmatpush1.msra.mxu0 0.0
        %939 = vmatprep.subr.mxu0 0.0
        %940 = vmatpush1.msra.mxu0 0.0
        %941 = vmatprep.subr.mxu0 0.0
        %942 = vmatpush1.msra.mxu0 0.0
        %943 = vmatprep.subr.mxu0 0.0
        %944 = vmatpush1.msra.mxu0 0.0
        %945 = vmatprep.subr.mxu0 0.0
        %946 = vmatpush1.msra.mxu0 0.0
        %947 = vmatprep.subr.mxu0 0.0
        %948 = vmatpush1.msra.mxu0 0.0
        %949 = vmatprep.subr.mxu0 0.0
        %950 = vmatpush1.msra.mxu0 0.0
        %951 = vmatprep.subr.mxu0 0.0
        %952 = vmatpush1.msra.mxu0 0.0
        %953 = vmatprep.subr.mxu0 0.0
        %954 = vmatpush1.msra.mxu0 0.0
        %955 = vmatprep.subr.mxu0 0.0
        %956 = vmatpush1.msra.mxu0 0.0
        %957 = vmatprep.subr.mxu0 0.0
        %958 = vmatpush1.msra.mxu0 0.0
        %959 = vmatprep.subr.mxu0 0.0
        %960 = vmatpush1.msra.mxu0 0.0
        %961 = vmatprep.subr.mxu0 0.0
        %962 = vmatpush1.msra.mxu0 0.0
        %963 = vmatprep.subr.mxu0 0.0
        %964 = vmatpush1.msra.mxu0 0.0
        %965 = vmatprep.subr.mxu0 0.0
        %966 = vmatpush1.msra.mxu0 %v277
        %967 = vmatprep.subr.mxu0 0.0
        %968 = vmatpush1.msra.mxu0 %v276
        %969 = vmatprep.subr.mxu0 0.0
        %970 = vmatpush2.msra.mxu0 0.0
        %971 = vmatprep.subr.mxu0 0.0
        %972 = vmatpush2.msra.mxu0 0.0
        %973 = vmatprep.subr.mxu0 0.0
        %974 = vmatpush2.msra.mxu0 0.0
        %975 = vmatprep.subr.mxu0 0.0
        %976 = vmatpush2.msra.mxu0 0.0
        %977 = vmatprep.subr.mxu0 0.0
        %978 = vmatpush2.msra.mxu0 0.0
        %979 = vmatprep.subr.mxu0 0.0
        %980 = vmatpush2.msra.mxu0 0.0
        %981 = vmatprep.subr.mxu0 0.0
        %982 = vmatpush2.msra.mxu0 0.0
        %983 = vmatprep.subr.mxu0 0.0
        %984 = vmatpush2.msra.mxu0 0.0
        %985 = vmatprep.subr.mxu0 0.0
        %986 = vmatpush2.msra.mxu0 0.0
        %987 = vmatprep.subr.mxu0 0.0
        %988 = vmatpush2.msra.mxu0 0.0
        %989 = vmatprep.subr.mxu0 0.0
        %990 = vmatpush2.msra.mxu0 0.0
        %991 = vmatprep.subr.mxu0 0.0
        %992 = vmatpush2.msra.mxu0 0.0
        %993 = vmatprep.subr.mxu0 0.0
        %994 = vmatpush2.msra.mxu0 0.0
        %995 = vmatprep.subr.mxu0 0.0
        %996 = vmatpush2.msra.mxu0 0.0
        %997 = vmatprep.subr.mxu0 0.0
        %998 = vmatpush2.msra.mxu0 0.0
        %999 = vmatprep.subr.mxu0 0.0
        %1000 = vmatpush2.msra.mxu0 0.0
        %1001 = vmatprep.mubr.f32.mxu0 0.0
        %1002 = vmatmul.mubr.f32.gmra.mxu0 %v914
        %v1003 = vpop.f32.mrf.mxu0
        %v1004 = vadd.f32 0.0, %v1003
        %v1005 = vpop.f32.mrf.mxu0
        %1006 = vmatprep.mubr.f32.mxu0 0.0
        %1007 = vmatmul.mubr.f32.gmra.mxu0 %v917
        %v1008 = vpop.f32.mrf.mxu0
        %v1009 = vadd.f32 0.0, %v1008
        %v1010 = vpop.f32.mrf.mxu0
        %1011 = vmatprep.mubr.f32.mxu0 0.0
        %1012 = vmatmul.mubr.f32.gmra.mxu0 %v920
        %v1013 = vpop.f32.mrf.mxu0
        %v1014 = vadd.f32 0.0, %v1013
        %v1015 = vpop.f32.mrf.mxu0
        %1016 = vmatprep.mubr.f32.mxu0 0.0
        %1017 = vmatmul.mubr.f32.gmra.mxu0 %v923
        %v1018 = vpop.f32.mrf.mxu0
        %v1019 = vadd.f32 0.0, %v1018
        %v1020 = vpop.f32.mrf.mxu0
        %1021 = vmatprep.mubr.f32.mxu0 0.0
        %1022 = vmatmul.mubr.f32.gmra.mxu0 %v926
        %v1023 = vpop.f32.mrf.mxu0
        %v1024 = vadd.f32 0.0, %v1023
        %v1025 = vpop.f32.mrf.mxu0
        %1026 = vmatprep.mubr.f32.mxu0 0.0
        %1027 = vmatmul.mubr.f32.gmra.mxu0 %v929
        %v1028 = vpop.f32.mrf.mxu0
        %v1029 = vadd.f32 0.0, %v1028
        %v1030 = vpop.f32.mrf.mxu0
        %1031 = vmatprep.mubr.f32.mxu0 0.0
        %1032 = vmatmul.mubr.f32.gmra.mxu0 %v932
        %v1033 = vpop.f32.mrf.mxu0
        %v1034 = vadd.f32 0.0, %v1033
        %v1035 = vpop.f32.mrf.mxu0
        %1036 = vmatprep.mubr.f32.mxu0 0.0
        %1037 = vmatmul.mubr.f32.gmra.mxu0 %v935
        %v1038 = vpop.f32.mrf.mxu0
        %v1039 = vadd.f32 0.0, %v1038
        %v1040 = vpop.f32.mrf.mxu0
        %1041 = vdwg.mxu0
        %1042 = vxpose.xlu0.b32.start [1/16] %v1004, 128
        %1043 = vxpose.xlu0.b32.cont [2/16] %v1009, 128
        %1044 = vxpose.xlu0.b32.cont [3/16] 0.0, 128
        %1045 = vxpose.xlu0.b32.cont [4/16] 0.0, 128
        %1046 = vxpose.xlu0.b32.cont [5/16] 0.0, 128
        %1047 = vxpose.xlu0.b32.cont [6/16] 0.0, 128
        %1048 = vxpose.xlu0.b32.cont [7/16] 0.0, 128
        %1049 = vxpose.xlu0.b32.cont [8/16] 0.0, 128
        %1050 = vxpose.xlu0.b32.cont [9/16] 0.0, 128
        %1051 = vxpose.xlu0.b32.cont [10/16] 0.0, 128
        %1052 = vxpose.xlu0.b32.cont [11/16] 0.0, 128
        %1053 = vxpose.xlu0.b32.cont [12/16] 0.0, 128
        %1054 = vxpose.xlu0.b32.cont [13/16] 0.0, 128
        %1055 = vxpose.xlu0.b32.cont [14/16] 0.0, 128
        %1056 = vxpose.xlu0.b32.cont [15/16] 0.0, 128
        %1057 = vxpose.xlu0.b32.end [16/16] 0.0, 128
        %v1058 = vpop.trf.xlu0
        %v1059 = vpop.trf.xlu0
        %v1060 = vpop.trf.xlu0
        %v1061 = vpop.trf.xlu0
        %v1062 = vpop.trf.xlu0
        %v1063 = vpop.trf.xlu0
        %v1064 = vpop.trf.xlu0
        %v1065 = vpop.trf.xlu0
        %v1066 = vpop.trf.xlu0
        %v1067 = vpop.trf.xlu0
        %v1068 = vpop.trf.xlu0
        %v1069 = vpop.trf.xlu0
        %v1070 = vpop.trf.xlu0
        %v1071 = vpop.trf.xlu0
        %v1072 = vpop.trf.xlu0
        %v1073 = vpop.trf.xlu0
        %1074 = vxpose.xlu0.b32.start [1/16] %v1014, 128
        %1075 = vxpose.xlu0.b32.cont [2/16] %v1019, 128
        %1076 = vxpose.xlu0.b32.cont [3/16] 0.0, 128
        %1077 = vxpose.xlu0.b32.cont [4/16] 0.0, 128
        %1078 = vxpose.xlu0.b32.cont [5/16] 0.0, 128
        %1079 = vxpose.xlu0.b32.cont [6/16] 0.0, 128
        %1080 = vxpose.xlu0.b32.cont [7/16] 0.0, 128
        %1081 = vxpose.xlu0.b32.cont [8/16] 0.0, 128
        %1082 = vxpose.xlu0.b32.cont [9/16] 0.0, 128
        %1083 = vxpose.xlu0.b32.cont [10/16] 0.0, 128
        %1084 = vxpose.xlu0.b32.cont [11/16] 0.0, 128
        %1085 = vxpose.xlu0.b32.cont [12/16] 0.0, 128
        %1086 = vxpose.xlu0.b32.cont [13/16] 0.0, 128
        %1087 = vxpose.xlu0.b32.cont [14/16] 0.0, 128
        %1088 = vxpose.xlu0.b32.cont [15/16] 0.0, 128
        %1089 = vxpose.xlu0.b32.end [16/16] 0.0, 128
        %v1090 = vpop.trf.xlu0
        %v1091 = vpop.trf.xlu0
        %v1092 = vpop.trf.xlu0
        %v1093 = vpop.trf.xlu0
        %v1094 = vpop.trf.xlu0
        %v1095 = vpop.trf.xlu0
        %v1096 = vpop.trf.xlu0
        %v1097 = vpop.trf.xlu0
        %v1098 = vpop.trf.xlu0
        %v1099 = vpop.trf.xlu0
        %v1100 = vpop.trf.xlu0
        %v1101 = vpop.trf.xlu0
        %v1102 = vpop.trf.xlu0
        %v1103 = vpop.trf.xlu0
        %v1104 = vpop.trf.xlu0
        %v1105 = vpop.trf.xlu0
        %1106 = vxpose.xlu0.b32.start [1/16] %v1024, 128
        %1107 = vxpose.xlu0.b32.cont [2/16] %v1029, 128
        %1108 = vxpose.xlu0.b32.cont [3/16] 0.0, 128
        %1109 = vxpose.xlu0.b32.cont [4/16] 0.0, 128
        %1110 = vxpose.xlu0.b32.cont [5/16] 0.0, 128
        %1111 = vxpose.xlu0.b32.cont [6/16] 0.0, 128
        %1112 = vxpose.xlu0.b32.cont [7/16] 0.0, 128
        %1113 = vxpose.xlu0.b32.cont [8/16] 0.0, 128
        %1114 = vxpose.xlu0.b32.cont [9/16] 0.0, 128
        %1115 = vxpose.xlu0.b32.cont [10/16] 0.0, 128
        %1116 = vxpose.xlu0.b32.cont [11/16] 0.0, 128
        %1117 = vxpose.xlu0.b32.cont [12/16] 0.0, 128
        %1118 = vxpose.xlu0.b32.cont [13/16] 0.0, 128
        %1119 = vxpose.xlu0.b32.cont [14/16] 0.0, 128
        %1120 = vxpose.xlu0.b32.cont [15/16] 0.0, 128
        %1121 = vxpose.xlu0.b32.end [16/16] 0.0, 128
        %v1122 = vpop.trf.xlu0
        %v1123 = vpop.trf.xlu0
        %v1124 = vpop.trf.xlu0
        %v1125 = vpop.trf.xlu0
        %v1126 = vpop.trf.xlu0
        %v1127 = vpop.trf.xlu0
        %v1128 = vpop.trf.xlu0
        %v1129 = vpop.trf.xlu0
        %v1130 = vpop.trf.xlu0
        %v1131 = vpop.trf.xlu0
        %v1132 = vpop.trf.xlu0
        %v1133 = vpop.trf.xlu0
        %v1134 = vpop.trf.xlu0
        %v1135 = vpop.trf.xlu0
        %v1136 = vpop.trf.xlu0
        %v1137 = vpop.trf.xlu0
        %1138 = vxpose.xlu0.b32.start [1/16] %v1034, 128
        %1139 = vxpose.xlu0.b32.cont [2/16] %v1039, 128
        %1140 = vxpose.xlu0.b32.cont [3/16] 0.0, 128
        %1141 = vxpose.xlu0.b32.cont [4/16] 0.0, 128
        %1142 = vxpose.xlu0.b32.cont [5/16] 0.0, 128
        %1143 = vxpose.xlu0.b32.cont [6/16] 0.0, 128
        %1144 = vxpose.xlu0.b32.cont [7/16] 0.0, 128
        %1145 = vxpose.xlu0.b32.cont [8/16] 0.0, 128
        %1146 = vxpose.xlu0.b32.cont [9/16] 0.0, 128
        %1147 = vxpose.xlu0.b32.cont [10/16] 0.0, 128
        %1148 = vxpose.xlu0.b32.cont [11/16] 0.0, 128
        %1149 = vxpose.xlu0.b32.cont [12/16] 0.0, 128
        %1150 = vxpose.xlu0.b32.cont [13/16] 0.0, 128
        %1151 = vxpose.xlu0.b32.cont [14/16] 0.0, 128
        %1152 = vxpose.xlu0.b32.cont [15/16] 0.0, 128
        %1153 = vxpose.xlu0.b32.end [16/16] 0.0, 128
        %v1154 = vpop.trf.xlu0
        %v1155 = vpop.trf.xlu0
        %v1156 = vpop.trf.xlu0
        %v1157 = vpop.trf.xlu0
        %v1158 = vpop.trf.xlu0
        %v1159 = vpop.trf.xlu0
        %v1160 = vpop.trf.xlu0
        %v1161 = vpop.trf.xlu0
        %v1162 = vpop.trf.xlu0
        %v1163 = vpop.trf.xlu0
        %v1164 = vpop.trf.xlu0
        %v1165 = vpop.trf.xlu0
        %v1166 = vpop.trf.xlu0
        %v1167 = vpop.trf.xlu0
        %v1168 = vpop.trf.xlu0
        %v1169 = vpop.trf.xlu0
        %v1174 = vcombine.high %v1058, %v1058
        %v1176 = vunpack.c.l.s4 1983009808
        %v1177 = vunpack.c.0.s8 %v1176
        %v1178 = vlaneseq
        %v1179 = vshrl.u32 %v1178, 7
        %v1180 = vsub.s32 %v1177, %v1179
        %v1181 = vrot.slane %v1058, %v1180
        %v1183 = vunpack.c.l.s4 1983009808
        %v1184 = vunpack.c.0.s8 %v1183
        %v1185 = vlaneseq
        %v1186 = vshrl.u32 %v1185, 7
        %v1187 = vsub.s32 %v1184, %v1186
        %v1188 = vrot.slane %v1174, %v1187
        %v1189 = vcombine.high %v1181, %v1181
        %v1190 = vcombine.high %v1090, %v1090
        %v1192 = vunpack.c.l.s4 1983009808
        %v1193 = vunpack.c.0.s8 %v1192
        %v1194 = vlaneseq
        %v1195 = vshrl.u32 %v1194, 7
        %v1196 = vsub.s32 %v1193, %v1195
        %v1197 = vrot.slane %v1090, %v1196
        %v1199 = vunpack.c.l.s4 1983009808
        %v1200 = vunpack.c.0.s8 %v1199
        %v1201 = vlaneseq
        %v1202 = vshrl.u32 %v1201, 7
        %v1203 = vsub.s32 %v1200, %v1202
        %v1204 = vrot.slane %v1190, %v1203
        %v1205 = vcombine.high %v1197, %v1197
        %v1206 = vcombine.high %v1122, %v1122
        %v1208 = vunpack.c.l.s4 1983009808
        %v1209 = vunpack.c.0.s8 %v1208
        %v1210 = vlaneseq
        %v1211 = vshrl.u32 %v1210, 7
        %v1212 = vsub.s32 %v1209, %v1211
        %v1213 = vrot.slane %v1122, %v1212
        %v1215 = vunpack.c.l.s4 1983009808
        %v1216 = vunpack.c.0.s8 %v1215
        %v1217 = vlaneseq
        %v1218 = vshrl.u32 %v1217, 7
        %v1219 = vsub.s32 %v1216, %v1218
        %v1220 = vrot.slane %v1206, %v1219
        %v1221 = vcombine.high %v1213, %v1213
        %v1222 = vcombine.high %v1154, %v1154
        %v1224 = vunpack.c.l.s4 1983009808
        %v1225 = vunpack.c.0.s8 %v1224
        %v1226 = vlaneseq
        %v1227 = vshrl.u32 %v1226, 7
        %v1228 = vsub.s32 %v1225, %v1227
        %v1229 = vrot.slane %v1154, %v1228
        %v1231 = vunpack.c.l.s4 1983009808
        %v1232 = vunpack.c.0.s8 %v1231
        %v1233 = vlaneseq
        %v1234 = vshrl.u32 %v1233, 7
        %v1235 = vsub.s32 %v1232, %v1234
        %v1236 = vrot.slane %v1222, %v1235
        %v1237 = vcombine.high %v1229, %v1229
        %v1238 = vcombine.low %v1181, %v1189
        %v1239 = vcombine.low %v1188, %v1197
        %v1241 = vunpack.c.l.s4 1983009808
        %v1242 = vunpack.c.0.s8 %v1241
        %v1243 = vlaneseq
        %v1244 = vshrl.u32 %v1243, 7
        %v1245 = vsub.s32 %v1242, %v1244
        %v1246 = vrot.slane %v1238, %v1245
        %v1248 = vunpack.c.l.s4 1983009808
        %v1249 = vunpack.c.0.s8 %v1248
        %v1250 = vlaneseq
        %v1251 = vshrl.u32 %v1250, 7
        %v1252 = vsub.s32 %v1249, %v1251
        %v1253 = vrot.slane %v1239, %v1252
        %v1254 = vcombine.low %v1246, %v1253
        %v1255 = vcombine.low %v1205, %v1204
        %v1256 = vcombine.low %v1213, %v1221
        %v1258 = vunpack.c.l.s4 1983009808
        %v1259 = vunpack.c.0.s8 %v1258
        %v1260 = vlaneseq
        %v1261 = vshrl.u32 %v1260, 7
        %v1262 = vsub.s32 %v1259, %v1261
        %v1263 = vrot.slane %v1255, %v1262
        %v1265 = vunpack.c.l.s4 1983009808
        %v1266 = vunpack.c.0.s8 %v1265
        %v1267 = vlaneseq
        %v1268 = vshrl.u32 %v1267, 7
        %v1269 = vsub.s32 %v1266, %v1268
        %v1270 = vrot.slane %v1256, %v1269
        %v1271 = vcombine.low %v1263, %v1270
        %v1272 = vcombine.low %v1220, %v1229
        %v1273 = vcombine.low %v1237, %v1236
        %v1275 = vunpack.c.l.s4 1983009808
        %v1276 = vunpack.c.0.s8 %v1275
        %v1277 = vlaneseq
        %v1278 = vshrl.u32 %v1277, 7
        %v1279 = vsub.s32 %v1276, %v1278
        %v1280 = vrot.slane %v1272, %v1279
        %v1282 = vunpack.c.l.s4 1983009808
        %v1283 = vunpack.c.0.s8 %v1282
        %v1284 = vlaneseq
        %v1285 = vshrl.u32 %v1284, 7
        %v1286 = vsub.s32 %v1283, %v1285
        %v1287 = vrot.slane %v1273, %v1286
        %v1288 = vcombine.low %v1280, %v1287
        %v1289 = vsel %vm296, %v1254, 0
        %v1291 = vsel %vm296, %v1271, 0
        %v1293 = vsel %vm296, %v1288, 0
        %1295 = vmatprep.subr.mxu0 0.0
        %1296 = vmatpush1.msra.mxu0 0.0
        %1297 = vmatprep.subr.mxu0 0.0
        %1298 = vmatpush1.msra.mxu0 0.0
        %1299 = vmatprep.subr.mxu0 0.0
        %1300 = vmatpush1.msra.mxu0 0.0
        %1301 = vmatprep.subr.mxu0 0.0
        %1302 = vmatpush1.msra.mxu0 0.0
        %1303 = vmatprep.subr.mxu0 0.0
        %1304 = vmatpush1.msra.mxu0 0.0
        %1305 = vmatprep.subr.mxu0 0.0
        %1306 = vmatpush1.msra.mxu0 0.0
        %1307 = vmatprep.subr.mxu0 0.0
        %1308 = vmatpush1.msra.mxu0 0.0
        %1309 = vmatprep.subr.mxu0 0.0
        %1310 = vmatpush1.msra.mxu0 0.0
        %1311 = vmatprep.subr.mxu0 0.0
        %1312 = vmatpush1.msra.mxu0 0.0
        %1313 = vmatprep.subr.mxu0 0.0
        %1314 = vmatpush1.msra.mxu0 0.0
        %1315 = vmatprep.subr.mxu0 0.0
        %1316 = vmatpush1.msra.mxu0 0.0
        %1317 = vmatprep.subr.mxu0 0.0
        %1318 = vmatpush1.msra.mxu0 0.0
        %1319 = vmatprep.subr.mxu0 0.0
        %1320 = vmatpush1.msra.mxu0 0.0
        %1321 = vmatprep.subr.mxu0 0.0
        %1322 = vmatpush1.msra.mxu0 0.0
        %1323 = vmatprep.subr.mxu0 0.0
        %1324 = vmatpush1.msra.mxu0 %v279
        %1325 = vmatprep.subr.mxu0 0.0
        %1326 = vmatpush1.msra.mxu0 %v278
        %1327 = vmatprep.subr.mxu0 0.0
        %1328 = vmatpush2.msra.mxu0 0.0
        %1329 = vmatprep.subr.mxu0 0.0
        %1330 = vmatpush2.msra.mxu0 0.0
        %1331 = vmatprep.subr.mxu0 0.0
        %1332 = vmatpush2.msra.mxu0 0.0
        %1333 = vmatprep.subr.mxu0 0.0
        %1334 = vmatpush2.msra.mxu0 0.0
        %1335 = vmatprep.subr.mxu0 0.0
        %1336 = vmatpush2.msra.mxu0 0.0
        %1337 = vmatprep.subr.mxu0 0.0
        %1338 = vmatpush2.msra.mxu0 0.0
        %1339 = vmatprep.subr.mxu0 0.0
        %1340 = vmatpush2.msra.mxu0 0.0
        %1341 = vmatprep.subr.mxu0 0.0
        %1342 = vmatpush2.msra.mxu0 0.0
        %1343 = vmatprep.subr.mxu0 0.0
        %1344 = vmatpush2.msra.mxu0 0.0
        %1345 = vmatprep.subr.mxu0 0.0
        %1346 = vmatpush2.msra.mxu0 0.0
        %1347 = vmatprep.subr.mxu0 0.0
        %1348 = vmatpush2.msra.mxu0 0.0
        %1349 = vmatprep.subr.mxu0 0.0
        %1350 = vmatpush2.msra.mxu0 0.0
        %1351 = vmatprep.subr.mxu0 0.0
        %1352 = vmatpush2.msra.mxu0 0.0
        %1353 = vmatprep.subr.mxu0 0.0
        %1354 = vmatpush2.msra.mxu0 0.0
        %1355 = vmatprep.subr.mxu0 0.0
        %1356 = vmatpush2.msra.mxu0 0.0
        %1357 = vmatprep.subr.mxu0 0.0
        %1358 = vmatpush2.msra.mxu0 0.0
        %1359 = vmatprep.mubr.f32.mxu0 0.0
        %1360 = vmatmul.mubr.f32.gmra.mxu0 %v1289
        %v1361 = vpop.f32.mrf.mxu0
        %v1362 = vadd.f32 0.0, %v1361
        %v1363 = vpop.f32.mrf.mxu0
        %1364 = vmatprep.mubr.f32.mxu0 0.0
        %1365 = vmatmul.mubr.f32.gmra.mxu0 %v1291
        %v1366 = vpop.f32.mrf.mxu0
        %v1367 = vadd.f32 0.0, %v1366
        %v1368 = vpop.f32.mrf.mxu0
        %1369 = vmatprep.mubr.f32.mxu0 0.0
        %1370 = vmatmul.mubr.f32.gmra.mxu0 %v1293
        %v1371 = vpop.f32.mrf.mxu0
        %v1372 = vadd.f32 0.0, %v1371
        %v1373 = vpop.f32.mrf.mxu0
        %1374 = vdwg.mxu0
        %v1378 = vcombine.high %v1362, %v1362
        %v1380 = vunpack.c.l.s4 1983009808
        %v1381 = vunpack.c.0.s8 %v1380
        %v1382 = vlaneseq
        %v1383 = vshrl.u32 %v1382, 7
        %v1384 = vsub.s32 %v1381, %v1383
        %v1385 = vrot.slane %v1362, %v1384
        %v1387 = vunpack.c.l.s4 1983009808
        %v1388 = vunpack.c.0.s8 %v1387
        %v1389 = vlaneseq
        %v1390 = vshrl.u32 %v1389, 7
        %v1391 = vsub.s32 %v1388, %v1390
        %v1392 = vrot.slane %v1378, %v1391
        %v1393 = vcombine.high %v1385, %v1385
        %v1394 = vcombine.high %v1392, %v1392
        %v1395 = vcombine.high %v1367, %v1367
        %v1397 = vunpack.c.l.s4 1983009808
        %v1398 = vunpack.c.0.s8 %v1397
        %v1399 = vlaneseq
        %v1400 = vshrl.u32 %v1399, 7
        %v1401 = vsub.s32 %v1398, %v1400
        %v1402 = vrot.slane %v1367, %v1401
        %v1404 = vunpack.c.l.s4 1983009808
        %v1405 = vunpack.c.0.s8 %v1404
        %v1406 = vlaneseq
        %v1407 = vshrl.u32 %v1406, 7
        %v1408 = vsub.s32 %v1405, %v1407
        %v1409 = vrot.slane %v1395, %v1408
        %v1410 = vcombine.high %v1402, %v1402
        %v1411 = vcombine.high %v1409, %v1409
        %v1412 = vcombine.high %v1372, %v1372
        %v1414 = vunpack.c.l.s4 1983009808
        %v1415 = vunpack.c.0.s8 %v1414
        %v1416 = vlaneseq
        %v1417 = vshrl.u32 %v1416, 7
        %v1418 = vsub.s32 %v1415, %v1417
        %v1419 = vrot.slane %v1372, %v1418
        %v1421 = vunpack.c.l.s4 1983009808
        %v1422 = vunpack.c.0.s8 %v1421
        %v1423 = vlaneseq
        %v1424 = vshrl.u32 %v1423, 7
        %v1425 = vsub.s32 %v1422, %v1424
        %v1426 = vrot.slane %v1412, %v1425
        %v1427 = vcombine.high %v1419, %v1419
        %v1428 = vcombine.high %v1426, %v1426
        %v1441 = vmul.f32 %v361, %v361
        %v1442 = vmul.f32 %v362, %v362
        %v1443 = vmul.f32 %v363, %v363
        %v1444 = vmul.f32 %v364, %v364
        %v1445 = vmul.f32 %v365, %v365
        %v1446 = vmul.f32 %v366, %v366
        %v1447 = vmul.f32 %v367, %v367
        %v1448 = vmul.f32 %v368, %v368
        %v1450 = vsel %vm296, %v1441, 0
        %v1453 = vsel %vm296, %v1442, 0
        %v1456 = vsel %vm296, %v1443, 0
        %v1459 = vsel %vm296, %v1444, 0
        %v1462 = vsel %vm296, %v1445, 0
        %v1465 = vsel %vm296, %v1446, 0
        %v1468 = vsel %vm296, %v1447, 0
        %v1471 = vsel %vm296, %v1448, 0
        %1473 = vmatprep.subr.mxu0 0.0
        %1474 = vmatpush1.msra.mxu0 0.0
        %1475 = vmatprep.subr.mxu0 0.0
        %1476 = vmatpush1.msra.mxu0 0.0
        %1477 = vmatprep.subr.mxu0 0.0
        %1478 = vmatpush1.msra.mxu0 0.0
        %1479 = vmatprep.subr.mxu0 0.0
        %1480 = vmatpush1.msra.mxu0 0.0
        %1481 = vmatprep.subr.mxu0 0.0
        %1482 = vmatpush1.msra.mxu0 0.0
        %1483 = vmatprep.subr.mxu0 0.0
        %1484 = vmatpush1.msra.mxu0 0.0
        %1485 = vmatprep.subr.mxu0 0.0
        %1486 = vmatpush1.msra.mxu0 0.0
        %1487 = vmatprep.subr.mxu0 0.0
        %1488 = vmatpush1.msra.mxu0 0.0
        %1489 = vmatprep.subr.mxu0 0.0
        %1490 = vmatpush1.msra.mxu0 0.0
        %1491 = vmatprep.subr.mxu0 0.0
        %1492 = vmatpush1.msra.mxu0 0.0
        %1493 = vmatprep.subr.mxu0 0.0
        %1494 = vmatpush1.msra.mxu0 0.0
        %1495 = vmatprep.subr.mxu0 0.0
        %1496 = vmatpush1.msra.mxu0 0.0
        %1497 = vmatprep.subr.mxu0 0.0
        %1498 = vmatpush1.msra.mxu0 0.0
        %1499 = vmatprep.subr.mxu0 0.0
        %1500 = vmatpush1.msra.mxu0 0.0
        %1501 = vmatprep.subr.mxu0 0.0
        %1502 = vmatpush1.msra.mxu0 %v277
        %1503 = vmatprep.subr.mxu0 0.0
        %1504 = vmatpush1.msra.mxu0 %v276
        %1505 = vmatprep.subr.mxu0 0.0
        %1506 = vmatpush2.msra.mxu0 0.0
        %1507 = vmatprep.subr.mxu0 0.0
        %1508 = vmatpush2.msra.mxu0 0.0
        %1509 = vmatprep.subr.mxu0 0.0
        %1510 = vmatpush2.msra.mxu0 0.0
        %1511 = vmatprep.subr.mxu0 0.0
        %1512 = vmatpush2.msra.mxu0 0.0
        %1513 = vmatprep.subr.mxu0 0.0
        %1514 = vmatpush2.msra.mxu0 0.0
        %1515 = vmatprep.subr.mxu0 0.0
        %1516 = vmatpush2.msra.mxu0 0.0
        %1517 = vmatprep.subr.mxu0 0.0
        %1518 = vmatpush2.msra.mxu0 0.0
        %1519 = vmatprep.subr.mxu0 0.0
        %1520 = vmatpush2.msra.mxu0 0.0
        %1521 = vmatprep.subr.mxu0 0.0
        %1522 = vmatpush2.msra.mxu0 0.0
        %1523 = vmatprep.subr.mxu0 0.0
        %1524 = vmatpush2.msra.mxu0 0.0
        %1525 = vmatprep.subr.mxu0 0.0
        %1526 = vmatpush2.msra.mxu0 0.0
        %1527 = vmatprep.subr.mxu0 0.0
        %1528 = vmatpush2.msra.mxu0 0.0
        %1529 = vmatprep.subr.mxu0 0.0
        %1530 = vmatpush2.msra.mxu0 0.0
        %1531 = vmatprep.subr.mxu0 0.0
        %1532 = vmatpush2.msra.mxu0 0.0
        %1533 = vmatprep.subr.mxu0 0.0
        %1534 = vmatpush2.msra.mxu0 0.0
        %1535 = vmatprep.subr.mxu0 0.0
        %1536 = vmatpush2.msra.mxu0 0.0
        %1537 = vmatprep.mubr.f32.mxu0 0.0
        %1538 = vmatmul.mubr.f32.gmra.mxu0 %v1450
        %v1539 = vpop.f32.mrf.mxu0
        %v1540 = vadd.f32 0.0, %v1539
        %v1541 = vpop.f32.mrf.mxu0
        %1542 = vmatprep.mubr.f32.mxu0 0.0
        %1543 = vmatmul.mubr.f32.gmra.mxu0 %v1453
        %v1544 = vpop.f32.mrf.mxu0
        %v1545 = vadd.f32 0.0, %v1544
        %v1546 = vpop.f32.mrf.mxu0
        %1547 = vmatprep.mubr.f32.mxu0 0.0
        %1548 = vmatmul.mubr.f32.gmra.mxu0 %v1456
        %v1549 = vpop.f32.mrf.mxu0
        %v1550 = vadd.f32 0.0, %v1549
        %v1551 = vpop.f32.mrf.mxu0
        %1552 = vmatprep.mubr.f32.mxu0 0.0
        %1553 = vmatmul.mubr.f32.gmra.mxu0 %v1459
        %v1554 = vpop.f32.mrf.mxu0
        %v1555 = vadd.f32 0.0, %v1554
        %v1556 = vpop.f32.mrf.mxu0
        %1557 = vmatprep.mubr.f32.mxu0 0.0
        %1558 = vmatmul.mubr.f32.gmra.mxu0 %v1462
        %v1559 = vpop.f32.mrf.mxu0
        %v1560 = vadd.f32 0.0, %v1559
        %v1561 = vpop.f32.mrf.mxu0
        %1562 = vmatprep.mubr.f32.mxu0 0.0
        %1563 = vmatmul.mubr.f32.gmra.mxu0 %v1465
        %v1564 = vpop.f32.mrf.mxu0
        %v1565 = vadd.f32 0.0, %v1564
        %v1566 = vpop.f32.mrf.mxu0
        %1567 = vmatprep.mubr.f32.mxu0 0.0
        %1568 = vmatmul.mubr.f32.gmra.mxu0 %v1468
        %v1569 = vpop.f32.mrf.mxu0
        %v1570 = vadd.f32 0.0, %v1569
        %v1571 = vpop.f32.mrf.mxu0
        %1572 = vmatprep.mubr.f32.mxu0 0.0
        %1573 = vmatmul.mubr.f32.gmra.mxu0 %v1471
        %v1574 = vpop.f32.mrf.mxu0
        %v1575 = vadd.f32 0.0, %v1574
        %v1576 = vpop.f32.mrf.mxu0
        %1577 = vdwg.mxu0
        %1578 = vxpose.xlu0.b32.start [1/16] %v1540, 128
        %1579 = vxpose.xlu0.b32.cont [2/16] %v1545, 128
        %1580 = vxpose.xlu0.b32.cont [3/16] 0.0, 128
        %1581 = vxpose.xlu0.b32.cont [4/16] 0.0, 128
        %1582 = vxpose.xlu0.b32.cont [5/16] 0.0, 128
        %1583 = vxpose.xlu0.b32.cont [6/16] 0.0, 128
        %1584 = vxpose.xlu0.b32.cont [7/16] 0.0, 128
        %1585 = vxpose.xlu0.b32.cont [8/16] 0.0, 128
        %1586 = vxpose.xlu0.b32.cont [9/16] 0.0, 128
        %1587 = vxpose.xlu0.b32.cont [10/16] 0.0, 128
        %1588 = vxpose.xlu0.b32.cont [11/16] 0.0, 128
        %1589 = vxpose.xlu0.b32.cont [12/16] 0.0, 128
        %1590 = vxpose.xlu0.b32.cont [13/16] 0.0, 128
        %1591 = vxpose.xlu0.b32.cont [14/16] 0.0, 128
        %1592 = vxpose.xlu0.b32.cont [15/16] 0.0, 128
        %1593 = vxpose.xlu0.b32.end [16/16] 0.0, 128
        %v1594 = vpop.trf.xlu0
        %v1595 = vpop.trf.xlu0
        %v1596 = vpop.trf.xlu0
        %v1597 = vpop.trf.xlu0
        %v1598 = vpop.trf.xlu0
        %v1599 = vpop.trf.xlu0
        %v1600 = vpop.trf.xlu0
        %v1601 = vpop.trf.xlu0
        %v1602 = vpop.trf.xlu0
        %v1603 = vpop.trf.xlu0
        %v1604 = vpop.trf.xlu0
        %v1605 = vpop.trf.xlu0
        %v1606 = vpop.trf.xlu0
        %v1607 = vpop.trf.xlu0
        %v1608 = vpop.trf.xlu0
        %v1609 = vpop.trf.xlu0
        %1610 = vxpose.xlu0.b32.start [1/16] %v1550, 128
        %1611 = vxpose.xlu0.b32.cont [2/16] %v1555, 128
        %1612 = vxpose.xlu0.b32.cont [3/16] 0.0, 128
        %1613 = vxpose.xlu0.b32.cont [4/16] 0.0, 128
        %1614 = vxpose.xlu0.b32.cont [5/16] 0.0, 128
        %1615 = vxpose.xlu0.b32.cont [6/16] 0.0, 128
        %1616 = vxpose.xlu0.b32.cont [7/16] 0.0, 128
        %1617 = vxpose.xlu0.b32.cont [8/16] 0.0, 128
        %1618 = vxpose.xlu0.b32.cont [9/16] 0.0, 128
        %1619 = vxpose.xlu0.b32.cont [10/16] 0.0, 128
        %1620 = vxpose.xlu0.b32.cont [11/16] 0.0, 128
        %1621 = vxpose.xlu0.b32.cont [12/16] 0.0, 128
        %1622 = vxpose.xlu0.b32.cont [13/16] 0.0, 128
        %1623 = vxpose.xlu0.b32.cont [14/16] 0.0, 128
        %1624 = vxpose.xlu0.b32.cont [15/16] 0.0, 128
        %1625 = vxpose.xlu0.b32.end [16/16] 0.0, 128
        %v1626 = vpop.trf.xlu0
        %v1627 = vpop.trf.xlu0
        %v1628 = vpop.trf.xlu0
        %v1629 = vpop.trf.xlu0
        %v1630 = vpop.trf.xlu0
        %v1631 = vpop.trf.xlu0
        %v1632 = vpop.trf.xlu0
        %v1633 = vpop.trf.xlu0
        %v1634 = vpop.trf.xlu0
        %v1635 = vpop.trf.xlu0
        %v1636 = vpop.trf.xlu0
        %v1637 = vpop.trf.xlu0
        %v1638 = vpop.trf.xlu0
        %v1639 = vpop.trf.xlu0
        %v1640 = vpop.trf.xlu0
        %v1641 = vpop.trf.xlu0
        %1642 = vxpose.xlu0.b32.start [1/16] %v1560, 128
        %1643 = vxpose.xlu0.b32.cont [2/16] %v1565, 128
        %1644 = vxpose.xlu0.b32.cont [3/16] 0.0, 128
        %1645 = vxpose.xlu0.b32.cont [4/16] 0.0, 128
        %1646 = vxpose.xlu0.b32.cont [5/16] 0.0, 128
        %1647 = vxpose.xlu0.b32.cont [6/16] 0.0, 128
        %1648 = vxpose.xlu0.b32.cont [7/16] 0.0, 128
        %1649 = vxpose.xlu0.b32.cont [8/16] 0.0, 128
        %1650 = vxpose.xlu0.b32.cont [9/16] 0.0, 128
        %1651 = vxpose.xlu0.b32.cont [10/16] 0.0, 128
        %1652 = vxpose.xlu0.b32.cont [11/16] 0.0, 128
        %1653 = vxpose.xlu0.b32.cont [12/16] 0.0, 128
        %1654 = vxpose.xlu0.b32.cont [13/16] 0.0, 128
        %1655 = vxpose.xlu0.b32.cont [14/16] 0.0, 128
        %1656 = vxpose.xlu0.b32.cont [15/16] 0.0, 128
        %1657 = vxpose.xlu0.b32.end [16/16] 0.0, 128
        %v1658 = vpop.trf.xlu0
        %v1659 = vpop.trf.xlu0
        %v1660 = vpop.trf.xlu0
        %v1661 = vpop.trf.xlu0
        %v1662 = vpop.trf.xlu0
        %v1663 = vpop.trf.xlu0
        %v1664 = vpop.trf.xlu0
        %v1665 = vpop.trf.xlu0
        %v1666 = vpop.trf.xlu0
        %v1667 = vpop.trf.xlu0
        %v1668 = vpop.trf.xlu0
        %v1669 = vpop.trf.xlu0
        %v1670 = vpop.trf.xlu0
        %v1671 = vpop.trf.xlu0
        %v1672 = vpop.trf.xlu0
        %v1673 = vpop.trf.xlu0
        %1674 = vxpose.xlu0.b32.start [1/16] %v1570, 128
        %1675 = vxpose.xlu0.b32.cont [2/16] %v1575, 128
        %1676 = vxpose.xlu0.b32.cont [3/16] 0.0, 128
        %1677 = vxpose.xlu0.b32.cont [4/16] 0.0, 128
        %1678 = vxpose.xlu0.b32.cont [5/16] 0.0, 128
        %1679 = vxpose.xlu0.b32.cont [6/16] 0.0, 128
        %1680 = vxpose.xlu0.b32.cont [7/16] 0.0, 128
        %1681 = vxpose.xlu0.b32.cont [8/16] 0.0, 128
        %1682 = vxpose.xlu0.b32.cont [9/16] 0.0, 128
        %1683 = vxpose.xlu0.b32.cont [10/16] 0.0, 128
        %1684 = vxpose.xlu0.b32.cont [11/16] 0.0, 128
        %1685 = vxpose.xlu0.b32.cont [12/16] 0.0, 128
        %1686 = vxpose.xlu0.b32.cont [13/16] 0.0, 128
        %1687 = vxpose.xlu0.b32.cont [14/16] 0.0, 128
        %1688 = vxpose.xlu0.b32.cont [15/16] 0.0, 128
        %1689 = vxpose.xlu0.b32.end [16/16] 0.0, 128
        %v1690 = vpop.trf.xlu0
        %v1691 = vpop.trf.xlu0
        %v1692 = vpop.trf.xlu0
        %v1693 = vpop.trf.xlu0
        %v1694 = vpop.trf.xlu0
        %v1695 = vpop.trf.xlu0
        %v1696 = vpop.trf.xlu0
        %v1697 = vpop.trf.xlu0
        %v1698 = vpop.trf.xlu0
        %v1699 = vpop.trf.xlu0
        %v1700 = vpop.trf.xlu0
        %v1701 = vpop.trf.xlu0
        %v1702 = vpop.trf.xlu0
        %v1703 = vpop.trf.xlu0
        %v1704 = vpop.trf.xlu0
        %v1705 = vpop.trf.xlu0
        %v1710 = vcombine.high %v1594, %v1594
        %v1712 = vunpack.c.l.s4 1983009808
        %v1713 = vunpack.c.0.s8 %v1712
        %v1714 = vlaneseq
        %v1715 = vshrl.u32 %v1714, 7
        %v1716 = vsub.s32 %v1713, %v1715
        %v1717 = vrot.slane %v1594, %v1716
        %v1719 = vunpack.c.l.s4 1983009808
        %v1720 = vunpack.c.0.s8 %v1719
        %v1721 = vlaneseq
        %v1722 = vshrl.u32 %v1721, 7
        %v1723 = vsub.s32 %v1720, %v1722
        %v1724 = vrot.slane %v1710, %v1723
        %v1725 = vcombine.high %v1717, %v1717
        %v1726 = vcombine.high %v1626, %v1626
        %v1728 = vunpack.c.l.s4 1983009808
        %v1729 = vunpack.c.0.s8 %v1728
        %v1730 = vlaneseq
        %v1731 = vshrl.u32 %v1730, 7
        %v1732 = vsub.s32 %v1729, %v1731
        %v1733 = vrot.slane %v1626, %v1732
        %v1735 = vunpack.c.l.s4 1983009808
        %v1736 = vunpack.c.0.s8 %v1735
        %v1737 = vlaneseq
        %v1738 = vshrl.u32 %v1737, 7
        %v1739 = vsub.s32 %v1736, %v1738
        %v1740 = vrot.slane %v1726, %v1739
        %v1741 = vcombine.high %v1733, %v1733
        %v1742 = vcombine.high %v1658, %v1658
        %v1744 = vunpack.c.l.s4 1983009808
        %v1745 = vunpack.c.0.s8 %v1744
        %v1746 = vlaneseq
        %v1747 = vshrl.u32 %v1746, 7
        %v1748 = vsub.s32 %v1745, %v1747
        %v1749 = vrot.slane %v1658, %v1748
        %v1751 = vunpack.c.l.s4 1983009808
        %v1752 = vunpack.c.0.s8 %v1751
        %v1753 = vlaneseq
        %v1754 = vshrl.u32 %v1753, 7
        %v1755 = vsub.s32 %v1752, %v1754
        %v1756 = vrot.slane %v1742, %v1755
        %v1757 = vcombine.high %v1749, %v1749
        %v1758 = vcombine.high %v1690, %v1690
        %v1760 = vunpack.c.l.s4 1983009808
        %v1761 = vunpack.c.0.s8 %v1760
        %v1762 = vlaneseq
        %v1763 = vshrl.u32 %v1762, 7
        %v1764 = vsub.s32 %v1761, %v1763
        %v1765 = vrot.slane %v1690, %v1764
        %v1767 = vunpack.c.l.s4 1983009808
        %v1768 = vunpack.c.0.s8 %v1767
        %v1769 = vlaneseq
        %v1770 = vshrl.u32 %v1769, 7
        %v1771 = vsub.s32 %v1768, %v1770
        %v1772 = vrot.slane %v1758, %v1771
        %v1773 = vcombine.high %v1765, %v1765
        %v1774 = vcombine.low %v1717, %v1725
        %v1775 = vcombine.low %v1724, %v1733
        %v1777 = vunpack.c.l.s4 1983009808
        %v1778 = vunpack.c.0.s8 %v1777
        %v1779 = vlaneseq
        %v1780 = vshrl.u32 %v1779, 7
        %v1781 = vsub.s32 %v1778, %v1780
        %v1782 = vrot.slane %v1774, %v1781
        %v1784 = vunpack.c.l.s4 1983009808
        %v1785 = vunpack.c.0.s8 %v1784
        %v1786 = vlaneseq
        %v1787 = vshrl.u32 %v1786, 7
        %v1788 = vsub.s32 %v1785, %v1787
        %v1789 = vrot.slane %v1775, %v1788
        %v1790 = vcombine.low %v1782, %v1789
        %v1791 = vcombine.low %v1741, %v1740
        %v1792 = vcombine.low %v1749, %v1757
        %v1794 = vunpack.c.l.s4 1983009808
        %v1795 = vunpack.c.0.s8 %v1794
        %v1796 = vlaneseq
        %v1797 = vshrl.u32 %v1796, 7
        %v1798 = vsub.s32 %v1795, %v1797
        %v1799 = vrot.slane %v1791, %v1798
        %v1801 = vunpack.c.l.s4 1983009808
        %v1802 = vunpack.c.0.s8 %v1801
        %v1803 = vlaneseq
        %v1804 = vshrl.u32 %v1803, 7
        %v1805 = vsub.s32 %v1802, %v1804
        %v1806 = vrot.slane %v1792, %v1805
        %v1807 = vcombine.low %v1799, %v1806
        %v1808 = vcombine.low %v1756, %v1765
        %v1809 = vcombine.low %v1773, %v1772
        %v1811 = vunpack.c.l.s4 1983009808
        %v1812 = vunpack.c.0.s8 %v1811
        %v1813 = vlaneseq
        %v1814 = vshrl.u32 %v1813, 7
        %v1815 = vsub.s32 %v1812, %v1814
        %v1816 = vrot.slane %v1808, %v1815
        %v1818 = vunpack.c.l.s4 1983009808
        %v1819 = vunpack.c.0.s8 %v1818
        %v1820 = vlaneseq
        %v1821 = vshrl.u32 %v1820, 7
        %v1822 = vsub.s32 %v1819, %v1821
        %v1823 = vrot.slane %v1809, %v1822
        %v1824 = vcombine.low %v1816, %v1823
        %v1825 = vsel %vm296, %v1790, 0
        %v1827 = vsel %vm296, %v1807, 0
        %v1829 = vsel %vm296, %v1824, 0
        %1831 = vmatprep.subr.mxu0 0.0
        %1832 = vmatpush1.msra.mxu0 0.0
        %1833 = vmatprep.subr.mxu0 0.0
        %1834 = vmatpush1.msra.mxu0 0.0
        %1835 = vmatprep.subr.mxu0 0.0
        %1836 = vmatpush1.msra.mxu0 0.0
        %1837 = vmatprep.subr.mxu0 0.0
        %1838 = vmatpush1.msra.mxu0 0.0
        %1839 = vmatprep.subr.mxu0 0.0
        %1840 = vmatpush1.msra.mxu0 0.0
        %1841 = vmatprep.subr.mxu0 0.0
        %1842 = vmatpush1.msra.mxu0 0.0
        %1843 = vmatprep.subr.mxu0 0.0
        %1844 = vmatpush1.msra.mxu0 0.0
        %1845 = vmatprep.subr.mxu0 0.0
        %1846 = vmatpush1.msra.mxu0 0.0
        %1847 = vmatprep.subr.mxu0 0.0
        %1848 = vmatpush1.msra.mxu0 0.0
        %1849 = vmatprep.subr.mxu0 0.0
        %1850 = vmatpush1.msra.mxu0 0.0
        %1851 = vmatprep.subr.mxu0 0.0
        %1852 = vmatpush1.msra.mxu0 0.0
        %1853 = vmatprep.subr.mxu0 0.0
        %1854 = vmatpush1.msra.mxu0 0.0
        %1855 = vmatprep.subr.mxu0 0.0
        %1856 = vmatpush1.msra.mxu0 0.0
        %1857 = vmatprep.subr.mxu0 0.0
        %1858 = vmatpush1.msra.mxu0 0.0
        %1859 = vmatprep.subr.mxu0 0.0
        %1860 = vmatpush1.msra.mxu0 %v279
        %1861 = vmatprep.subr.mxu0 0.0
        %1862 = vmatpush1.msra.mxu0 %v278
        %1863 = vmatprep.subr.mxu0 0.0
        %1864 = vmatpush2.msra.mxu0 0.0
        %1865 = vmatprep.subr.mxu0 0.0
        %1866 = vmatpush2.msra.mxu0 0.0
        %1867 = vmatprep.subr.mxu0 0.0
        %1868 = vmatpush2.msra.mxu0 0.0
        %1869 = vmatprep.subr.mxu0 0.0
        %1870 = vmatpush2.msra.mxu0 0.0
        %1871 = vmatprep.subr.mxu0 0.0
        %1872 = vmatpush2.msra.mxu0 0.0
        %1873 = vmatprep.subr.mxu0 0.0
        %1874 = vmatpush2.msra.mxu0 0.0
        %1875 = vmatprep.subr.mxu0 0.0
        %1876 = vmatpush2.msra.mxu0 0.0
        %1877 = vmatprep.subr.mxu0 0.0
        %1878 = vmatpush2.msra.mxu0 0.0
        %1879 = vmatprep.subr.mxu0 0.0
        %1880 = vmatpush2.msra.mxu0 0.0
        %1881 = vmatprep.subr.mxu0 0.0
        %1882 = vmatpush2.msra.mxu0 0.0
        %1883 = vmatprep.subr.mxu0 0.0
        %1884 = vmatpush2.msra.mxu0 0.0
        %1885 = vmatprep.subr.mxu0 0.0
        %1886 = vmatpush2.msra.mxu0 0.0
        %1887 = vmatprep.subr.mxu0 0.0
        %1888 = vmatpush2.msra.mxu0 0.0
        %1889 = vmatprep.subr.mxu0 0.0
        %1890 = vmatpush2.msra.mxu0 0.0
        %1891 = vmatprep.subr.mxu0 0.0
        %1892 = vmatpush2.msra.mxu0 0.0
        %1893 = vmatprep.subr.mxu0 0.0
        %1894 = vmatpush2.msra.mxu0 0.0
        %1895 = vmatprep.mubr.f32.mxu0 0.0
        %1896 = vmatmul.mubr.f32.gmra.mxu0 %v1825
        %v1897 = vpop.f32.mrf.mxu0
        %v1898 = vadd.f32 0.0, %v1897
        %v1899 = vpop.f32.mrf.mxu0
        %1900 = vmatprep.mubr.f32.mxu0 0.0
        %1901 = vmatmul.mubr.f32.gmra.mxu0 %v1827
        %v1902 = vpop.f32.mrf.mxu0
        %v1903 = vadd.f32 0.0, %v1902
        %v1904 = vpop.f32.mrf.mxu0
        %1905 = vmatprep.mubr.f32.mxu0 0.0
        %1906 = vmatmul.mubr.f32.gmra.mxu0 %v1829
        %v1907 = vpop.f32.mrf.mxu0
        %v1908 = vadd.f32 0.0, %v1907
        %v1909 = vpop.f32.mrf.mxu0
        %1910 = vdwg.mxu0
        %v1914 = vcombine.high %v1898, %v1898
        %v1916 = vunpack.c.l.s4 1983009808
        %v1917 = vunpack.c.0.s8 %v1916
        %v1918 = vlaneseq
        %v1919 = vshrl.u32 %v1918, 7
        %v1920 = vsub.s32 %v1917, %v1919
        %v1921 = vrot.slane %v1898, %v1920
        %v1923 = vunpack.c.l.s4 1983009808
        %v1924 = vunpack.c.0.s8 %v1923
        %v1925 = vlaneseq
        %v1926 = vshrl.u32 %v1925, 7
        %v1927 = vsub.s32 %v1924, %v1926
        %v1928 = vrot.slane %v1914, %v1927
        %v1929 = vcombine.high %v1921, %v1921
        %v1930 = vcombine.high %v1928, %v1928
        %v1931 = vcombine.high %v1903, %v1903
        %v1933 = vunpack.c.l.s4 1983009808
        %v1934 = vunpack.c.0.s8 %v1933
        %v1935 = vlaneseq
        %v1936 = vshrl.u32 %v1935, 7
        %v1937 = vsub.s32 %v1934, %v1936
        %v1938 = vrot.slane %v1903, %v1937
        %v1940 = vunpack.c.l.s4 1983009808
        %v1941 = vunpack.c.0.s8 %v1940
        %v1942 = vlaneseq
        %v1943 = vshrl.u32 %v1942, 7
        %v1944 = vsub.s32 %v1941, %v1943
        %v1945 = vrot.slane %v1931, %v1944
        %v1946 = vcombine.high %v1938, %v1938
        %v1947 = vcombine.high %v1945, %v1945
        %v1948 = vcombine.high %v1908, %v1908
        %v1950 = vunpack.c.l.s4 1983009808
        %v1951 = vunpack.c.0.s8 %v1950
        %v1952 = vlaneseq
        %v1953 = vshrl.u32 %v1952, 7
        %v1954 = vsub.s32 %v1951, %v1953
        %v1955 = vrot.slane %v1908, %v1954
        %v1957 = vunpack.c.l.s4 1983009808
        %v1958 = vunpack.c.0.s8 %v1957
        %v1959 = vlaneseq
        %v1960 = vshrl.u32 %v1959, 7
        %v1961 = vsub.s32 %v1958, %v1960
        %v1962 = vrot.slane %v1948, %v1961
        %v1963 = vcombine.high %v1955, %v1955
        %v1964 = vcombine.high %v1962, %v1962
        %v1977 = vmul.f32 %v377, %v377
        %v1978 = vmul.f32 %v378, %v378
        %v1979 = vmul.f32 %v379, %v379
        %v1980 = vmul.f32 %v380, %v380
        %v1981 = vmul.f32 %v381, %v381
        %v1982 = vmul.f32 %v382, %v382
        %v1983 = vmul.f32 %v383, %v383
        %v1984 = vmul.f32 %v384, %v384
        %v1986 = vsel %vm296, %v1977, 0
        %v1989 = vsel %vm296, %v1978, 0
        %v1992 = vsel %vm296, %v1979, 0
        %v1995 = vsel %vm296, %v1980, 0
        %v1998 = vsel %vm296, %v1981, 0
        %v2001 = vsel %vm296, %v1982, 0
        %v2004 = vsel %vm296, %v1983, 0
        %v2007 = vsel %vm296, %v1984, 0
        %2009 = vmatprep.subr.mxu0 0.0
        %2010 = vmatpush1.msra.mxu0 0.0
        %2011 = vmatprep.subr.mxu0 0.0
        %2012 = vmatpush1.msra.mxu0 0.0
        %2013 = vmatprep.subr.mxu0 0.0
        %2014 = vmatpush1.msra.mxu0 0.0
        %2015 = vmatprep.subr.mxu0 0.0
        %2016 = vmatpush1.msra.mxu0 0.0
        %2017 = vmatprep.subr.mxu0 0.0
        %2018 = vmatpush1.msra.mxu0 0.0
        %2019 = vmatprep.subr.mxu0 0.0
        %2020 = vmatpush1.msra.mxu0 0.0
        %2021 = vmatprep.subr.mxu0 0.0
        %2022 = vmatpush1.msra.mxu0 0.0
        %2023 = vmatprep.subr.mxu0 0.0
        %2024 = vmatpush1.msra.mxu0 0.0
        %2025 = vmatprep.subr.mxu0 0.0
        %2026 = vmatpush1.msra.mxu0 0.0
        %2027 = vmatprep.subr.mxu0 0.0
        %2028 = vmatpush1.msra.mxu0 0.0
        %2029 = vmatprep.subr.mxu0 0.0
        %2030 = vmatpush1.msra.mxu0 0.0
        %2031 = vmatprep.subr.mxu0 0.0
        %2032 = vmatpush1.msra.mxu0 0.0
        %2033 = vmatprep.subr.mxu0 0.0
        %2034 = vmatpush1.msra.mxu0 0.0
        %2035 = vmatprep.subr.mxu0 0.0
        %2036 = vmatpush1.msra.mxu0 0.0
        %2037 = vmatprep.subr.mxu0 0.0
        %2038 = vmatpush1.msra.mxu0 %v277
        %2039 = vmatprep.subr.mxu0 0.0
        %2040 = vmatpush1.msra.mxu0 %v276
        %2041 = vmatprep.subr.mxu0 0.0
        %2042 = vmatpush2.msra.mxu0 0.0
        %2043 = vmatprep.subr.mxu0 0.0
        %2044 = vmatpush2.msra.mxu0 0.0
        %2045 = vmatprep.subr.mxu0 0.0
        %2046 = vmatpush2.msra.mxu0 0.0
        %2047 = vmatprep.subr.mxu0 0.0
        %2048 = vmatpush2.msra.mxu0 0.0
        %2049 = vmatprep.subr.mxu0 0.0
        %2050 = vmatpush2.msra.mxu0 0.0
        %2051 = vmatprep.subr.mxu0 0.0
        %2052 = vmatpush2.msra.mxu0 0.0
        %2053 = vmatprep.subr.mxu0 0.0
        %2054 = vmatpush2.msra.mxu0 0.0
        %2055 = vmatprep.subr.mxu0 0.0
        %2056 = vmatpush2.msra.mxu0 0.0
        %2057 = vmatprep.subr.mxu0 0.0
        %2058 = vmatpush2.msra.mxu0 0.0
        %2059 = vmatprep.subr.mxu0 0.0
        %2060 = vmatpush2.msra.mxu0 0.0
        %2061 = vmatprep.subr.mxu0 0.0
        %2062 = vmatpush2.msra.mxu0 0.0
        %2063 = vmatprep.subr.mxu0 0.0
        %2064 = vmatpush2.msra.mxu0 0.0
        %2065 = vmatprep.subr.mxu0 0.0
        %2066 = vmatpush2.msra.mxu0 0.0
        %2067 = vmatprep.subr.mxu0 0.0
        %2068 = vmatpush2.msra.mxu0 0.0
        %2069 = vmatprep.subr.mxu0 0.0
        %2070 = vmatpush2.msra.mxu0 0.0
        %2071 = vmatprep.subr.mxu0 0.0
        %2072 = vmatpush2.msra.mxu0 0.0
        %2073 = vmatprep.mubr.f32.mxu0 0.0
        %2074 = vmatmul.mubr.f32.gmra.mxu0 %v1986
        %v2075 = vpop.f32.mrf.mxu0
        %v2076 = vadd.f32 0.0, %v2075
        %v2077 = vpop.f32.mrf.mxu0
        %2078 = vmatprep.mubr.f32.mxu0 0.0
        %2079 = vmatmul.mubr.f32.gmra.mxu0 %v1989
        %v2080 = vpop.f32.mrf.mxu0
        %v2081 = vadd.f32 0.0, %v2080
        %v2082 = vpop.f32.mrf.mxu0
        %2083 = vmatprep.mubr.f32.mxu0 0.0
        %2084 = vmatmul.mubr.f32.gmra.mxu0 %v1992
        %v2085 = vpop.f32.mrf.mxu0
        %v2086 = vadd.f32 0.0, %v2085
        %v2087 = vpop.f32.mrf.mxu0
        %2088 = vmatprep.mubr.f32.mxu0 0.0
        %2089 = vmatmul.mubr.f32.gmra.mxu0 %v1995
        %v2090 = vpop.f32.mrf.mxu0
        %v2091 = vadd.f32 0.0, %v2090
        %v2092 = vpop.f32.mrf.mxu0
        %2093 = vmatprep.mubr.f32.mxu0 0.0
        %2094 = vmatmul.mubr.f32.gmra.mxu0 %v1998
        %v2095 = vpop.f32.mrf.mxu0
        %v2096 = vadd.f32 0.0, %v2095
        %v2097 = vpop.f32.mrf.mxu0
        %2098 = vmatprep.mubr.f32.mxu0 0.0
        %2099 = vmatmul.mubr.f32.gmra.mxu0 %v2001
        %v2100 = vpop.f32.mrf.mxu0
        %v2101 = vadd.f32 0.0, %v2100
        %v2102 = vpop.f32.mrf.mxu0
        %2103 = vmatprep.mubr.f32.mxu0 0.0
        %2104 = vmatmul.mubr.f32.gmra.mxu0 %v2004
        %v2105 = vpop.f32.mrf.mxu0
        %v2106 = vadd.f32 0.0, %v2105
        %v2107 = vpop.f32.mrf.mxu0
        %2108 = vmatprep.mubr.f32.mxu0 0.0
        %2109 = vmatmul.mubr.f32.gmra.mxu0 %v2007
        %v2110 = vpop.f32.mrf.mxu0
        %v2111 = vadd.f32 0.0, %v2110
        %v2112 = vpop.f32.mrf.mxu0
        %2113 = vdwg.mxu0
        %2114 = vxpose.xlu0.b32.start [1/16] %v2076, 128
        %2115 = vxpose.xlu0.b32.cont [2/16] %v2081, 128
        %2116 = vxpose.xlu0.b32.cont [3/16] 0.0, 128
        %2117 = vxpose.xlu0.b32.cont [4/16] 0.0, 128
        %2118 = vxpose.xlu0.b32.cont [5/16] 0.0, 128
        %2119 = vxpose.xlu0.b32.cont [6/16] 0.0, 128
        %2120 = vxpose.xlu0.b32.cont [7/16] 0.0, 128
        %2121 = vxpose.xlu0.b32.cont [8/16] 0.0, 128
        %2122 = vxpose.xlu0.b32.cont [9/16] 0.0, 128
        %2123 = vxpose.xlu0.b32.cont [10/16] 0.0, 128
        %2124 = vxpose.xlu0.b32.cont [11/16] 0.0, 128
        %2125 = vxpose.xlu0.b32.cont [12/16] 0.0, 128
        %2126 = vxpose.xlu0.b32.cont [13/16] 0.0, 128
        %2127 = vxpose.xlu0.b32.cont [14/16] 0.0, 128
        %2128 = vxpose.xlu0.b32.cont [15/16] 0.0, 128
        %2129 = vxpose.xlu0.b32.end [16/16] 0.0, 128
        %v2130 = vpop.trf.xlu0
        %v2131 = vpop.trf.xlu0
        %v2132 = vpop.trf.xlu0
        %v2133 = vpop.trf.xlu0
        %v2134 = vpop.trf.xlu0
        %v2135 = vpop.trf.xlu0
        %v2136 = vpop.trf.xlu0
        %v2137 = vpop.trf.xlu0
        %v2138 = vpop.trf.xlu0
        %v2139 = vpop.trf.xlu0
        %v2140 = vpop.trf.xlu0
        %v2141 = vpop.trf.xlu0
        %v2142 = vpop.trf.xlu0
        %v2143 = vpop.trf.xlu0
        %v2144 = vpop.trf.xlu0
        %v2145 = vpop.trf.xlu0
        %2146 = vxpose.xlu0.b32.start [1/16] %v2086, 128
        %2147 = vxpose.xlu0.b32.cont [2/16] %v2091, 128
        %2148 = vxpose.xlu0.b32.cont [3/16] 0.0, 128
        %2149 = vxpose.xlu0.b32.cont [4/16] 0.0, 128
        %2150 = vxpose.xlu0.b32.cont [5/16] 0.0, 128
        %2151 = vxpose.xlu0.b32.cont [6/16] 0.0, 128
        %2152 = vxpose.xlu0.b32.cont [7/16] 0.0, 128
        %2153 = vxpose.xlu0.b32.cont [8/16] 0.0, 128
        %2154 = vxpose.xlu0.b32.cont [9/16] 0.0, 128
        %2155 = vxpose.xlu0.b32.cont [10/16] 0.0, 128
        %2156 = vxpose.xlu0.b32.cont [11/16] 0.0, 128
        %2157 = vxpose.xlu0.b32.cont [12/16] 0.0, 128
        %2158 = vxpose.xlu0.b32.cont [13/16] 0.0, 128
        %2159 = vxpose.xlu0.b32.cont [14/16] 0.0, 128
        %2160 = vxpose.xlu0.b32.cont [15/16] 0.0, 128
        %2161 = vxpose.xlu0.b32.end [16/16] 0.0, 128
        %v2162 = vpop.trf.xlu0
        %v2163 = vpop.trf.xlu0
        %v2164 = vpop.trf.xlu0
        %v2165 = vpop.trf.xlu0
        %v2166 = vpop.trf.xlu0
        %v2167 = vpop.trf.xlu0
        %v2168 = vpop.trf.xlu0
        %v2169 = vpop.trf.xlu0
        %v2170 = vpop.trf.xlu0
        %v2171 = vpop.trf.xlu0
        %v2172 = vpop.trf.xlu0
        %v2173 = vpop.trf.xlu0
        %v2174 = vpop.trf.xlu0
        %v2175 = vpop.trf.xlu0
        %v2176 = vpop.trf.xlu0
        %v2177 = vpop.trf.xlu0
        %2178 = vxpose.xlu0.b32.start [1/16] %v2096, 128
        %2179 = vxpose.xlu0.b32.cont [2/16] %v2101, 128
        %2180 = vxpose.xlu0.b32.cont [3/16] 0.0, 128
        %2181 = vxpose.xlu0.b32.cont [4/16] 0.0, 128
        %2182 = vxpose.xlu0.b32.cont [5/16] 0.0, 128
        %2183 = vxpose.xlu0.b32.cont [6/16] 0.0, 128
        %2184 = vxpose.xlu0.b32.cont [7/16] 0.0, 128
        %2185 = vxpose.xlu0.b32.cont [8/16] 0.0, 128
        %2186 = vxpose.xlu0.b32.cont [9/16] 0.0, 128
        %2187 = vxpose.xlu0.b32.cont [10/16] 0.0, 128
        %2188 = vxpose.xlu0.b32.cont [11/16] 0.0, 128
        %2189 = vxpose.xlu0.b32.cont [12/16] 0.0, 128
        %2190 = vxpose.xlu0.b32.cont [13/16] 0.0, 128
        %2191 = vxpose.xlu0.b32.cont [14/16] 0.0, 128
        %2192 = vxpose.xlu0.b32.cont [15/16] 0.0, 128
        %2193 = vxpose.xlu0.b32.end [16/16] 0.0, 128
        %v2194 = vpop.trf.xlu0
        %v2195 = vpop.trf.xlu0
        %v2196 = vpop.trf.xlu0
        %v2197 = vpop.trf.xlu0
        %v2198 = vpop.trf.xlu0
        %v2199 = vpop.trf.xlu0
        %v2200 = vpop.trf.xlu0
        %v2201 = vpop.trf.xlu0
        %v2202 = vpop.trf.xlu0
        %v2203 = vpop.trf.xlu0
        %v2204 = vpop.trf.xlu0
        %v2205 = vpop.trf.xlu0
        %v2206 = vpop.trf.xlu0
        %v2207 = vpop.trf.xlu0
        %v2208 = vpop.trf.xlu0
        %v2209 = vpop.trf.xlu0
        %2210 = vxpose.xlu0.b32.start [1/16] %v2106, 128
        %2211 = vxpose.xlu0.b32.cont [2/16] %v2111, 128
        %2212 = vxpose.xlu0.b32.cont [3/16] 0.0, 128
        %2213 = vxpose.xlu0.b32.cont [4/16] 0.0, 128
        %2214 = vxpose.xlu0.b32.cont [5/16] 0.0, 128
        %2215 = vxpose.xlu0.b32.cont [6/16] 0.0, 128
        %2216 = vxpose.xlu0.b32.cont [7/16] 0.0, 128
        %2217 = vxpose.xlu0.b32.cont [8/16] 0.0, 128
        %2218 = vxpose.xlu0.b32.cont [9/16] 0.0, 128
        %2219 = vxpose.xlu0.b32.cont [10/16] 0.0, 128
        %2220 = vxpose.xlu0.b32.cont [11/16] 0.0, 128
        %2221 = vxpose.xlu0.b32.cont [12/16] 0.0, 128
        %2222 = vxpose.xlu0.b32.cont [13/16] 0.0, 128
        %2223 = vxpose.xlu0.b32.cont [14/16] 0.0, 128
        %2224 = vxpose.xlu0.b32.cont [15/16] 0.0, 128
        %2225 = vxpose.xlu0.b32.end [16/16] 0.0, 128
        %v2226 = vpop.trf.xlu0
        %v2227 = vpop.trf.xlu0
        %v2228 = vpop.trf.xlu0
        %v2229 = vpop.trf.xlu0
        %v2230 = vpop.trf.xlu0
        %v2231 = vpop.trf.xlu0
        %v2232 = vpop.trf.xlu0
        %v2233 = vpop.trf.xlu0
        %v2234 = vpop.trf.xlu0
        %v2235 = vpop.trf.xlu0
        %v2236 = vpop.trf.xlu0
        %v2237 = vpop.trf.xlu0
        %v2238 = vpop.trf.xlu0
        %v2239 = vpop.trf.xlu0
        %v2240 = vpop.trf.xlu0
        %v2241 = vpop.trf.xlu0
        %v2246 = vcombine.high %v2130, %v2130
        %v2248 = vunpack.c.l.s4 1983009808
        %v2249 = vunpack.c.0.s8 %v2248
        %v2250 = vlaneseq
        %v2251 = vshrl.u32 %v2250, 7
        %v2252 = vsub.s32 %v2249, %v2251
        %v2253 = vrot.slane %v2130, %v2252
        %v2255 = vunpack.c.l.s4 1983009808
        %v2256 = vunpack.c.0.s8 %v2255
        %v2257 = vlaneseq
        %v2258 = vshrl.u32 %v2257, 7
        %v2259 = vsub.s32 %v2256, %v2258
        %v2260 = vrot.slane %v2246, %v2259
        %v2261 = vcombine.high %v2253, %v2253
        %v2262 = vcombine.high %v2162, %v2162
        %v2264 = vunpack.c.l.s4 1983009808
        %v2265 = vunpack.c.0.s8 %v2264
        %v2266 = vlaneseq
        %v2267 = vshrl.u32 %v2266, 7
        %v2268 = vsub.s32 %v2265, %v2267
        %v2269 = vrot.slane %v2162, %v2268
        %v2271 = vunpack.c.l.s4 1983009808
        %v2272 = vunpack.c.0.s8 %v2271
        %v2273 = vlaneseq
        %v2274 = vshrl.u32 %v2273, 7
        %v2275 = vsub.s32 %v2272, %v2274
        %v2276 = vrot.slane %v2262, %v2275
        %v2277 = vcombine.high %v2269, %v2269
        %v2278 = vcombine.high %v2194, %v2194
        %v2280 = vunpack.c.l.s4 1983009808
        %v2281 = vunpack.c.0.s8 %v2280
        %v2282 = vlaneseq
        %v2283 = vshrl.u32 %v2282, 7
        %v2284 = vsub.s32 %v2281, %v2283
        %v2285 = vrot.slane %v2194, %v2284
        %v2287 = vunpack.c.l.s4 1983009808
        %v2288 = vunpack.c.0.s8 %v2287
        %v2289 = vlaneseq
        %v2290 = vshrl.u32 %v2289, 7
        %v2291 = vsub.s32 %v2288, %v2290
        %v2292 = vrot.slane %v2278, %v2291
        %v2293 = vcombine.high %v2285, %v2285
        %v2294 = vcombine.high %v2226, %v2226
        %v2296 = vunpack.c.l.s4 1983009808
        %v2297 = vunpack.c.0.s8 %v2296
        %v2298 = vlaneseq
        %v2299 = vshrl.u32 %v2298, 7
        %v2300 = vsub.s32 %v2297, %v2299
        %v2301 = vrot.slane %v2226, %v2300
        %v2303 = vunpack.c.l.s4 1983009808
        %v2304 = vunpack.c.0.s8 %v2303
        %v2305 = vlaneseq
        %v2306 = vshrl.u32 %v2305, 7
        %v2307 = vsub.s32 %v2304, %v2306
        %v2308 = vrot.slane %v2294, %v2307
        %v2309 = vcombine.high %v2301, %v2301
        %v2310 = vcombine.low %v2253, %v2261
        %v2311 = vcombine.low %v2260, %v2269
        %v2313 = vunpack.c.l.s4 1983009808
        %v2314 = vunpack.c.0.s8 %v2313
        %v2315 = vlaneseq
        %v2316 = vshrl.u32 %v2315, 7
        %v2317 = vsub.s32 %v2314, %v2316
        %v2318 = vrot.slane %v2310, %v2317
        %v2320 = vunpack.c.l.s4 1983009808
        %v2321 = vunpack.c.0.s8 %v2320
        %v2322 = vlaneseq
        %v2323 = vshrl.u32 %v2322, 7
        %v2324 = vsub.s32 %v2321, %v2323
        %v2325 = vrot.slane %v2311, %v2324
        %v2326 = vcombine.low %v2318, %v2325
        %v2327 = vcombine.low %v2277, %v2276
        %v2328 = vcombine.low %v2285, %v2293
        %v2330 = vunpack.c.l.s4 1983009808
        %v2331 = vunpack.c.0.s8 %v2330
        %v2332 = vlaneseq
        %v2333 = vshrl.u32 %v2332, 7
        %v2334 = vsub.s32 %v2331, %v2333
        %v2335 = vrot.slane %v2327, %v2334
        %v2337 = vunpack.c.l.s4 1983009808
        %v2338 = vunpack.c.0.s8 %v2337
        %v2339 = vlaneseq
        %v2340 = vshrl.u32 %v2339, 7
        %v2341 = vsub.s32 %v2338, %v2340
        %v2342 = vrot.slane %v2328, %v2341
        %v2343 = vcombine.low %v2335, %v2342
        %v2344 = vcombine.low %v2292, %v2301
        %v2345 = vcombine.low %v2309, %v2308
        %v2347 = vunpack.c.l.s4 1983009808
        %v2348 = vunpack.c.0.s8 %v2347
        %v2349 = vlaneseq
        %v2350 = vshrl.u32 %v2349, 7
        %v2351 = vsub.s32 %v2348, %v2350
        %v2352 = vrot.slane %v2344, %v2351
        %v2354 = vunpack.c.l.s4 1983009808
        %v2355 = vunpack.c.0.s8 %v2354
        %v2356 = vlaneseq
        %v2357 = vshrl.u32 %v2356, 7
        %v2358 = vsub.s32 %v2355, %v2357
        %v2359 = vrot.slane %v2345, %v2358
        %v2360 = vcombine.low %v2352, %v2359
        %v2361 = vsel %vm296, %v2326, 0
        %v2363 = vsel %vm296, %v2343, 0
        %v2365 = vsel %vm296, %v2360, 0
        %2367 = vmatprep.subr.mxu0 0.0
        %2368 = vmatpush1.msra.mxu0 0.0
        %2369 = vmatprep.subr.mxu0 0.0
        %2370 = vmatpush1.msra.mxu0 0.0
        %2371 = vmatprep.subr.mxu0 0.0
        %2372 = vmatpush1.msra.mxu0 0.0
        %2373 = vmatprep.subr.mxu0 0.0
        %2374 = vmatpush1.msra.mxu0 0.0
        %2375 = vmatprep.subr.mxu0 0.0
        %2376 = vmatpush1.msra.mxu0 0.0
        %2377 = vmatprep.subr.mxu0 0.0
        %2378 = vmatpush1.msra.mxu0 0.0
        %2379 = vmatprep.subr.mxu0 0.0
        %2380 = vmatpush1.msra.mxu0 0.0
        %2381 = vmatprep.subr.mxu0 0.0
        %2382 = vmatpush1.msra.mxu0 0.0
        %2383 = vmatprep.subr.mxu0 0.0
        %2384 = vmatpush1.msra.mxu0 0.0
        %2385 = vmatprep.subr.mxu0 0.0
        %2386 = vmatpush1.msra.mxu0 0.0
        %2387 = vmatprep.subr.mxu0 0.0
        %2388 = vmatpush1.msra.mxu0 0.0
        %2389 = vmatprep.subr.mxu0 0.0
        %2390 = vmatpush1.msra.mxu0 0.0
        %2391 = vmatprep.subr.mxu0 0.0
        %2392 = vmatpush1.msra.mxu0 0.0
        %2393 = vmatprep.subr.mxu0 0.0
        %2394 = vmatpush1.msra.mxu0 0.0
        %2395 = vmatprep.subr.mxu0 0.0
        %2396 = vmatpush1.msra.mxu0 %v279
        %2397 = vmatprep.subr.mxu0 0.0
        %2398 = vmatpush1.msra.mxu0 %v278
        %2399 = vmatprep.subr.mxu0 0.0
        %2400 = vmatpush2.msra.mxu0 0.0
        %2401 = vmatprep.subr.mxu0 0.0
        %2402 = vmatpush2.msra.mxu0 0.0
        %2403 = vmatprep.subr.mxu0 0.0
        %2404 = vmatpush2.msra.mxu0 0.0
        %2405 = vmatprep.subr.mxu0 0.0
        %2406 = vmatpush2.msra.mxu0 0.0
        %2407 = vmatprep.subr.mxu0 0.0
        %2408 = vmatpush2.msra.mxu0 0.0
        %2409 = vmatprep.subr.mxu0 0.0
        %2410 = vmatpush2.msra.mxu0 0.0
        %2411 = vmatprep.subr.mxu0 0.0
        %2412 = vmatpush2.msra.mxu0 0.0
        %2413 = vmatprep.subr.mxu0 0.0
        %2414 = vmatpush2.msra.mxu0 0.0
        %2415 = vmatprep.subr.mxu0 0.0
        %2416 = vmatpush2.msra.mxu0 0.0
        %2417 = vmatprep.subr.mxu0 0.0
        %2418 = vmatpush2.msra.mxu0 0.0
        %2419 = vmatprep.subr.mxu0 0.0
        %2420 = vmatpush2.msra.mxu0 0.0
        %2421 = vmatprep.subr.mxu0 0.0
        %2422 = vmatpush2.msra.mxu0 0.0
        %2423 = vmatprep.subr.mxu0 0.0
        %2424 = vmatpush2.msra.mxu0 0.0
        %2425 = vmatprep.subr.mxu0 0.0
        %2426 = vmatpush2.msra.mxu0 0.0
        %2427 = vmatprep.subr.mxu0 0.0
        %2428 = vmatpush2.msra.mxu0 0.0
        %2429 = vmatprep.subr.mxu0 0.0
        %2430 = vmatpush2.msra.mxu0 0.0
        %2431 = vmatprep.mubr.f32.mxu0 0.0
        %2432 = vmatmul.mubr.f32.gmra.mxu0 %v2361
        %v2433 = vpop.f32.mrf.mxu0
        %v2434 = vadd.f32 0.0, %v2433
        %v2435 = vpop.f32.mrf.mxu0
        %2436 = vmatprep.mubr.f32.mxu0 0.0
        %2437 = vmatmul.mubr.f32.gmra.mxu0 %v2363
        %v2438 = vpop.f32.mrf.mxu0
        %v2439 = vadd.f32 0.0, %v2438
        %v2440 = vpop.f32.mrf.mxu0
        %2441 = vmatprep.mubr.f32.mxu0 0.0
        %2442 = vmatmul.mubr.f32.gmra.mxu0 %v2365
        %v2443 = vpop.f32.mrf.mxu0
        %v2444 = vadd.f32 0.0, %v2443
        %v2445 = vpop.f32.mrf.mxu0
        %2446 = vdwg.mxu0
        %v2450 = vcombine.high %v2434, %v2434
        %v2452 = vunpack.c.l.s4 1983009808
        %v2453 = vunpack.c.0.s8 %v2452
        %v2454 = vlaneseq
        %v2455 = vshrl.u32 %v2454, 7
        %v2456 = vsub.s32 %v2453, %v2455
        %v2457 = vrot.slane %v2434, %v2456
        %v2459 = vunpack.c.l.s4 1983009808
        %v2460 = vunpack.c.0.s8 %v2459
        %v2461 = vlaneseq
        %v2462 = vshrl.u32 %v2461, 7
        %v2463 = vsub.s32 %v2460, %v2462
        %v2464 = vrot.slane %v2450, %v2463
        %v2465 = vcombine.high %v2457, %v2457
        %v2466 = vcombine.high %v2464, %v2464
        %v2467 = vcombine.high %v2439, %v2439
        %v2469 = vunpack.c.l.s4 1983009808
        %v2470 = vunpack.c.0.s8 %v2469
        %v2471 = vlaneseq
        %v2472 = vshrl.u32 %v2471, 7
        %v2473 = vsub.s32 %v2470, %v2472
        %v2474 = vrot.slane %v2439, %v2473
        %v2476 = vunpack.c.l.s4 1983009808
        %v2477 = vunpack.c.0.s8 %v2476
        %v2478 = vlaneseq
        %v2479 = vshrl.u32 %v2478, 7
        %v2480 = vsub.s32 %v2477, %v2479
        %v2481 = vrot.slane %v2467, %v2480
        %v2482 = vcombine.high %v2474, %v2474
        %v2483 = vcombine.high %v2481, %v2481
        %v2484 = vcombine.high %v2444, %v2444
        %v2486 = vunpack.c.l.s4 1983009808
        %v2487 = vunpack.c.0.s8 %v2486
        %v2488 = vlaneseq
        %v2489 = vshrl.u32 %v2488, 7
        %v2490 = vsub.s32 %v2487, %v2489
        %v2491 = vrot.slane %v2444, %v2490
        %v2493 = vunpack.c.l.s4 1983009808
        %v2494 = vunpack.c.0.s8 %v2493
        %v2495 = vlaneseq
        %v2496 = vshrl.u32 %v2495, 7
        %v2497 = vsub.s32 %v2494, %v2496
        %v2498 = vrot.slane %v2484, %v2497
        %v2499 = vcombine.high %v2491, %v2491
        %v2500 = vcombine.high %v2498, %v2498
        %v2513 = vmul.f32 %v361, %v377
        %v2514 = vmul.f32 %v362, %v378
        %v2515 = vmul.f32 %v363, %v379
        %v2516 = vmul.f32 %v364, %v380
        %v2517 = vmul.f32 %v365, %v381
        %v2518 = vmul.f32 %v366, %v382
        %v2519 = vmul.f32 %v367, %v383
        %v2520 = vmul.f32 %v368, %v384
        %v2522 = vsel %vm296, %v2513, 0
        %v2525 = vsel %vm296, %v2514, 0
        %v2528 = vsel %vm296, %v2515, 0
        %v2531 = vsel %vm296, %v2516, 0
        %v2534 = vsel %vm296, %v2517, 0
        %v2537 = vsel %vm296, %v2518, 0
        %v2540 = vsel %vm296, %v2519, 0
        %v2543 = vsel %vm296, %v2520, 0
        %2545 = vmatprep.subr.mxu0 0.0
        %2546 = vmatpush1.msra.mxu0 0.0
        %2547 = vmatprep.subr.mxu0 0.0
        %2548 = vmatpush1.msra.mxu0 0.0
        %2549 = vmatprep.subr.mxu0 0.0
        %2550 = vmatpush1.msra.mxu0 0.0
        %2551 = vmatprep.subr.mxu0 0.0
        %2552 = vmatpush1.msra.mxu0 0.0
        %2553 = vmatprep.subr.mxu0 0.0
        %2554 = vmatpush1.msra.mxu0 0.0
        %2555 = vmatprep.subr.mxu0 0.0
        %2556 = vmatpush1.msra.mxu0 0.0
        %2557 = vmatprep.subr.mxu0 0.0
        %2558 = vmatpush1.msra.mxu0 0.0
        %2559 = vmatprep.subr.mxu0 0.0
        %2560 = vmatpush1.msra.mxu0 0.0
        %2561 = vmatprep.subr.mxu0 0.0
        %2562 = vmatpush1.msra.mxu0 0.0
        %2563 = vmatprep.subr.mxu0 0.0
        %2564 = vmatpush1.msra.mxu0 0.0
        %2565 = vmatprep.subr.mxu0 0.0
        %2566 = vmatpush1.msra.mxu0 0.0
        %2567 = vmatprep.subr.mxu0 0.0
        %2568 = vmatpush1.msra.mxu0 0.0
        %2569 = vmatprep.subr.mxu0 0.0
        %2570 = vmatpush1.msra.mxu0 0.0
        %2571 = vmatprep.subr.mxu0 0.0
        %2572 = vmatpush1.msra.mxu0 0.0
        %2573 = vmatprep.subr.mxu0 0.0
        %2574 = vmatpush1.msra.mxu0 %v277
        %2575 = vmatprep.subr.mxu0 0.0
        %2576 = vmatpush1.msra.mxu0 %v276
        %2577 = vmatprep.subr.mxu0 0.0
        %2578 = vmatpush2.msra.mxu0 0.0
        %2579 = vmatprep.subr.mxu0 0.0
        %2580 = vmatpush2.msra.mxu0 0.0
        %2581 = vmatprep.subr.mxu0 0.0
        %2582 = vmatpush2.msra.mxu0 0.0
        %2583 = vmatprep.subr.mxu0 0.0
        %2584 = vmatpush2.msra.mxu0 0.0
        %2585 = vmatprep.subr.mxu0 0.0
        %2586 = vmatpush2.msra.mxu0 0.0
        %2587 = vmatprep.subr.mxu0 0.0
        %2588 = vmatpush2.msra.mxu0 0.0
        %2589 = vmatprep.subr.mxu0 0.0
        %2590 = vmatpush2.msra.mxu0 0.0
        %2591 = vmatprep.subr.mxu0 0.0
        %2592 = vmatpush2.msra.mxu0 0.0
        %2593 = vmatprep.subr.mxu0 0.0
        %2594 = vmatpush2.msra.mxu0 0.0
        %2595 = vmatprep.subr.mxu0 0.0
        %2596 = vmatpush2.msra.mxu0 0.0
        %2597 = vmatprep.subr.mxu0 0.0
        %2598 = vmatpush2.msra.mxu0 0.0
        %2599 = vmatprep.subr.mxu0 0.0
        %2600 = vmatpush2.msra.mxu0 0.0
        %2601 = vmatprep.subr.mxu0 0.0
        %2602 = vmatpush2.msra.mxu0 0.0
        %2603 = vmatprep.subr.mxu0 0.0
        %2604 = vmatpush2.msra.mxu0 0.0
        %2605 = vmatprep.subr.mxu0 0.0
        %2606 = vmatpush2.msra.mxu0 0.0
        %2607 = vmatprep.subr.mxu0 0.0
        %2608 = vmatpush2.msra.mxu0 0.0
        %2609 = vmatprep.mubr.f32.mxu0 0.0
        %2610 = vmatmul.mubr.f32.gmra.mxu0 %v2522
        %v2611 = vpop.f32.mrf.mxu0
        %v2612 = vadd.f32 0.0, %v2611
        %v2613 = vpop.f32.mrf.mxu0
        %2614 = vmatprep.mubr.f32.mxu0 0.0
        %2615 = vmatmul.mubr.f32.gmra.mxu0 %v2525
        %v2616 = vpop.f32.mrf.mxu0
        %v2617 = vadd.f32 0.0, %v2616
        %v2618 = vpop.f32.mrf.mxu0
        %2619 = vmatprep.mubr.f32.mxu0 0.0
        %2620 = vmatmul.mubr.f32.gmra.mxu0 %v2528
        %v2621 = vpop.f32.mrf.mxu0
        %v2622 = vadd.f32 0.0, %v2621
        %v2623 = vpop.f32.mrf.mxu0
        %2624 = vmatprep.mubr.f32.mxu0 0.0
        %2625 = vmatmul.mubr.f32.gmra.mxu0 %v2531
        %v2626 = vpop.f32.mrf.mxu0
        %v2627 = vadd.f32 0.0, %v2626
        %v2628 = vpop.f32.mrf.mxu0
        %2629 = vmatprep.mubr.f32.mxu0 0.0
        %2630 = vmatmul.mubr.f32.gmra.mxu0 %v2534
        %v2631 = vpop.f32.mrf.mxu0
        %v2632 = vadd.f32 0.0, %v2631
        %v2633 = vpop.f32.mrf.mxu0
        %2634 = vmatprep.mubr.f32.mxu0 0.0
        %2635 = vmatmul.mubr.f32.gmra.mxu0 %v2537
        %v2636 = vpop.f32.mrf.mxu0
        %v2637 = vadd.f32 0.0, %v2636
        %v2638 = vpop.f32.mrf.mxu0
        %2639 = vmatprep.mubr.f32.mxu0 0.0
        %2640 = vmatmul.mubr.f32.gmra.mxu0 %v2540
        %v2641 = vpop.f32.mrf.mxu0
        %v2642 = vadd.f32 0.0, %v2641
        %v2643 = vpop.f32.mrf.mxu0
        %2644 = vmatprep.mubr.f32.mxu0 0.0
        %2645 = vmatmul.mubr.f32.gmra.mxu0 %v2543
        %v2646 = vpop.f32.mrf.mxu0
        %v2647 = vadd.f32 0.0, %v2646
        %v2648 = vpop.f32.mrf.mxu0
        %2649 = vdwg.mxu0
        %2650 = vxpose.xlu0.b32.start [1/16] %v2612, 128
        %2651 = vxpose.xlu0.b32.cont [2/16] %v2617, 128
        %2652 = vxpose.xlu0.b32.cont [3/16] 0.0, 128
        %2653 = vxpose.xlu0.b32.cont [4/16] 0.0, 128
        %2654 = vxpose.xlu0.b32.cont [5/16] 0.0, 128
        %2655 = vxpose.xlu0.b32.cont [6/16] 0.0, 128
        %2656 = vxpose.xlu0.b32.cont [7/16] 0.0, 128
        %2657 = vxpose.xlu0.b32.cont [8/16] 0.0, 128
        %2658 = vxpose.xlu0.b32.cont [9/16] 0.0, 128
        %2659 = vxpose.xlu0.b32.cont [10/16] 0.0, 128
        %2660 = vxpose.xlu0.b32.cont [11/16] 0.0, 128
        %2661 = vxpose.xlu0.b32.cont [12/16] 0.0, 128
        %2662 = vxpose.xlu0.b32.cont [13/16] 0.0, 128
        %2663 = vxpose.xlu0.b32.cont [14/16] 0.0, 128
        %2664 = vxpose.xlu0.b32.cont [15/16] 0.0, 128
        %2665 = vxpose.xlu0.b32.end [16/16] 0.0, 128
        %v2666 = vpop.trf.xlu0
        %v2667 = vpop.trf.xlu0
        %v2668 = vpop.trf.xlu0
        %v2669 = vpop.trf.xlu0
        %v2670 = vpop.trf.xlu0
        %v2671 = vpop.trf.xlu0
        %v2672 = vpop.trf.xlu0
        %v2673 = vpop.trf.xlu0
        %v2674 = vpop.trf.xlu0
        %v2675 = vpop.trf.xlu0
        %v2676 = vpop.trf.xlu0
        %v2677 = vpop.trf.xlu0
        %v2678 = vpop.trf.xlu0
        %v2679 = vpop.trf.xlu0
        %v2680 = vpop.trf.xlu0
        %v2681 = vpop.trf.xlu0
        %2682 = vxpose.xlu0.b32.start [1/16] %v2622, 128
        %2683 = vxpose.xlu0.b32.cont [2/16] %v2627, 128
        %2684 = vxpose.xlu0.b32.cont [3/16] 0.0, 128
        %2685 = vxpose.xlu0.b32.cont [4/16] 0.0, 128
        %2686 = vxpose.xlu0.b32.cont [5/16] 0.0, 128
        %2687 = vxpose.xlu0.b32.cont [6/16] 0.0, 128
        %2688 = vxpose.xlu0.b32.cont [7/16] 0.0, 128
        %2689 = vxpose.xlu0.b32.cont [8/16] 0.0, 128
        %2690 = vxpose.xlu0.b32.cont [9/16] 0.0, 128
        %2691 = vxpose.xlu0.b32.cont [10/16] 0.0, 128
        %2692 = vxpose.xlu0.b32.cont [11/16] 0.0, 128
        %2693 = vxpose.xlu0.b32.cont [12/16] 0.0, 128
        %2694 = vxpose.xlu0.b32.cont [13/16] 0.0, 128
        %2695 = vxpose.xlu0.b32.cont [14/16] 0.0, 128
        %2696 = vxpose.xlu0.b32.cont [15/16] 0.0, 128
        %2697 = vxpose.xlu0.b32.end [16/16] 0.0, 128
        %v2698 = vpop.trf.xlu0
        %v2699 = vpop.trf.xlu0
        %v2700 = vpop.trf.xlu0
        %v2701 = vpop.trf.xlu0
        %v2702 = vpop.trf.xlu0
        %v2703 = vpop.trf.xlu0
        %v2704 = vpop.trf.xlu0
        %v2705 = vpop.trf.xlu0
        %v2706 = vpop.trf.xlu0
        %v2707 = vpop.trf.xlu0
        %v2708 = vpop.trf.xlu0
        %v2709 = vpop.trf.xlu0
        %v2710 = vpop.trf.xlu0
        %v2711 = vpop.trf.xlu0
        %v2712 = vpop.trf.xlu0
        %v2713 = vpop.trf.xlu0
        %2714 = vxpose.xlu0.b32.start [1/16] %v2632, 128
        %2715 = vxpose.xlu0.b32.cont [2/16] %v2637, 128
        %2716 = vxpose.xlu0.b32.cont [3/16] 0.0, 128
        %2717 = vxpose.xlu0.b32.cont [4/16] 0.0, 128
        %2718 = vxpose.xlu0.b32.cont [5/16] 0.0, 128
        %2719 = vxpose.xlu0.b32.cont [6/16] 0.0, 128
        %2720 = vxpose.xlu0.b32.cont [7/16] 0.0, 128
        %2721 = vxpose.xlu0.b32.cont [8/16] 0.0, 128
        %2722 = vxpose.xlu0.b32.cont [9/16] 0.0, 128
        %2723 = vxpose.xlu0.b32.cont [10/16] 0.0, 128
        %2724 = vxpose.xlu0.b32.cont [11/16] 0.0, 128
        %2725 = vxpose.xlu0.b32.cont [12/16] 0.0, 128
        %2726 = vxpose.xlu0.b32.cont [13/16] 0.0, 128
        %2727 = vxpose.xlu0.b32.cont [14/16] 0.0, 128
        %2728 = vxpose.xlu0.b32.cont [15/16] 0.0, 128
        %2729 = vxpose.xlu0.b32.end [16/16] 0.0, 128
        %v2730 = vpop.trf.xlu0
        %v2731 = vpop.trf.xlu0
        %v2732 = vpop.trf.xlu0
        %v2733 = vpop.trf.xlu0
        %v2734 = vpop.trf.xlu0
        %v2735 = vpop.trf.xlu0
        %v2736 = vpop.trf.xlu0
        %v2737 = vpop.trf.xlu0
        %v2738 = vpop.trf.xlu0
        %v2739 = vpop.trf.xlu0
        %v2740 = vpop.trf.xlu0
        %v2741 = vpop.trf.xlu0
        %v2742 = vpop.trf.xlu0
        %v2743 = vpop.trf.xlu0
        %v2744 = vpop.trf.xlu0
        %v2745 = vpop.trf.xlu0
        %2746 = vxpose.xlu0.b32.start [1/16] %v2642, 128
        %2747 = vxpose.xlu0.b32.cont [2/16] %v2647, 128
        %2748 = vxpose.xlu0.b32.cont [3/16] 0.0, 128
        %2749 = vxpose.xlu0.b32.cont [4/16] 0.0, 128
        %2750 = vxpose.xlu0.b32.cont [5/16] 0.0, 128
        %2751 = vxpose.xlu0.b32.cont [6/16] 0.0, 128
        %2752 = vxpose.xlu0.b32.cont [7/16] 0.0, 128
        %2753 = vxpose.xlu0.b32.cont [8/16] 0.0, 128
        %2754 = vxpose.xlu0.b32.cont [9/16] 0.0, 128
        %2755 = vxpose.xlu0.b32.cont [10/16] 0.0, 128
        %2756 = vxpose.xlu0.b32.cont [11/16] 0.0, 128
        %2757 = vxpose.xlu0.b32.cont [12/16] 0.0, 128
        %2758 = vxpose.xlu0.b32.cont [13/16] 0.0, 128
        %2759 = vxpose.xlu0.b32.cont [14/16] 0.0, 128
        %2760 = vxpose.xlu0.b32.cont [15/16] 0.0, 128
        %2761 = vxpose.xlu0.b32.end [16/16] 0.0, 128
        %v2762 = vpop.trf.xlu0
        %v2763 = vpop.trf.xlu0
        %v2764 = vpop.trf.xlu0
        %v2765 = vpop.trf.xlu0
        %v2766 = vpop.trf.xlu0
        %v2767 = vpop.trf.xlu0
        %v2768 = vpop.trf.xlu0
        %v2769 = vpop.trf.xlu0
        %v2770 = vpop.trf.xlu0
        %v2771 = vpop.trf.xlu0
        %v2772 = vpop.trf.xlu0
        %v2773 = vpop.trf.xlu0
        %v2774 = vpop.trf.xlu0
        %v2775 = vpop.trf.xlu0
        %v2776 = vpop.trf.xlu0
        %v2777 = vpop.trf.xlu0
        %v2782 = vcombine.high %v2666, %v2666
        %v2784 = vunpack.c.l.s4 1983009808
        %v2785 = vunpack.c.0.s8 %v2784
        %v2786 = vlaneseq
        %v2787 = vshrl.u32 %v2786, 7
        %v2788 = vsub.s32 %v2785, %v2787
        %v2789 = vrot.slane %v2666, %v2788
        %v2791 = vunpack.c.l.s4 1983009808
        %v2792 = vunpack.c.0.s8 %v2791
        %v2793 = vlaneseq
        %v2794 = vshrl.u32 %v2793, 7
        %v2795 = vsub.s32 %v2792, %v2794
        %v2796 = vrot.slane %v2782, %v2795
        %v2797 = vcombine.high %v2789, %v2789
        %v2798 = vcombine.high %v2698, %v2698
        %v2800 = vunpack.c.l.s4 1983009808
        %v2801 = vunpack.c.0.s8 %v2800
        %v2802 = vlaneseq
        %v2803 = vshrl.u32 %v2802, 7
        %v2804 = vsub.s32 %v2801, %v2803
        %v2805 = vrot.slane %v2698, %v2804
        %v2807 = vunpack.c.l.s4 1983009808
        %v2808 = vunpack.c.0.s8 %v2807
        %v2809 = vlaneseq
        %v2810 = vshrl.u32 %v2809, 7
        %v2811 = vsub.s32 %v2808, %v2810
        %v2812 = vrot.slane %v2798, %v2811
        %v2813 = vcombine.high %v2805, %v2805
        %v2814 = vcombine.high %v2730, %v2730
        %v2816 = vunpack.c.l.s4 1983009808
        %v2817 = vunpack.c.0.s8 %v2816
        %v2818 = vlaneseq
        %v2819 = vshrl.u32 %v2818, 7
        %v2820 = vsub.s32 %v2817, %v2819
        %v2821 = vrot.slane %v2730, %v2820
        %v2823 = vunpack.c.l.s4 1983009808
        %v2824 = vunpack.c.0.s8 %v2823
        %v2825 = vlaneseq
        %v2826 = vshrl.u32 %v2825, 7
        %v2827 = vsub.s32 %v2824, %v2826
        %v2828 = vrot.slane %v2814, %v2827
        %v2829 = vcombine.high %v2821, %v2821
        %v2830 = vcombine.high %v2762, %v2762
        %v2832 = vunpack.c.l.s4 1983009808
        %v2833 = vunpack.c.0.s8 %v2832
        %v2834 = vlaneseq
        %v2835 = vshrl.u32 %v2834, 7
        %v2836 = vsub.s32 %v2833, %v2835
        %v2837 = vrot.slane %v2762, %v2836
        %v2839 = vunpack.c.l.s4 1983009808
        %v2840 = vunpack.c.0.s8 %v2839
        %v2841 = vlaneseq
        %v2842 = vshrl.u32 %v2841, 7
        %v2843 = vsub.s32 %v2840, %v2842
        %v2844 = vrot.slane %v2830, %v2843
        %v2845 = vcombine.high %v2837, %v2837
        %v2846 = vcombine.low %v2789, %v2797
        %v2847 = vcombine.low %v2796, %v2805
        %v2849 = vunpack.c.l.s4 1983009808
        %v2850 = vunpack.c.0.s8 %v2849
        %v2851 = vlaneseq
        %v2852 = vshrl.u32 %v2851, 7
        %v2853 = vsub.s32 %v2850, %v2852
        %v2854 = vrot.slane %v2846, %v2853
        %v2856 = vunpack.c.l.s4 1983009808
        %v2857 = vunpack.c.0.s8 %v2856
        %v2858 = vlaneseq
        %v2859 = vshrl.u32 %v2858, 7
        %v2860 = vsub.s32 %v2857, %v2859
        %v2861 = vrot.slane %v2847, %v2860
        %v2862 = vcombine.low %v2854, %v2861
        %v2863 = vcombine.low %v2813, %v2812
        %v2864 = vcombine.low %v2821, %v2829
        %v2866 = vunpack.c.l.s4 1983009808
        %v2867 = vunpack.c.0.s8 %v2866
        %v2868 = vlaneseq
        %v2869 = vshrl.u32 %v2868, 7
        %v2870 = vsub.s32 %v2867, %v2869
        %v2871 = vrot.slane %v2863, %v2870
        %v2873 = vunpack.c.l.s4 1983009808
        %v2874 = vunpack.c.0.s8 %v2873
        %v2875 = vlaneseq
        %v2876 = vshrl.u32 %v2875, 7
        %v2877 = vsub.s32 %v2874, %v2876
        %v2878 = vrot.slane %v2864, %v2877
        %v2879 = vcombine.low %v2871, %v2878
        %v2880 = vcombine.low %v2828, %v2837
        %v2881 = vcombine.low %v2845, %v2844
        %v2883 = vunpack.c.l.s4 1983009808
        %v2884 = vunpack.c.0.s8 %v2883
        %v2885 = vlaneseq
        %v2886 = vshrl.u32 %v2885, 7
        %v2887 = vsub.s32 %v2884, %v2886
        %v2888 = vrot.slane %v2880, %v2887
        %v2890 = vunpack.c.l.s4 1983009808
        %v2891 = vunpack.c.0.s8 %v2890
        %v2892 = vlaneseq
        %v2893 = vshrl.u32 %v2892, 7
        %v2894 = vsub.s32 %v2891, %v2893
        %v2895 = vrot.slane %v2881, %v2894
        %v2896 = vcombine.low %v2888, %v2895
        %v2897 = vsel %vm296, %v2862, 0
        %v2899 = vsel %vm296, %v2879, 0
        %v2901 = vsel %vm296, %v2896, 0
        %2903 = vmatprep.subr.mxu0 0.0
        %2904 = vmatpush1.msra.mxu0 0.0
        %2905 = vmatprep.subr.mxu0 0.0
        %2906 = vmatpush1.msra.mxu0 0.0
        %2907 = vmatprep.subr.mxu0 0.0
        %2908 = vmatpush1.msra.mxu0 0.0
        %2909 = vmatprep.subr.mxu0 0.0
        %2910 = vmatpush1.msra.mxu0 0.0
        %2911 = vmatprep.subr.mxu0 0.0
        %2912 = vmatpush1.msra.mxu0 0.0
        %2913 = vmatprep.subr.mxu0 0.0
        %2914 = vmatpush1.msra.mxu0 0.0
        %2915 = vmatprep.subr.mxu0 0.0
        %2916 = vmatpush1.msra.mxu0 0.0
        %2917 = vmatprep.subr.mxu0 0.0
        %2918 = vmatpush1.msra.mxu0 0.0
        %2919 = vmatprep.subr.mxu0 0.0
        %2920 = vmatpush1.msra.mxu0 0.0
        %2921 = vmatprep.subr.mxu0 0.0
        %2922 = vmatpush1.msra.mxu0 0.0
        %2923 = vmatprep.subr.mxu0 0.0
        %2924 = vmatpush1.msra.mxu0 0.0
        %2925 = vmatprep.subr.mxu0 0.0
        %2926 = vmatpush1.msra.mxu0 0.0
        %2927 = vmatprep.subr.mxu0 0.0
        %2928 = vmatpush1.msra.mxu0 0.0
        %2929 = vmatprep.subr.mxu0 0.0
        %2930 = vmatpush1.msra.mxu0 0.0
        %2931 = vmatprep.subr.mxu0 0.0
        %2932 = vmatpush1.msra.mxu0 %v279
        %2933 = vmatprep.subr.mxu0 0.0
        %2934 = vmatpush1.msra.mxu0 %v278
        %2935 = vmatprep.subr.mxu0 0.0
        %2936 = vmatpush2.msra.mxu0 0.0
        %2937 = vmatprep.subr.mxu0 0.0
        %2938 = vmatpush2.msra.mxu0 0.0
        %2939 = vmatprep.subr.mxu0 0.0
        %2940 = vmatpush2.msra.mxu0 0.0
        %2941 = vmatprep.subr.mxu0 0.0
        %2942 = vmatpush2.msra.mxu0 0.0
        %2943 = vmatprep.subr.mxu0 0.0
        %2944 = vmatpush2.msra.mxu0 0.0
        %2945 = vmatprep.subr.mxu0 0.0
        %2946 = vmatpush2.msra.mxu0 0.0
        %2947 = vmatprep.subr.mxu0 0.0
        %2948 = vmatpush2.msra.mxu0 0.0
        %2949 = vmatprep.subr.mxu0 0.0
        %2950 = vmatpush2.msra.mxu0 0.0
        %2951 = vmatprep.subr.mxu0 0.0
        %2952 = vmatpush2.msra.mxu0 0.0
        %2953 = vmatprep.subr.mxu0 0.0
        %2954 = vmatpush2.msra.mxu0 0.0
        %2955 = vmatprep.subr.mxu0 0.0
        %2956 = vmatpush2.msra.mxu0 0.0
        %2957 = vmatprep.subr.mxu0 0.0
        %2958 = vmatpush2.msra.mxu0 0.0
        %2959 = vmatprep.subr.mxu0 0.0
        %2960 = vmatpush2.msra.mxu0 0.0
        %2961 = vmatprep.subr.mxu0 0.0
        %2962 = vmatpush2.msra.mxu0 0.0
        %2963 = vmatprep.subr.mxu0 0.0
        %2964 = vmatpush2.msra.mxu0 0.0
        %2965 = vmatprep.subr.mxu0 0.0
        %2966 = vmatpush2.msra.mxu0 0.0
        %2967 = vmatprep.mubr.f32.mxu0 0.0
        %2968 = vmatmul.mubr.f32.gmra.mxu0 %v2897
        %v2969 = vpop.f32.mrf.mxu0
        %v2970 = vadd.f32 0.0, %v2969
        %v2971 = vpop.f32.mrf.mxu0
        %2972 = vmatprep.mubr.f32.mxu0 0.0
        %2973 = vmatmul.mubr.f32.gmra.mxu0 %v2899
        %v2974 = vpop.f32.mrf.mxu0
        %v2975 = vadd.f32 0.0, %v2974
        %v2976 = vpop.f32.mrf.mxu0
        %2977 = vmatprep.mubr.f32.mxu0 0.0
        %2978 = vmatmul.mubr.f32.gmra.mxu0 %v2901
        %v2979 = vpop.f32.mrf.mxu0
        %v2980 = vadd.f32 0.0, %v2979
        %v2981 = vpop.f32.mrf.mxu0
        %2982 = vdwg.mxu0
        %v2986 = vcombine.high %v2970, %v2970
        %v2988 = vunpack.c.l.s4 1983009808
        %v2989 = vunpack.c.0.s8 %v2988
        %v2990 = vlaneseq
        %v2991 = vshrl.u32 %v2990, 7
        %v2992 = vsub.s32 %v2989, %v2991
        %v2993 = vrot.slane %v2970, %v2992
        %v2995 = vunpack.c.l.s4 1983009808
        %v2996 = vunpack.c.0.s8 %v2995
        %v2997 = vlaneseq
        %v2998 = vshrl.u32 %v2997, 7
        %v2999 = vsub.s32 %v2996, %v2998
        %v3000 = vrot.slane %v2986, %v2999
        %v3001 = vcombine.high %v2993, %v2993
        %v3002 = vcombine.high %v3000, %v3000
        %v3003 = vcombine.high %v2975, %v2975
        %v3005 = vunpack.c.l.s4 1983009808
        %v3006 = vunpack.c.0.s8 %v3005
        %v3007 = vlaneseq
        %v3008 = vshrl.u32 %v3007, 7
        %v3009 = vsub.s32 %v3006, %v3008
        %v3010 = vrot.slane %v2975, %v3009
        %v3012 = vunpack.c.l.s4 1983009808
        %v3013 = vunpack.c.0.s8 %v3012
        %v3014 = vlaneseq
        %v3015 = vshrl.u32 %v3014, 7
        %v3016 = vsub.s32 %v3013, %v3015
        %v3017 = vrot.slane %v3003, %v3016
        %v3018 = vcombine.high %v3010, %v3010
        %v3019 = vcombine.high %v3017, %v3017
        %v3020 = vcombine.high %v2980, %v2980
        %v3022 = vunpack.c.l.s4 1983009808
        %v3023 = vunpack.c.0.s8 %v3022
        %v3024 = vlaneseq
        %v3025 = vshrl.u32 %v3024, 7
        %v3026 = vsub.s32 %v3023, %v3025
        %v3027 = vrot.slane %v2980, %v3026
        %v3029 = vunpack.c.l.s4 1983009808
        %v3030 = vunpack.c.0.s8 %v3029
        %v3031 = vlaneseq
        %v3032 = vshrl.u32 %v3031, 7
        %v3033 = vsub.s32 %v3030, %v3032
        %v3034 = vrot.slane %v3020, %v3033
        %v3035 = vcombine.high %v3027, %v3027
        %v3036 = vcombine.high %v3034, %v3034
        %v3049 = vmul.f32 %v857, %v857
        %v3050 = vmul.f32 %v865, %v865
        %v3051 = vmul.f32 %v864, %v864
        %v3052 = vmul.f32 %v866, %v866
        %v3053 = vmul.f32 %v874, %v874
        %v3054 = vmul.f32 %v882, %v882
        %v3055 = vmul.f32 %v881, %v881
        %v3056 = vmul.f32 %v883, %v883
        %v3057 = vmul.f32 %v891, %v891
        %v3058 = vmul.f32 %v899, %v899
        %v3059 = vmul.f32 %v898, %v898
        %v3060 = vmul.f32 %v900, %v900
        %v3061 = vmul.f32 %v1385, %v1385
        %v3062 = vmul.f32 %v1393, %v1393
        %v3063 = vmul.f32 %v1392, %v1392
        %v3064 = vmul.f32 %v1394, %v1394
        %v3065 = vmul.f32 %v1402, %v1402
        %v3066 = vmul.f32 %v1410, %v1410
        %v3067 = vmul.f32 %v1409, %v1409
        %v3068 = vmul.f32 %v1411, %v1411
        %v3069 = vmul.f32 %v1419, %v1419
        %v3070 = vmul.f32 %v1427, %v1427
        %v3071 = vmul.f32 %v1426, %v1426
        %v3072 = vmul.f32 %v1428, %v1428
        %v3073 = vmul.f32 %v857, %v1385
        %v3074 = vmul.f32 %v865, %v1393
        %v3075 = vmul.f32 %v864, %v1392
        %v3076 = vmul.f32 %v866, %v1394
        %v3077 = vmul.f32 %v874, %v1402
        %v3078 = vmul.f32 %v882, %v1410
        %v3079 = vmul.f32 %v881, %v1409
        %v3080 = vmul.f32 %v883, %v1411
        %v3081 = vmul.f32 %v891, %v1419
        %v3082 = vmul.f32 %v899, %v1427
        %v3083 = vmul.f32 %v898, %v1426
        %v3084 = vmul.f32 %v900, %v1428
        %v3085 = vsub.f32 %v1921, %v3049
        %v3086 = vsub.f32 %v1929, %v3050
        %v3087 = vsub.f32 %v1928, %v3051
        %v3088 = vsub.f32 %v1930, %v3052
        %v3089 = vsub.f32 %v1938, %v3053
        %v3090 = vsub.f32 %v1946, %v3054
        %v3091 = vsub.f32 %v1945, %v3055
        %v3092 = vsub.f32 %v1947, %v3056
        %v3093 = vsub.f32 %v1955, %v3057
        %v3094 = vsub.f32 %v1963, %v3058
        %v3095 = vsub.f32 %v1962, %v3059
        %v3096 = vsub.f32 %v1964, %v3060
        %v3097 = vsub.f32 %v2457, %v3061
        %v3098 = vsub.f32 %v2465, %v3062
        %v3099 = vsub.f32 %v2464, %v3063
        %v3100 = vsub.f32 %v2466, %v3064
        %v3101 = vsub.f32 %v2474, %v3065
        %v3102 = vsub.f32 %v2482, %v3066
        %v3103 = vsub.f32 %v2481, %v3067
        %v3104 = vsub.f32 %v2483, %v3068
        %v3105 = vsub.f32 %v2491, %v3069
        %v3106 = vsub.f32 %v2499, %v3070
        %v3107 = vsub.f32 %v2498, %v3071
        %v3108 = vsub.f32 %v2500, %v3072
        %v3109 = vsub.f32 %v2993, %v3073
        %v3110 = vsub.f32 %v3001, %v3074
        %v3111 = vsub.f32 %v3000, %v3075
        %v3112 = vsub.f32 %v3002, %v3076
        %v3113 = vsub.f32 %v3010, %v3077
        %v3114 = vsub.f32 %v3018, %v3078
        %v3115 = vsub.f32 %v3017, %v3079
        %v3116 = vsub.f32 %v3019, %v3080
        %v3117 = vsub.f32 %v3027, %v3081
        %v3118 = vsub.f32 %v3035, %v3082
        %v3119 = vsub.f32 %v3034, %v3083
        %v3120 = vsub.f32 %v3036, %v3084
        %v3121 = vmul.f32 %v3109, 2.0
        %v3122 = vmul.f32 %v3110, 2.0
        %v3123 = vmul.f32 %v3111, 2.0
        %v3124 = vmul.f32 %v3112, 2.0
        %v3125 = vmul.f32 %v3113, 2.0
        %v3126 = vmul.f32 %v3114, 2.0
        %v3127 = vmul.f32 %v3115, 2.0
        %v3128 = vmul.f32 %v3116, 2.0
        %v3129 = vmul.f32 %v3117, 2.0
        %v3130 = vmul.f32 %v3118, 2.0
        %v3131 = vmul.f32 %v3119, 2.0
        %v3132 = vmul.f32 %v3120, 2.0
        %v3133 = vadd.f32 %v3121, 0.0009
        %v3134 = vadd.f32 %v3122, 0.0009
        %v3135 = vadd.f32 %v3123, 0.0009
        %v3136 = vadd.f32 %v3124, 0.0009
        %v3137 = vadd.f32 %v3125, 0.0009
        %v3138 = vadd.f32 %v3126, 0.0009
        %v3139 = vadd.f32 %v3127, 0.0009
        %v3140 = vadd.f32 %v3128, 0.0009
        %v3141 = vadd.f32 %v3129, 0.0009
        %v3142 = vadd.f32 %v3130, 0.0009
        %v3143 = vadd.f32 %v3131, 0.0009
        %v3144 = vadd.f32 %v3132, 0.0009
        %v3145 = vadd.f32 %v3085, %v3097
        %v3146 = vadd.f32 %v3086, %v3098
        %v3147 = vadd.f32 %v3087, %v3099
        %v3148 = vadd.f32 %v3088, %v3100
        %v3149 = vadd.f32 %v3089, %v3101
        %v3150 = vadd.f32 %v3090, %v3102
        %v3151 = vadd.f32 %v3091, %v3103
        %v3152 = vadd.f32 %v3092, %v3104
        %v3153 = vadd.f32 %v3093, %v3105
        %v3154 = vadd.f32 %v3094, %v3106
        %v3155 = vadd.f32 %v3095, %v3107
        %v3156 = vadd.f32 %v3096, %v3108
        %v3157 = vadd.f32 %v3145, 0.0009
        %v3158 = vadd.f32 %v3146, 0.0009
        %v3159 = vadd.f32 %v3147, 0.0009
        %v3160 = vadd.f32 %v3148, 0.0009
        %v3161 = vadd.f32 %v3149, 0.0009
        %v3162 = vadd.f32 %v3150, 0.0009
        %v3163 = vadd.f32 %v3151, 0.0009
        %v3164 = vadd.f32 %v3152, 0.0009
        %v3165 = vadd.f32 %v3153, 0.0009
        %v3166 = vadd.f32 %v3154, 0.0009
        %v3167 = vadd.f32 %v3155, 0.0009
        %v3168 = vadd.f32 %v3156, 0.0009
        %v3169 = vrcp.pop %v3157
        %v3170 = vmul.f32 %v3133, %v3169
        %v3171 = vrcp.pop %v3158
        %v3172 = vmul.f32 %v3134, %v3171
        %v3173 = vrcp.pop %v3159
        %v3174 = vmul.f32 %v3135, %v3173
        %v3175 = vrcp.pop %v3160
        %v3176 = vmul.f32 %v3136, %v3175
        %v3177 = vrcp.pop %v3161
        %v3178 = vmul.f32 %v3137, %v3177
        %v3179 = vrcp.pop %v3162
        %v3180 = vmul.f32 %v3138, %v3179
        %v3181 = vrcp.pop %v3163
        %v3182 = vmul.f32 %v3139, %v3181
        %v3183 = vrcp.pop %v3164
        %v3184 = vmul.f32 %v3140, %v3183
        %v3185 = vrcp.pop %v3165
        %v3186 = vmul.f32 %v3141, %v3185
        %v3187 = vrcp.pop %v3166
        %v3188 = vmul.f32 %v3142, %v3187
        %v3189 = vrcp.pop %v3167
        %v3190 = vmul.f32 %v3143, %v3189
        %v3191 = vrcp.pop %v3168
        %v3192 = vmul.f32 %v3144, %v3191
        %v3193 = vmul.f32 %v3073, 2.0
        %v3194 = vmul.f32 %v3074, 2.0
        %v3195 = vmul.f32 %v3075, 2.0
        %v3196 = vmul.f32 %v3076, 2.0
        %v3197 = vmul.f32 %v3077, 2.0
        %v3198 = vmul.f32 %v3078, 2.0
        %v3199 = vmul.f32 %v3079, 2.0
        %v3200 = vmul.f32 %v3080, 2.0
        %v3201 = vmul.f32 %v3081, 2.0
        %v3202 = vmul.f32 %v3082, 2.0
        %v3203 = vmul.f32 %v3083, 2.0
        %v3204 = vmul.f32 %v3084, 2.0
        %v3205 = vadd.f32 %v3193, 0.0001
        %v3206 = vadd.f32 %v3194, 0.0001
        %v3207 = vadd.f32 %v3195, 0.0001
        %v3208 = vadd.f32 %v3196, 0.0001
        %v3209 = vadd.f32 %v3197, 0.0001
        %v3210 = vadd.f32 %v3198, 0.0001
        %v3211 = vadd.f32 %v3199, 0.0001
        %v3212 = vadd.f32 %v3200, 0.0001
        %v3213 = vadd.f32 %v3201, 0.0001
        %v3214 = vadd.f32 %v3202, 0.0001
        %v3215 = vadd.f32 %v3203, 0.0001
        %v3216 = vadd.f32 %v3204, 0.0001
        %v3217 = vadd.f32 %v3049, %v3061
        %v3218 = vadd.f32 %v3050, %v3062
        %v3219 = vadd.f32 %v3051, %v3063
        %v3220 = vadd.f32 %v3052, %v3064
        %v3221 = vadd.f32 %v3053, %v3065
        %v3222 = vadd.f32 %v3054, %v3066
        %v3223 = vadd.f32 %v3055, %v3067
        %v3224 = vadd.f32 %v3056, %v3068
        %v3225 = vadd.f32 %v3057, %v3069
        %v3226 = vadd.f32 %v3058, %v3070
        %v3227 = vadd.f32 %v3059, %v3071
        %v3228 = vadd.f32 %v3060, %v3072
        %v3229 = vadd.f32 %v3217, 0.0001
        %v3230 = vadd.f32 %v3218, 0.0001
        %v3231 = vadd.f32 %v3219, 0.0001
        %v3232 = vadd.f32 %v3220, 0.0001
        %v3233 = vadd.f32 %v3221, 0.0001
        %v3234 = vadd.f32 %v3222, 0.0001
        %v3235 = vadd.f32 %v3223, 0.0001
        %v3236 = vadd.f32 %v3224, 0.0001
        %v3237 = vadd.f32 %v3225, 0.0001
        %v3238 = vadd.f32 %v3226, 0.0001
        %v3239 = vadd.f32 %v3227, 0.0001
        %v3240 = vadd.f32 %v3228, 0.0001
        %v3241 = vrcp.pop %v3229
        %v3242 = vmul.f32 %v3205, %v3241
        %v3243 = vrcp.pop %v3230
        %v3244 = vmul.f32 %v3206, %v3243
        %v3245 = vrcp.pop %v3231
        %v3246 = vmul.f32 %v3207, %v3245
        %v3247 = vrcp.pop %v3232
        %v3248 = vmul.f32 %v3208, %v3247
        %v3249 = vrcp.pop %v3233
        %v3250 = vmul.f32 %v3209, %v3249
        %v3251 = vrcp.pop %v3234
        %v3252 = vmul.f32 %v3210, %v3251
        %v3253 = vrcp.pop %v3235
        %v3254 = vmul.f32 %v3211, %v3253
        %v3255 = vrcp.pop %v3236
        %v3256 = vmul.f32 %v3212, %v3255
        %v3257 = vrcp.pop %v3237
        %v3258 = vmul.f32 %v3213, %v3257
        %v3259 = vrcp.pop %v3238
        %v3260 = vmul.f32 %v3214, %v3259
        %v3261 = vrcp.pop %v3239
        %v3262 = vmul.f32 %v3215, %v3261
        %v3263 = vrcp.pop %v3240
        %v3264 = vmul.f32 %v3216, %v3263
        %v3265 = vmul.f32 %v3242, %v3170
        %v3266 = vmul.f32 %v3244, %v3172
        %v3267 = vmul.f32 %v3246, %v3174
        %v3268 = vmul.f32 %v3248, %v3176
        %v3269 = vmul.f32 %v3250, %v3178
        %v3270 = vmul.f32 %v3252, %v3180
        %v3271 = vmul.f32 %v3254, %v3182
        %v3272 = vmul.f32 %v3256, %v3184
        %v3273 = vmul.f32 %v3258, %v3186
        %v3274 = vmul.f32 %v3260, %v3188
        %v3275 = vmul.f32 %v3262, %v3190
        %v3276 = vmul.f32 %v3264, %v3192
        %v3289 = vcombine.low %v3265, %v3266
        %v3291 = vunpack.c.l.s4 1983009808
        %v3292 = vunpack.c.0.s8 %v3291
        %v3293 = vlaneseq
        %v3294 = vshrl.u32 %v3293, 7
        %v3295 = vsub.s32 %v3292, %v3294
        %v3296 = vrot.slane %v3289, %v3295
        %v3298 = vunpack.c.l.s4 1983009808
        %v3299 = vunpack.c.0.s8 %v3298
        %v3300 = vlaneseq
        %v3301 = vshrl.u32 %v3300, 7
        %v3302 = vsub.s32 %v3299, %v3301
        %v3303 = vrot.slane %v3267, %v3302
        %v3304 = vcombine.low %v3296, %v3303
        %v3305 = vcombine.low %v3268, %v3269
        %v3307 = vunpack.c.l.s4 1983009808
        %v3308 = vunpack.c.0.s8 %v3307
        %v3309 = vlaneseq
        %v3310 = vshrl.u32 %v3309, 7
        %v3311 = vsub.s32 %v3308, %v3310
        %v3312 = vrot.slane %v3305, %v3311
        %v3314 = vunpack.c.l.s4 1983009808
        %v3315 = vunpack.c.0.s8 %v3314
        %v3316 = vlaneseq
        %v3317 = vshrl.u32 %v3316, 7
        %v3318 = vsub.s32 %v3315, %v3317
        %v3319 = vrot.slane %v3270, %v3318
        %v3320 = vcombine.low %v3312, %v3319
        %v3321 = vcombine.low %v3271, %v3272
        %v3323 = vunpack.c.l.s4 1983009808
        %v3324 = vunpack.c.0.s8 %v3323
        %v3325 = vlaneseq
        %v3326 = vshrl.u32 %v3325, 7
        %v3327 = vsub.s32 %v3324, %v3326
        %v3328 = vrot.slane %v3321, %v3327
        %v3330 = vunpack.c.l.s4 1983009808
        %v3331 = vunpack.c.0.s8 %v3330
        %v3332 = vlaneseq
        %v3333 = vshrl.u32 %v3332, 7
        %v3334 = vsub.s32 %v3331, %v3333
        %v3335 = vrot.slane %v3273, %v3334
        %v3336 = vcombine.low %v3328, %v3335
        %v3337 = vcombine.low %v3274, %v3275
        %v3339 = vunpack.c.l.s4 1983009808
        %v3340 = vunpack.c.0.s8 %v3339
        %v3341 = vlaneseq
        %v3342 = vshrl.u32 %v3341, 7
        %v3343 = vsub.s32 %v3340, %v3342
        %v3344 = vrot.slane %v3337, %v3343
        %v3346 = vunpack.c.l.s4 1983009808
        %v3347 = vunpack.c.0.s8 %v3346
        %v3348 = vlaneseq
        %v3349 = vshrl.u32 %v3348, 7
        %v3350 = vsub.s32 %v3347, %v3349
        %v3351 = vrot.slane %v3276, %v3350
        %v3352 = vcombine.low %v3344, %v3351
        %vm3357 = vcmask 46080
        %v3358 = vsel %vm3357, %v3304, 0.0
        %v3359 = vsel %vm3357, %v3320, 0.0
        %v3360 = vadd.f32 %v3358, %v3359
        %v3361 = vsel %vm3357, %v3336, 0.0
        %v3362 = vadd.f32 %v3360, %v3361
        %v3363 = vsel %vm3357, %v3352, 0.0
        %v3364 = vadd.f32 %v3362, %v3363
        %3365 = vadd.xlane.f32.xlu0 %v3364
        %v3366 = vpop.xlane.xlu0 %3365
        %v3367 = vrot.slane %v3366, 4
        %v3368 = vadd.f32 %v3366, %v3367
        %v3369 = vrot.slane %v3368, 2
        %v3370 = vadd.f32 %v3368, %v3369
        %v3371 = vrot.slane %v3370, 1
        %v3372 = vadd.f32 %v3370, %v3371
        %s3373 = vtos %v3372
        %v3374 = vlaneseq
        %v3375 = vshrl.u32 %v3374, 7
        %vm3376 = vcmp.eq.s32.totalorder %v3375, 0
        %vm3377 = vcmp.eq.s32.totalorder %v3375, 1
        %vm3378 = vcmp.eq.s32.totalorder %v3375, 2
        %v3379 = vstv %s3373
        %v3380 = vsel %vm3378, %v3379, 0.0
        %v3381 = vstv %s352
        %v3382 = vsel %vm3377, %v3381, %v3380
        %v3383 = vstv %s320
        %v3384 = vsel %vm3376, %v3383, %v3382
        %3385 = vst [vmem:[%s257] sm:$0xff] %v3384
        %s3386 = sand.u32 %s126, 1
        %s3387 = scalar_lea.sflag [#allocation4], %s3386
        %s3388 = sand.u32 %s126, 1
        %s3389 = smul.addr %s3388, 8
        %s3390 = scalar_lea.vmem [#allocation7], %s3389
        // Predicated region
        $region45: #{tpu_custom_call.1} parent=35 // pred_check
          %p3391 = pneg %p136
        $region46: #{tpu_custom_call.1} parent=35 // pred_check_branch
          %3393 = sbr.rel (%p3391) target = $region48
        $region47: #{tpu_custom_call.1} parent=35 // pred_region
          %s3395 = ssub.s32 128, 128
          %3396 = vsyncadd %s3387, %s3395
          %s3397 = smul.addr %s24, 128
          %s3398 = scalar_lea.hbm %s4, %s3397
          %s3400 = sshll.u32 %s3390, 4
          %s3401 = int_to_ptr.vmem [resolvable:$true] %s3400
          %3403 = dma.vmem_to_hbm [thread:$0]  %s3401, 128, %s3398, %s3387
        $region48: #{tpu_custom_call.1} parent=35 // pred_fallthru
          _
      $region36: #{tpu_custom_call.1} parent=5 // pred_fallthru
        _
      %p3404 = scmp.le.s32.totalorder 2, %s19
      // Predicated region
      $region49: #{tpu_custom_call.1} parent=5 // pred_check
        %p3405 = pneg %p3404
      $region50: #{tpu_custom_call.1} parent=5 // pred_check_branch
        %3407 = sbr.rel (%p3405) target = $region52
      $region51: #{tpu_custom_call.1} parent=5 // pred_region
        %s3408 = ssub.s32 %s19, 2
        // Predicated region
        $region53: #{tpu_custom_call.1} parent=51 // pred_check
          %p3409 = pneg %p142
        $region54: #{tpu_custom_call.1} parent=51 // pred_check_branch
          %3411 = sbr.rel (%p3409) target = $region56
        $region55: #{tpu_custom_call.1} parent=51 // pred_region
          %s3412 = sand.u32 %s127, 1
          %s3413 = scalar_lea.sflag [#allocation4], %s3412
          %s3414 = sand.u32 %s127, 1
          %s3415 = smul.addr %s3414, 8
          %s3416 = scalar_lea.vmem [#allocation7], %s3415
          %3417 = dma.done %s3413, 128
        $region56: #{tpu_custom_call.1} parent=51 // pred_fallthru
          _
      $region52: #{tpu_custom_call.1} parent=5 // pred_fallthru
        _
    $region6: #{tpu_custom_call.1} parent=1 // loop_footer
      %s23 = sadd.s32 1, %s19
    $region7: #{tpu_custom_call.1} parent=1 // loop_footer_branch
      %18 = sbr.rel target = $region3
    $region8: #{tpu_custom_call.1} parent=1 // loop_exit
      _
    %3418 = vsyncpa [#allocation3], 1
    %s3419 = scalar_lea.sflag [#allocation3], 1
    %3420 = vsyncpa %s3419, 1
    %3421 = vsyncpa [#allocation6], 1
    %s3422 = scalar_lea.sflag [#allocation6], 1
    %3423 = vsyncpa %s3422, 1
    %3424 = vsyncpa [#allocation4], 1
    %s3425 = scalar_lea.sflag [#allocation4], 1
    %3426 = vsyncpa %s3425, 1

</llo_original>
